<compile_context>
chip_gen: v5e
topology: v5e:2x2
jax: 0.10.0
libtpu: 0.0.40
codegen_flags: <defaults>
</compile_context>

<pallas_src>
import functools

import jax
import jax.numpy as jnp
from jax.experimental import pallas as pl
from jax.experimental.pallas import tpu as pltpu


# ---------------------------------------------------------------------------
# In-kernel helper (operates on loaded values)
# ---------------------------------------------------------------------------

def _ln(x, g, b, eps):
    mean = jnp.mean(x, axis=-1, keepdims=True)
    var = jnp.mean((x - mean) ** 2, axis=-1, keepdims=True)
    return (x - mean) * jax.lax.rsqrt(var + eps) * g + b


# ---------------------------------------------------------------------------
# Single fused kernel: encoder layers + final LN + (folded conv/conv/dense) head
# ---------------------------------------------------------------------------

def _vit_fused_kernel(h_ref, ln_g_ref, ln_b_ref, wqkv_ref, bqkv_ref,
                      wo_ref, bo_ref, wfc1_ref, bfc1_ref, wfc2_ref, bfc2_ref,
                      lnf_g_ref, lnf_b_ref, wh_ref, bh_ref, out_ref,
                      *, n_layers, nh, eps):
    h = h_ref[0]                                  # (S, D) f32, resident in VMEM
    S, D = h.shape
    dh = D // nh
    scale = 1.0 / (dh ** 0.5)

    for l in range(n_layers):                     # static unroll (n_layers small)
        # ---------------- multi-head self-attention (pre-LN) ----------------
        hn = _ln(h, ln_g_ref[l, 0], ln_b_ref[l, 0], eps).astype(jnp.bfloat16)
        ctx_heads = []
        for hd in range(nh):                      # weights pre-split per head in wrapper
            q = jnp.dot(hn, wqkv_ref[l, 0, hd],
                        preferred_element_type=jnp.float32) + bqkv_ref[l, 0, hd]
            k = jnp.dot(hn, wqkv_ref[l, 1, hd],
                        preferred_element_type=jnp.float32) + bqkv_ref[l, 1, hd]
            v = jnp.dot(hn, wqkv_ref[l, 2, hd],
                        preferred_element_type=jnp.float32) + bqkv_ref[l, 2, hd]
            # scores = q @ k.T without materializing a transpose
            s = jax.lax.dot_general(q, k, (((1,), (1,)), ((), ())),
                                    preferred_element_type=jnp.float32) * scale
            m = jnp.max(s, axis=-1, keepdims=True)
            p = jnp.exp(s - m)
            p = p * pl.reciprocal(jnp.sum(p, axis=-1, keepdims=True), approx=True)
            ctx_heads.append(jnp.dot(p, v, preferred_element_type=jnp.float32))
        # concat heads -> one full-K output projection (single K=D MXU push)
        ctx = jnp.concatenate(ctx_heads, axis=-1)                     # (S, D)
        attn = jnp.dot(ctx.astype(jnp.bfloat16), wo_ref[l],
                       preferred_element_type=jnp.float32) + bo_ref[l]
        h = h + attn

        # ---------------------------- MLP (pre-LN) ---------------------------
        hn2 = _ln(h, ln_g_ref[l, 1], ln_b_ref[l, 1], eps).astype(jnp.bfloat16)
        m1 = jnp.dot(hn2, wfc1_ref[l],
                     preferred_element_type=jnp.float32) + bfc1_ref[l]
        # TODO(synk): HF ViT uses exact (erf) GELU; tanh-approx GELU used here
        # (EUP-friendly, ~1e-3 relative deviation).
        m1 = jax.nn.gelu(m1)
        m2 = jnp.dot(m1.astype(jnp.bfloat16), wfc2_ref[l],
                     preferred_element_type=jnp.float32) + bfc2_ref[l]
        h = h + m2

    # ----- head: final LN, then the exact folded conv1d∘conv1d∘dense map -----
    xf = _ln(h, lnf_g_ref[...], lnf_b_ref[...], eps)                  # (S, D)
    logits = bh_ref[...]                                              # (1, V)
    # S tiny K=D dots (runs once per image); avoids a lane-merging (S,D)->(1,S*D)
    # relayout that a single flattened dot would need.
    for si in range(S):
        logits = logits + jnp.dot(xf[si:si + 1, :], wh_ref[si],
                                  preferred_element_type=jnp.float32)
    mx = jnp.max(logits, axis=-1, keepdims=True)
    e = jnp.exp(logits - mx)
    probs = e / jnp.sum(e, axis=-1, keepdims=True)                    # exact softmax
    out_ref[0] = probs.astype(out_ref.dtype)


# ---------------------------------------------------------------------------
# Wrapper-side weight preparation
# ---------------------------------------------------------------------------

def _fold_head(conv1_w, conv1_b, conv2_w, conv2_b, dense_w, dense_b, S, D, V):
    """Fold Conv1d(S->C1,k) -> Conv1d(C1->1,k) -> Linear(L2->V) (all linear, no
    activation between them in the reference module) into one exact affine map:
        logits[v] = b_head[v] + sum_{s,d} Wh[s, d, v] * x[s, d]
    """
    C1, _, K1 = conv1_w.shape
    K2 = conv2_w.shape[2]
    Kc = K1 + K2 - 1
    L2 = dense_w.shape[0]                     # = D - Kc + 1

    # composed conv kernel wc[s, j] = sum_c sum_{k1+k2=j} w1[c,s,k1] * w2[0,c,k2]
    wc = jnp.zeros((S, Kc), jnp.float32)
    for k1 in range(K1):
        for k2 in range(K2):
            wc = wc.at[:, k1 + k2].add(
                jnp.einsum('cs,c->s', conv1_w[:, :, k1], conv2_w[0, :, k2]))
    # bias reaching the single conv2 output channel
    b2p = conv2_b[0] + jnp.einsum('c,c->', conv1_b, jnp.sum(conv2_w[0], axis=-1))

    # fold with the dense layer: Wh[s, d, v] = sum_{l+j=d} wc[s, j] * dense_w[l, v]
    Wh = jnp.zeros((S, D, V), jnp.float32)
    for j in range(Kc):
        Wh = Wh.at[:, j:j + L2, :].add(wc[:, j][:, None, None] * dense_w[None, :, :])
    b_head = (dense_b + b2p * jnp.sum(dense_w, axis=0)).reshape(1, V)
    return Wh, b_head


# ---------------------------------------------------------------------------
# Forward pass (mirrors ViTBaselineModel.forward)
# ---------------------------------------------------------------------------

def vit_baseline_forward(params, x, *, cfg):
    P = cfg["patch"]
    nh = cfg["heads"]
    B, C, H, W = x.shape
    gh, gw = H // P, W // P
    D = params["w_pe"].shape[1]
    layers = params["layers"]
    L = len(layers)
    MLP = layers[0]["w_fc1"].shape[1]
    V = params["dense_b"].shape[0]
    S = gh * gw + 1
    dh = D // nh

    # --- patch embedding (plain XLA: patchify + tiny matmul fuse for free) ---
    patches = x.reshape(B, C, gh, P, gw, P)
    patches = patches.transpose(0, 2, 4, 1, 3, 5).reshape(B, gh * gw, C * P * P)
    emb = jnp.einsum('bnk,kd->bnd', patches, params["w_pe"]) + params["b_pe"]
    cls = jnp.broadcast_to(params["cls"], (B, 1, D))
    h = jnp.concatenate([cls, emb], axis=1) + params["pos"]           # (B, S, D)

    # --- pack weights for the fused kernel (layout transforms only) ---
    ln_g = jnp.stack([jnp.stack([lyr["ln1_g"], lyr["ln2_g"]]) for lyr in layers])
    ln_g = ln_g[:, :, None, :]                                        # (L, 2, 1, D)
    ln_b = jnp.stack([jnp.stack([lyr["ln1_b"], lyr["ln2_b"]]) for lyr in layers])
    ln_b = ln_b[:, :, None, :]
    wqkv = jnp.stack([lyr["w_qkv"].reshape(D, 3, nh, dh).transpose(1, 2, 0, 3)
                      for lyr in layers]).astype(jnp.bfloat16)        # (L,3,nh,D,dh)
    bqkv = jnp.stack([lyr["b_qkv"].reshape(3, nh, dh) for lyr in layers])
    bqkv = bqkv[:, :, :, None, :]                                     # (L,3,nh,1,dh)
    wo = jnp.stack([lyr["w_o"] for lyr in layers]).astype(jnp.bfloat16)
    bo = jnp.stack([lyr["b_o"] for lyr in layers])[:, None, :]
    wfc1 = jnp.stack([lyr["w_fc1"] for lyr in layers]).astype(jnp.bfloat16)
    bfc1 = jnp.stack([lyr["b_fc1"] for lyr in layers])[:, None, :]
    wfc2 = jnp.stack([lyr["w_fc2"] for lyr in layers]).astype(jnp.bfloat16)
    bfc2 = jnp.stack([lyr["b_fc2"] for lyr in layers])[:, None, :]
    lnf_g = params["lnf_g"][None, :]
    lnf_b = params["lnf_b"][None, :]
    wh, bh = _fold_head(params["conv1_w"], params["conv1_b"],
                        params["conv2_w"], params["conv2_b"],
                        params["dense_w"], params["dense_b"], S, D, V)

    def rep(shape):                               # replicated (weight) block
        return pl.BlockSpec(shape, lambda b: (0,) * len(shape))

    out = pl.pallas_call(
        functools.partial(_vit_fused_kernel, n_layers=L, nh=nh, eps=1e-12),
        out_shape=jax.ShapeDtypeStruct((B, 1, V), jnp.float32),
        grid=(B,),
        in_specs=[pl.BlockSpec((1, S, D), lambda b: (b, 0, 0)),
                  rep((L, 2, 1, D)), rep((L, 2, 1, D)),
                  rep((L, 3, nh, D, dh)), rep((L, 3, nh, 1, dh)),
                  rep((L, D, D)), rep((L, 1, D)),
                  rep((L, D, MLP)), rep((L, 1, MLP)),
                  rep((L, MLP, D)), rep((L, 1, D)),
                  rep((1, D)), rep((1, D)),
                  rep((S, D, V)), rep((1, V))],
        out_specs=pl.BlockSpec((1, 1, V), lambda b: (b, 0, 0)),
        # v7x: each of the 2 TensorCores takes one batch element.  On 1-TC
        # v5e/v6e this is a 2-step serial loop over the whole fused network
        # (single launch), so the per-step overhead is negligible.
        compiler_params=pltpu.CompilerParams(dimension_semantics=("parallel",)),
    )(h, ln_g, ln_b, wqkv, bqkv, wo, bo, wfc1, bfc1, wfc2, bfc2,
      lnf_g, lnf_b, wh, bh)

    # torch.squeeze((B,1,V)) -> (B,V) for B > 1.
    # TODO(synk): for B == 1 torch.squeeze would give rank-1 (V,); not mimicked.
    return out.reshape(B, V)


# ---------------------------------------------------------------------------
# Parameters (deterministic, synthetic — no checkpoint / file IO)
# ---------------------------------------------------------------------------

def init_params(key, *, D, S, mlp, n_layers, patch, vocab, conv1_out, in_chans=3):
    keys = iter(jax.random.split(key, 128))

    def nrm(shape, scale=0.02):
        return scale * jax.random.normal(next(keys), shape, jnp.float32)

    params = {
        "w_pe": nrm((in_chans * patch * patch, D)),
        "b_pe": jnp.zeros((D,), jnp.float32),
        "cls": nrm((1, 1, D)),
        "pos": nrm((1, S, D)),
        "lnf_g": jnp.ones((D,), jnp.float32),
        "lnf_b": jnp.zeros((D,), jnp.float32),
        # head: Conv1d(S -> conv1_out, k=3), Conv1d(conv1_out -> 1, k=3),
        #       Linear(D-4 -> vocab), Softmax(dim=1)
        "conv1_w": nrm((conv1_out, S, 3), scale=0.1),
        "conv1_b": nrm((conv1_out,), scale=0.1),
        "conv2_w": nrm((1, conv1_out, 3), scale=0.1),
        "conv2_b": nrm((1,), scale=0.1),
        "dense_w": nrm((D - 4, vocab)),
        "dense_b": jnp.zeros((vocab,), jnp.float32),
        "layers": [],
    }
    for _ in range(n_layers):
        params["layers"].append({
            "ln1_g": jnp.ones((D,), jnp.float32),
            "ln1_b": jnp.zeros((D,), jnp.float32),
            "w_qkv": nrm((D, 3 * D)),
            "b_qkv": jnp.zeros((3 * D,), jnp.float32),
            "w_o": nrm((D, D)),
            "b_o": jnp.zeros((D,), jnp.float32),
            "ln2_g": jnp.ones((D,), jnp.float32),
            "ln2_b": jnp.zeros((D,), jnp.float32),
            "w_fc1": nrm((D, mlp)),
            "b_fc1": jnp.zeros((mlp,), jnp.float32),
            "w_fc2": nrm((mlp, D)),
            "b_fc2": jnp.zeros((D,), jnp.float32),
        })
    return params


# ---------------------------------------------------------------------------
# Main
# ---------------------------------------------------------------------------

if __name__ == "__main__":
    # Small, self-consistent configuration (scaled-down ViT-base).
    B, C, H, W, PATCH = 2, 3, 32, 32, 16
    D, HEADS, MLP, LAYERS = 64, 4, 128, 2
    CONV1_OUT = 16
    # TODO(synk): original module sets vocabulary_size = len(open('/usr/share/dict/words'));
    # replaced by a fixed synthetic vocab size (no file IO allowed).
    VOCAB = 128
    S = (H // PATCH) * (W // PATCH) + 1          # 4 patches + CLS = 5 tokens
    CFG = {"patch": PATCH, "heads": HEADS}       # static Python config (NOT in params)

    key = jax.random.PRNGKey(0)
    kp, kx = jax.random.split(key)
    params = init_params(kp, D=D, S=S, mlp=MLP, n_layers=LAYERS,
                         patch=PATCH, vocab=VOCAB, conv1_out=CONV1_OUT)
    x = jax.random.normal(kx, (B, C, H, W), jnp.float32)

    fwd = jax.jit(functools.partial(vit_baseline_forward, cfg=CFG))
    out = jax.block_until_ready(fwd(params, x))

    assert out.shape == (B, VOCAB), out.shape
    assert bool(jnp.all(jnp.isfinite(out)))
    # softmax rows sum to 1 (final softmax uses exact division)
    assert bool(jnp.allclose(jnp.sum(out, axis=1), 1.0, atol=1e-3))
    print("KERNEL_OK")
</pallas_src>

<mosaic_0001>
module attributes {stable_mosaic.version = 11 : i64} {
  func.func @_vit_fused_kernel(%arg0: i32, %arg1: memref<1x5x64xf32, #tpu.memory_space<vmem>>, %arg2: memref<2x2x1x64xf32, #tpu.memory_space<vmem>>, %arg3: memref<2x2x1x64xf32, #tpu.memory_space<vmem>>, %arg4: memref<2x3x4x64x16xbf16, #tpu.memory_space<vmem>>, %arg5: memref<2x3x4x1x16xf32, #tpu.memory_space<vmem>>, %arg6: memref<2x64x64xbf16, #tpu.memory_space<vmem>>, %arg7: memref<2x1x64xf32, #tpu.memory_space<vmem>>, %arg8: memref<2x64x128xbf16, #tpu.memory_space<vmem>>, %arg9: memref<2x1x128xf32, #tpu.memory_space<vmem>>, %arg10: memref<2x128x64xbf16, #tpu.memory_space<vmem>>, %arg11: memref<2x1x64xf32, #tpu.memory_space<vmem>>, %arg12: memref<1x64xf32, #tpu.memory_space<vmem>>, %arg13: memref<1x64xf32, #tpu.memory_space<vmem>>, %arg14: memref<5x64x128xf32, #tpu.memory_space<vmem>>, %arg15: memref<1x128xf32, #tpu.memory_space<vmem>>, %arg16: memref<1x1x128xf32, #tpu.memory_space<vmem>>) attributes {dimension_semantics = [#tpu.dimension_semantics<parallel>], iteration_bounds = array<i64: 2>, scalar_prefetch = 0 : i64, scratch_operands = 0 : i64, tpu.core_type = #tpu.core_type<tc>, window_params = [{transform_indices = @transform_0, window_bounds = array<i64: 1, 5, 64>}, {pipeline_mode = #tpu.pipeline_mode<synchronous>, transform_indices = @transform_1, window_bounds = array<i64: 2, 2, 1, 64>}, {pipeline_mode = #tpu.pipeline_mode<synchronous>, transform_indices = @transform_2, window_bounds = array<i64: 2, 2, 1, 64>}, {pipeline_mode = #tpu.pipeline_mode<synchronous>, transform_indices = @transform_3, window_bounds = array<i64: 2, 3, 4, 64, 16>}, {pipeline_mode = #tpu.pipeline_mode<synchronous>, transform_indices = @transform_4, window_bounds = array<i64: 2, 3, 4, 1, 16>}, {pipeline_mode = #tpu.pipeline_mode<synchronous>, transform_indices = @transform_5, window_bounds = array<i64: 2, 64, 64>}, {pipeline_mode = #tpu.pipeline_mode<synchronous>, transform_indices = @transform_6, window_bounds = array<i64: 2, 1, 64>}, {pipeline_mode = #tpu.pipeline_mode<synchronous>, transform_indices = @transform_7, window_bounds = array<i64: 2, 64, 128>}, {pipeline_mode = #tpu.pipeline_mode<synchronous>, transform_indices = @transform_8, window_bounds = array<i64: 2, 1, 128>}, {pipeline_mode = #tpu.pipeline_mode<synchronous>, transform_indices = @transform_9, window_bounds = array<i64: 2, 128, 64>}, {pipeline_mode = #tpu.pipeline_mode<synchronous>, transform_indices = @transform_10, window_bounds = array<i64: 2, 1, 64>}, {pipeline_mode = #tpu.pipeline_mode<synchronous>, transform_indices = @transform_11, window_bounds = array<i64: 1, 64>}, {pipeline_mode = #tpu.pipeline_mode<synchronous>, transform_indices = @transform_12, window_bounds = array<i64: 1, 64>}, {pipeline_mode = #tpu.pipeline_mode<synchronous>, transform_indices = @transform_13, window_bounds = array<i64: 5, 64, 128>}, {pipeline_mode = #tpu.pipeline_mode<synchronous>, transform_indices = @transform_14, window_bounds = array<i64: 1, 128>}, {transform_indices = @transform_15, window_bounds = array<i64: 1, 1, 128>}]} {
    %c0 = arith.constant 0 : index
    %c0_0 = arith.constant 0 : index
    %c0_1 = arith.constant 0 : index
    %0 = vector.load %arg1[%c0, %c0_0, %c0_1] : memref<1x5x64xf32, #tpu.memory_space<vmem>>, vector<1x5x64xf32>
    %1 = vector.shape_cast %0 : vector<1x5x64xf32> to vector<5x64xf32>
    %c0_2 = arith.constant 0 : index
    %c0_3 = arith.constant 0 : index
    %c0_4 = arith.constant 0 : index
    %c0_5 = arith.constant 0 : index
    %2 = vector.load %arg2[%c0_2, %c0_3, %c0_4, %c0_5] : memref<2x2x1x64xf32, #tpu.memory_space<vmem>>, vector<1x1x1x64xf32>
    %3 = vector.shape_cast %2 : vector<1x1x1x64xf32> to vector<1x64xf32>
    %c0_6 = arith.constant 0 : index
    %c0_7 = arith.constant 0 : index
    %c0_8 = arith.constant 0 : index
    %c0_9 = arith.constant 0 : index
    %4 = vector.load %arg3[%c0_6, %c0_7, %c0_8, %c0_9] : memref<2x2x1x64xf32, #tpu.memory_space<vmem>>, vector<1x1x1x64xf32>
    %5 = vector.shape_cast %4 : vector<1x1x1x64xf32> to vector<1x64xf32>
    %cst = arith.constant dense<0.000000e+00> : vector<5xf32>
    %6 = vector.multi_reduction <add>, %1, %cst [1] : vector<5x64xf32> to vector<5xf32>
    %7 = vector.shape_cast %6 : vector<5xf32> to vector<5x1xf32>
    %cst_10 = arith.constant 6.400000e+01 : f32
    %8 = vector.broadcast %cst_10 : f32 to vector<5x1xf32>
    %9 = arith.divf %7, %8 : vector<5x1xf32>
    %10 = vector.broadcast %9 : vector<5x1xf32> to vector<5x64xf32>
    %11 = arith.subf %1, %10 : vector<5x64xf32>
    %12 = arith.mulf %11, %11 : vector<5x64xf32>
    %cst_11 = arith.constant dense<0.000000e+00> : vector<5xf32>
    %13 = vector.multi_reduction <add>, %12, %cst_11 [1] : vector<5x64xf32> to vector<5xf32>
    %14 = vector.shape_cast %13 : vector<5xf32> to vector<5x1xf32>
    %cst_12 = arith.constant 6.400000e+01 : f32
    %15 = vector.broadcast %cst_12 : f32 to vector<5x1xf32>
    %16 = arith.divf %14, %15 : vector<5x1xf32>
    %17 = vector.broadcast %9 : vector<5x1xf32> to vector<5x64xf32>
    %18 = arith.subf %1, %17 : vector<5x64xf32>
    %cst_13 = arith.constant 9.99999996E-13 : f32
    %19 = vector.broadcast %cst_13 : f32 to vector<5x1xf32>
    %20 = arith.addf %16, %19 : vector<5x1xf32>
    %21 = math.rsqrt %20 : vector<5x1xf32>
    %22 = vector.broadcast %21 : vector<5x1xf32> to vector<5x64xf32>
    %23 = arith.mulf %18, %22 : vector<5x64xf32>
    %24 = vector.broadcast %3 : vector<1x64xf32> to vector<5x64xf32>
    %25 = arith.mulf %23, %24 : vector<5x64xf32>
    %26 = vector.broadcast %5 : vector<1x64xf32> to vector<5x64xf32>
    %27 = arith.addf %25, %26 : vector<5x64xf32>
    %28 = arith.truncf %27 : vector<5x64xf32> to vector<5x64xbf16>
    %c0_14 = arith.constant 0 : index
    %c0_15 = arith.constant 0 : index
    %c0_16 = arith.constant 0 : index
    %c0_17 = arith.constant 0 : index
    %c0_18 = arith.constant 0 : index
    %29 = vector.load %arg4[%c0_14, %c0_15, %c0_16, %c0_17, %c0_18] : memref<2x3x4x64x16xbf16, #tpu.memory_space<vmem>>, vector<1x1x1x64x16xbf16>
    %30 = vector.shape_cast %29 : vector<1x1x1x64x16xbf16> to vector<64x16xbf16>
    %cst_19 = arith.constant dense<0.000000e+00> : vector<5x16xf32>
    %31 = tpu.matmul %28, %30, %cst_19 {dimension_numbers = #tpu.dot_dimension_numbers<[1], [0], [0], [1], [0, 0, 1, 1], [], []>} : vector<5x64xbf16>, vector<64x16xbf16>, vector<5x16xf32> -> vector<5x16xf32>
    %c0_20 = arith.constant 0 : index
    %c0_21 = arith.constant 0 : index
    %c0_22 = arith.constant 0 : index
    %c0_23 = arith.constant 0 : index
    %c0_24 = arith.constant 0 : index
    %32 = vector.load %arg5[%c0_20, %c0_21, %c0_22, %c0_23, %c0_24] : memref<2x3x4x1x16xf32, #tpu.memory_space<vmem>>, vector<1x1x1x1x16xf32>
    %33 = vector.shape_cast %32 : vector<1x1x1x1x16xf32> to vector<1x16xf32>
    %34 = vector.broadcast %33 : vector<1x16xf32> to vector<5x16xf32>
    %35 = arith.addf %31, %34 : vector<5x16xf32>
    %c0_25 = arith.constant 0 : index
    %c1 = arith.constant 1 : index
    %c0_26 = arith.constant 0 : index
    %c0_27 = arith.constant 0 : index
    %c0_28 = arith.constant 0 : index
    %36 = vector.load %arg4[%c0_25, %c1, %c0_26, %c0_27, %c0_28] : memref<2x3x4x64x16xbf16, #tpu.memory_space<vmem>>, vector<1x1x1x64x16xbf16>
    %37 = vector.shape_cast %36 : vector<1x1x1x64x16xbf16> to vector<64x16xbf16>
    %cst_29 = arith.constant dense<0.000000e+00> : vector<5x16xf32>
    %38 = tpu.matmul %28, %37, %cst_29 {dimension_numbers = #tpu.dot_dimension_numbers<[1], [0], [0], [1], [0, 0, 1, 1], [], []>} : vector<5x64xbf16>, vector<64x16xbf16>, vector<5x16xf32> -> vector<5x16xf32>
    %c0_30 = arith.constant 0 : index
    %c1_31 = arith.constant 1 : index
    %c0_32 = arith.constant 0 : index
    %c0_33 = arith.constant 0 : index
    %c0_34 = arith.constant 0 : index
    %39 = vector.load %arg5[%c0_30, %c1_31, %c0_32, %c0_33, %c0_34] : memref<2x3x4x1x16xf32, #tpu.memory_space<vmem>>, vector<1x1x1x1x16xf32>
    %40 = vector.shape_cast %39 : vector<1x1x1x1x16xf32> to vector<1x16xf32>
    %41 = vector.broadcast %40 : vector<1x16xf32> to vector<5x16xf32>
    %42 = arith.addf %38, %41 : vector<5x16xf32>
    %c0_35 = arith.constant 0 : index
    %c2 = arith.constant 2 : index
    %c0_36 = arith.constant 0 : index
    %c0_37 = arith.constant 0 : index
    %c0_38 = arith.constant 0 : index
    %43 = vector.load %arg4[%c0_35, %c2, %c0_36, %c0_37, %c0_38] : memref<2x3x4x64x16xbf16, #tpu.memory_space<vmem>>, vector<1x1x1x64x16xbf16>
    %44 = vector.shape_cast %43 : vector<1x1x1x64x16xbf16> to vector<64x16xbf16>
    %cst_39 = arith.constant dense<0.000000e+00> : vector<5x16xf32>
    %45 = tpu.matmul %28, %44, %cst_39 {dimension_numbers = #tpu.dot_dimension_numbers<[1], [0], [0], [1], [0, 0, 1, 1], [], []>} : vector<5x64xbf16>, vector<64x16xbf16>, vector<5x16xf32> -> vector<5x16xf32>
    %c0_40 = arith.constant 0 : index
    %c2_41 = arith.constant 2 : index
    %c0_42 = arith.constant 0 : index
    %c0_43 = arith.constant 0 : index
    %c0_44 = arith.constant 0 : index
    %46 = vector.load %arg5[%c0_40, %c2_41, %c0_42, %c0_43, %c0_44] : memref<2x3x4x1x16xf32, #tpu.memory_space<vmem>>, vector<1x1x1x1x16xf32>
    %47 = vector.shape_cast %46 : vector<1x1x1x1x16xf32> to vector<1x16xf32>
    %48 = vector.broadcast %47 : vector<1x16xf32> to vector<5x16xf32>
    %49 = arith.addf %45, %48 : vector<5x16xf32>
    %cst_45 = arith.constant dense<0.000000e+00> : vector<5x5xf32>
    %50 = tpu.matmul %35, %42, %cst_45 {dimension_numbers = #tpu.dot_dimension_numbers<[1], [1], [0], [0], [0, 0, 1, 0], [], []>} : vector<5x16xf32>, vector<5x16xf32>, vector<5x5xf32> -> vector<5x5xf32>
    %cst_46 = arith.constant 2.500000e-01 : f32
    %51 = vector.broadcast %cst_46 : f32 to vector<5x5xf32>
    %52 = arith.mulf %50, %51 : vector<5x5xf32>
    %cst_47 = arith.constant dense<0xFF800000> : vector<5xf32>
    %53 = vector.multi_reduction <maximumf>, %52, %cst_47 [1] : vector<5x5xf32> to vector<5xf32>
    %54 = vector.shape_cast %53 : vector<5xf32> to vector<5x1xf32>
    %55 = vector.broadcast %54 : vector<5x1xf32> to vector<5x5xf32>
    %56 = arith.subf %52, %55 : vector<5x5xf32>
    %57 = math.exp %56 : vector<5x5xf32>
    %cst_48 = arith.constant dense<0.000000e+00> : vector<5xf32>
    %58 = vector.multi_reduction <add>, %57, %cst_48 [1] : vector<5x5xf32> to vector<5xf32>
    %59 = vector.shape_cast %58 : vector<5xf32> to vector<5x1xf32>
    %60 = tpu.reciprocal %59 {approx = true} : vector<5x1xf32> -> vector<5x1xf32>
    %61 = vector.broadcast %60 : vector<5x1xf32> to vector<5x5xf32>
    %62 = arith.mulf %57, %61 : vector<5x5xf32>
    %cst_49 = arith.constant dense<0.000000e+00> : vector<5x16xf32>
    %63 = tpu.matmul %62, %49, %cst_49 {dimension_numbers = #tpu.dot_dimension_numbers<[1], [0], [0], [1], [0, 0, 1, 1], [], []>} : vector<5x5xf32>, vector<5x16xf32>, vector<5x16xf32> -> vector<5x16xf32>
    %c0_50 = arith.constant 0 : index
    %c0_51 = arith.constant 0 : index
    %c1_52 = arith.constant 1 : index
    %c0_53 = arith.constant 0 : index
    %c0_54 = arith.constant 0 : index
    %64 = vector.load %arg4[%c0_50, %c0_51, %c1_52, %c0_53, %c0_54] : memref<2x3x4x64x16xbf16, #tpu.memory_space<vmem>>, vector<1x1x1x64x16xbf16>
    %65 = vector.shape_cast %64 : vector<1x1x1x64x16xbf16> to vector<64x16xbf16>
    %cst_55 = arith.constant dense<0.000000e+00> : vector<5x16xf32>
    %66 = tpu.matmul %28, %65, %cst_55 {dimension_numbers = #tpu.dot_dimension_numbers<[1], [0], [0], [1], [0, 0, 1, 1], [], []>} : vector<5x64xbf16>, vector<64x16xbf16>, vector<5x16xf32> -> vector<5x16xf32>
    %c0_56 = arith.constant 0 : index
    %c0_57 = arith.constant 0 : index
    %c1_58 = arith.constant 1 : index
    %c0_59 = arith.constant 0 : index
    %c0_60 = arith.constant 0 : index
    %67 = vector.load %arg5[%c0_56, %c0_57, %c1_58, %c0_59, %c0_60] : memref<2x3x4x1x16xf32, #tpu.memory_space<vmem>>, vector<1x1x1x1x16xf32>
    %68 = vector.shape_cast %67 : vector<1x1x1x1x16xf32> to vector<1x16xf32>
    %69 = vector.broadcast %68 : vector<1x16xf32> to vector<5x16xf32>
    %70 = arith.addf %66, %69 : vector<5x16xf32>
    %c0_61 = arith.constant 0 : index
    %c1_62 = arith.constant 1 : index
    %c1_63 = arith.constant 1 : index
    %c0_64 = arith.constant 0 : index
    %c0_65 = arith.constant 0 : index
    %71 = vector.load %arg4[%c0_61, %c1_62, %c1_63, %c0_64, %c0_65] : memref<2x3x4x64x16xbf16, #tpu.memory_space<vmem>>, vector<1x1x1x64x16xbf16>
    %72 = vector.shape_cast %71 : vector<1x1x1x64x16xbf16> to vector<64x16xbf16>
    %cst_66 = arith.constant dense<0.000000e+00> : vector<5x16xf32>
    %73 = tpu.matmul %28, %72, %cst_66 {dimension_numbers = #tpu.dot_dimension_numbers<[1], [0], [0], [1], [0, 0, 1, 1], [], []>} : vector<5x64xbf16>, vector<64x16xbf16>, vector<5x16xf32> -> vector<5x16xf32>
    %c0_67 = arith.constant 0 : index
    %c1_68 = arith.constant 1 : index
    %c1_69 = arith.constant 1 : index
    %c0_70 = arith.constant 0 : index
    %c0_71 = arith.constant 0 : index
    %74 = vector.load %arg5[%c0_67, %c1_68, %c1_69, %c0_70, %c0_71] : memref<2x3x4x1x16xf32, #tpu.memory_space<vmem>>, vector<1x1x1x1x16xf32>
    %75 = vector.shape_cast %74 : vector<1x1x1x1x16xf32> to vector<1x16xf32>
    %76 = vector.broadcast %75 : vector<1x16xf32> to vector<5x16xf32>
    %77 = arith.addf %73, %76 : vector<5x16xf32>
    %c0_72 = arith.constant 0 : index
    %c2_73 = arith.constant 2 : index
    %c1_74 = arith.constant 1 : index
    %c0_75 = arith.constant 0 : index
    %c0_76 = arith.constant 0 : index
    %78 = vector.load %arg4[%c0_72, %c2_73, %c1_74, %c0_75, %c0_76] : memref<2x3x4x64x16xbf16, #tpu.memory_space<vmem>>, vector<1x1x1x64x16xbf16>
    %79 = vector.shape_cast %78 : vector<1x1x1x64x16xbf16> to vector<64x16xbf16>
    %cst_77 = arith.constant dense<0.000000e+00> : vector<5x16xf32>
    %80 = tpu.matmul %28, %79, %cst_77 {dimension_numbers = #tpu.dot_dimension_numbers<[1], [0], [0], [1], [0, 0, 1, 1], [], []>} : vector<5x64xbf16>, vector<64x16xbf16>, vector<5x16xf32> -> vector<5x16xf32>
    %c0_78 = arith.constant 0 : index
    %c2_79 = arith.constant 2 : index
    %c1_80 = arith.constant 1 : index
    %c0_81 = arith.constant 0 : index
    %c0_82 = arith.constant 0 : index
    %81 = vector.load %arg5[%c0_78, %c2_79, %c1_80, %c0_81, %c0_82] : memref<2x3x4x1x16xf32, #tpu.memory_space<vmem>>, vector<1x1x1x1x16xf32>
    %82 = vector.shape_cast %81 : vector<1x1x1x1x16xf32> to vector<1x16xf32>
    %83 = vector.broadcast %82 : vector<1x16xf32> to vector<5x16xf32>
    %84 = arith.addf %80, %83 : vector<5x16xf32>
    %cst_83 = arith.constant dense<0.000000e+00> : vector<5x5xf32>
    %85 = tpu.matmul %70, %77, %cst_83 {dimension_numbers = #tpu.dot_dimension_numbers<[1], [1], [0], [0], [0, 0, 1, 0], [], []>} : vector<5x16xf32>, vector<5x16xf32>, vector<5x5xf32> -> vector<5x5xf32>
    %cst_84 = arith.constant 2.500000e-01 : f32
    %86 = vector.broadcast %cst_84 : f32 to vector<5x5xf32>
    %87 = arith.mulf %85, %86 : vector<5x5xf32>
    %cst_85 = arith.constant dense<0xFF800000> : vector<5xf32>
    %88 = vector.multi_reduction <maximumf>, %87, %cst_85 [1] : vector<5x5xf32> to vector<5xf32>
    %89 = vector.shape_cast %88 : vector<5xf32> to vector<5x1xf32>
    %90 = vector.broadcast %89 : vector<5x1xf32> to vector<5x5xf32>
    %91 = arith.subf %87, %90 : vector<5x5xf32>
    %92 = math.exp %91 : vector<5x5xf32>
    %cst_86 = arith.constant dense<0.000000e+00> : vector<5xf32>
    %93 = vector.multi_reduction <add>, %92, %cst_86 [1] : vector<5x5xf32> to vector<5xf32>
    %94 = vector.shape_cast %93 : vector<5xf32> to vector<5x1xf32>
    %95 = tpu.reciprocal %94 {approx = true} : vector<5x1xf32> -> vector<5x1xf32>
    %96 = vector.broadcast %95 : vector<5x1xf32> to vector<5x5xf32>
    %97 = arith.mulf %92, %96 : vector<5x5xf32>
    %cst_87 = arith.constant dense<0.000000e+00> : vector<5x16xf32>
    %98 = tpu.matmul %97, %84, %cst_87 {dimension_numbers = #tpu.dot_dimension_numbers<[1], [0], [0], [1], [0, 0, 1, 1], [], []>} : vector<5x5xf32>, vector<5x16xf32>, vector<5x16xf32> -> vector<5x16xf32>
    %c0_88 = arith.constant 0 : index
    %c0_89 = arith.constant 0 : index
    %c2_90 = arith.constant 2 : index
    %c0_91 = arith.constant 0 : index
    %c0_92 = arith.constant 0 : index
    %99 = vector.load %arg4[%c0_88, %c0_89, %c2_90, %c0_91, %c0_92] : memref<2x3x4x64x16xbf16, #tpu.memory_space<vmem>>, vector<1x1x1x64x16xbf16>
    %100 = vector.shape_cast %99 : vector<1x1x1x64x16xbf16> to vector<64x16xbf16>
    %cst_93 = arith.constant dense<0.000000e+00> : vector<5x16xf32>
    %101 = tpu.matmul %28, %100, %cst_93 {dimension_numbers = #tpu.dot_dimension_numbers<[1], [0], [0], [1], [0, 0, 1, 1], [], []>} : vector<5x64xbf16>, vector<64x16xbf16>, vector<5x16xf32> -> vector<5x16xf32>
    %c0_94 = arith.constant 0 : index
    %c0_95 = arith.constant 0 : index
    %c2_96 = arith.constant 2 : index
    %c0_97 = arith.constant 0 : index
    %c0_98 = arith.constant 0 : index
    %102 = vector.load %arg5[%c0_94, %c0_95, %c2_96, %c0_97, %c0_98] : memref<2x3x4x1x16xf32, #tpu.memory_space<vmem>>, vector<1x1x1x1x16xf32>
    %103 = vector.shape_cast %102 : vector<1x1x1x1x16xf32> to vector<1x16xf32>
    %104 = vector.broadcast %103 : vector<1x16xf32> to vector<5x16xf32>
    %105 = arith.addf %101, %104 : vector<5x16xf32>
    %c0_99 = arith.constant 0 : index
    %c1_100 = arith.constant 1 : index
    %c2_101 = arith.constant 2 : index
    %c0_102 = arith.constant 0 : index
    %c0_103 = arith.constant 0 : index
    %106 = vector.load %arg4[%c0_99, %c1_100, %c2_101, %c0_102, %c0_103] : memref<2x3x4x64x16xbf16, #tpu.memory_space<vmem>>, vector<1x1x1x64x16xbf16>
    %107 = vector.shape_cast %106 : vector<1x1x1x64x16xbf16> to vector<64x16xbf16>
    %cst_104 = arith.constant dense<0.000000e+00> : vector<5x16xf32>
    %108 = tpu.matmul %28, %107, %cst_104 {dimension_numbers = #tpu.dot_dimension_numbers<[1], [0], [0], [1], [0, 0, 1, 1], [], []>} : vector<5x64xbf16>, vector<64x16xbf16>, vector<5x16xf32> -> vector<5x16xf32>
    %c0_105 = arith.constant 0 : index
    %c1_106 = arith.constant 1 : index
    %c2_107 = arith.constant 2 : index
    %c0_108 = arith.constant 0 : index
    %c0_109 = arith.constant 0 : index
    %109 = vector.load %arg5[%c0_105, %c1_106, %c2_107, %c0_108, %c0_109] : memref<2x3x4x1x16xf32, #tpu.memory_space<vmem>>, vector<1x1x1x1x16xf32>
    %110 = vector.shape_cast %109 : vector<1x1x1x1x16xf32> to vector<1x16xf32>
    %111 = vector.broadcast %110 : vector<1x16xf32> to vector<5x16xf32>
    %112 = arith.addf %108, %111 : vector<5x16xf32>
    %c0_110 = arith.constant 0 : index
    %c2_111 = arith.constant 2 : index
    %c2_112 = arith.constant 2 : index
    %c0_113 = arith.constant 0 : index
    %c0_114 = arith.constant 0 : index
    %113 = vector.load %arg4[%c0_110, %c2_111, %c2_112, %c0_113, %c0_114] : memref<2x3x4x64x16xbf16, #tpu.memory_space<vmem>>, vector<1x1x1x64x16xbf16>
    %114 = vector.shape_cast %113 : vector<1x1x1x64x16xbf16> to vector<64x16xbf16>
    %cst_115 = arith.constant dense<0.000000e+00> : vector<5x16xf32>
    %115 = tpu.matmul %28, %114, %cst_115 {dimension_numbers = #tpu.dot_dimension_numbers<[1], [0], [0], [1], [0, 0, 1, 1], [], []>} : vector<5x64xbf16>, vector<64x16xbf16>, vector<5x16xf32> -> vector<5x16xf32>
    %c0_116 = arith.constant 0 : index
    %c2_117 = arith.constant 2 : index
    %c2_118 = arith.constant 2 : index
    %c0_119 = arith.constant 0 : index
    %c0_120 = arith.constant 0 : index
    %116 = vector.load %arg5[%c0_116, %c2_117, %c2_118, %c0_119, %c0_120] : memref<2x3x4x1x16xf32, #tpu.memory_space<vmem>>, vector<1x1x1x1x16xf32>
    %117 = vector.shape_cast %116 : vector<1x1x1x1x16xf32> to vector<1x16xf32>
    %118 = vector.broadcast %117 : vector<1x16xf32> to vector<5x16xf32>
    %119 = arith.addf %115, %118 : vector<5x16xf32>
    %cst_121 = arith.constant dense<0.000000e+00> : vector<5x5xf32>
    %120 = tpu.matmul %105, %112, %cst_121 {dimension_numbers = #tpu.dot_dimension_numbers<[1], [1], [0], [0], [0, 0, 1, 0], [], []>} : vector<5x16xf32>, vector<5x16xf32>, vector<5x5xf32> -> vector<5x5xf32>
    %cst_122 = arith.constant 2.500000e-01 : f32
    %121 = vector.broadcast %cst_122 : f32 to vector<5x5xf32>
    %122 = arith.mulf %120, %121 : vector<5x5xf32>
    %cst_123 = arith.constant dense<0xFF800000> : vector<5xf32>
    %123 = vector.multi_reduction <maximumf>, %122, %cst_123 [1] : vector<5x5xf32> to vector<5xf32>
    %124 = vector.shape_cast %123 : vector<5xf32> to vector<5x1xf32>
    %125 = vector.broadcast %124 : vector<5x1xf32> to vector<5x5xf32>
    %126 = arith.subf %122, %125 : vector<5x5xf32>
    %127 = math.exp %126 : vector<5x5xf32>
    %cst_124 = arith.constant dense<0.000000e+00> : vector<5xf32>
    %128 = vector.multi_reduction <add>, %127, %cst_124 [1] : vector<5x5xf32> to vector<5xf32>
    %129 = vector.shape_cast %128 : vector<5xf32> to vector<5x1xf32>
    %130 = tpu.reciprocal %129 {approx = true} : vector<5x1xf32> -> vector<5x1xf32>
    %131 = vector.broadcast %130 : vector<5x1xf32> to vector<5x5xf32>
    %132 = arith.mulf %127, %131 : vector<5x5xf32>
    %cst_125 = arith.constant dense<0.000000e+00> : vector<5x16xf32>
    %133 = tpu.matmul %132, %119, %cst_125 {dimension_numbers = #tpu.dot_dimension_numbers<[1], [0], [0], [1], [0, 0, 1, 1], [], []>} : vector<5x5xf32>, vector<5x16xf32>, vector<5x16xf32> -> vector<5x16xf32>
    %c0_126 = arith.constant 0 : index
    %c0_127 = arith.constant 0 : index
    %c3 = arith.constant 3 : index
    %c0_128 = arith.constant 0 : index
    %c0_129 = arith.constant 0 : index
    %134 = vector.load %arg4[%c0_126, %c0_127, %c3, %c0_128, %c0_129] : memref<2x3x4x64x16xbf16, #tpu.memory_space<vmem>>, vector<1x1x1x64x16xbf16>
    %135 = vector.shape_cast %134 : vector<1x1x1x64x16xbf16> to vector<64x16xbf16>
    %cst_130 = arith.constant dense<0.000000e+00> : vector<5x16xf32>
    %136 = tpu.matmul %28, %135, %cst_130 {dimension_numbers = #tpu.dot_dimension_numbers<[1], [0], [0], [1], [0, 0, 1, 1], [], []>} : vector<5x64xbf16>, vector<64x16xbf16>, vector<5x16xf32> -> vector<5x16xf32>
    %c0_131 = arith.constant 0 : index
    %c0_132 = arith.constant 0 : index
    %c3_133 = arith.constant 3 : index
    %c0_134 = arith.constant 0 : index
    %c0_135 = arith.constant 0 : index
    %137 = vector.load %arg5[%c0_131, %c0_132, %c3_133, %c0_134, %c0_135] : memref<2x3x4x1x16xf32, #tpu.memory_space<vmem>>, vector<1x1x1x1x16xf32>
    %138 = vector.shape_cast %137 : vector<1x1x1x1x16xf32> to vector<1x16xf32>
    %139 = vector.broadcast %138 : vector<1x16xf32> to vector<5x16xf32>
    %140 = arith.addf %136, %139 : vector<5x16xf32>
    %c0_136 = arith.constant 0 : index
    %c1_137 = arith.constant 1 : index
    %c3_138 = arith.constant 3 : index
    %c0_139 = arith.constant 0 : index
    %c0_140 = arith.constant 0 : index
    %141 = vector.load %arg4[%c0_136, %c1_137, %c3_138, %c0_139, %c0_140] : memref<2x3x4x64x16xbf16, #tpu.memory_space<vmem>>, vector<1x1x1x64x16xbf16>
    %142 = vector.shape_cast %141 : vector<1x1x1x64x16xbf16> to vector<64x16xbf16>
    %cst_141 = arith.constant dense<0.000000e+00> : vector<5x16xf32>
    %143 = tpu.matmul %28, %142, %cst_141 {dimension_numbers = #tpu.dot_dimension_numbers<[1], [0], [0], [1], [0, 0, 1, 1], [], []>} : vector<5x64xbf16>, vector<64x16xbf16>, vector<5x16xf32> -> vector<5x16xf32>
    %c0_142 = arith.constant 0 : index
    %c1_143 = arith.constant 1 : index
    %c3_144 = arith.constant 3 : index
    %c0_145 = arith.constant 0 : index
    %c0_146 = arith.constant 0 : index
    %144 = vector.load %arg5[%c0_142, %c1_143, %c3_144, %c0_145, %c0_146] : memref<2x3x4x1x16xf32, #tpu.memory_space<vmem>>, vector<1x1x1x1x16xf32>
    %145 = vector.shape_cast %144 : vector<1x1x1x1x16xf32> to vector<1x16xf32>
    %146 = vector.broadcast %145 : vector<1x16xf32> to vector<5x16xf32>
    %147 = arith.addf %143, %146 : vector<5x16xf32>
    %c0_147 = arith.constant 0 : index
    %c2_148 = arith.constant 2 : index
    %c3_149 = arith.constant 3 : index
    %c0_150 = arith.constant 0 : index
    %c0_151 = arith.constant 0 : index
    %148 = vector.load %arg4[%c0_147, %c2_148, %c3_149, %c0_150, %c0_151] : memref<2x3x4x64x16xbf16, #tpu.memory_space<vmem>>, vector<1x1x1x64x16xbf16>
    %149 = vector.shape_cast %148 : vector<1x1x1x64x16xbf16> to vector<64x16xbf16>
    %cst_152 = arith.constant dense<0.000000e+00> : vector<5x16xf32>
    %150 = tpu.matmul %28, %149, %cst_152 {dimension_numbers = #tpu.dot_dimension_numbers<[1], [0], [0], [1], [0, 0, 1, 1], [], []>} : vector<5x64xbf16>, vector<64x16xbf16>, vector<5x16xf32> -> vector<5x16xf32>
    %c0_153 = arith.constant 0 : index
    %c2_154 = arith.constant 2 : index
    %c3_155 = arith.constant 3 : index
    %c0_156 = arith.constant 0 : index
    %c0_157 = arith.constant 0 : index
    %151 = vector.load %arg5[%c0_153, %c2_154, %c3_155, %c0_156, %c0_157] : memref<2x3x4x1x16xf32, #tpu.memory_space<vmem>>, vector<1x1x1x1x16xf32>
    %152 = vector.shape_cast %151 : vector<1x1x1x1x16xf32> to vector<1x16xf32>
    %153 = vector.broadcast %152 : vector<1x16xf32> to vector<5x16xf32>
    %154 = arith.addf %150, %153 : vector<5x16xf32>
    %cst_158 = arith.constant dense<0.000000e+00> : vector<5x5xf32>
    %155 = tpu.matmul %140, %147, %cst_158 {dimension_numbers = #tpu.dot_dimension_numbers<[1], [1], [0], [0], [0, 0, 1, 0], [], []>} : vector<5x16xf32>, vector<5x16xf32>, vector<5x5xf32> -> vector<5x5xf32>
    %cst_159 = arith.constant 2.500000e-01 : f32
    %156 = vector.broadcast %cst_159 : f32 to vector<5x5xf32>
    %157 = arith.mulf %155, %156 : vector<5x5xf32>
    %cst_160 = arith.constant dense<0xFF800000> : vector<5xf32>
    %158 = vector.multi_reduction <maximumf>, %157, %cst_160 [1] : vector<5x5xf32> to vector<5xf32>
    %159 = vector.shape_cast %158 : vector<5xf32> to vector<5x1xf32>
    %160 = vector.broadcast %159 : vector<5x1xf32> to vector<5x5xf32>
    %161 = arith.subf %157, %160 : vector<5x5xf32>
    %162 = math.exp %161 : vector<5x5xf32>
    %cst_161 = arith.constant dense<0.000000e+00> : vector<5xf32>
    %163 = vector.multi_reduction <add>, %162, %cst_161 [1] : vector<5x5xf32> to vector<5xf32>
    %164 = vector.shape_cast %163 : vector<5xf32> to vector<5x1xf32>
    %165 = tpu.reciprocal %164 {approx = true} : vector<5x1xf32> -> vector<5x1xf32>
    %166 = vector.broadcast %165 : vector<5x1xf32> to vector<5x5xf32>
    %167 = arith.mulf %162, %166 : vector<5x5xf32>
    %cst_162 = arith.constant dense<0.000000e+00> : vector<5x16xf32>
    %168 = tpu.matmul %167, %154, %cst_162 {dimension_numbers = #tpu.dot_dimension_numbers<[1], [0], [0], [1], [0, 0, 1, 1], [], []>} : vector<5x5xf32>, vector<5x16xf32>, vector<5x16xf32> -> vector<5x16xf32>
    %169 = tpu.concatenate %63, %98, %133, %168 in 1 : vector<5x16xf32>, vector<5x16xf32>, vector<5x16xf32>, vector<5x16xf32> -> vector<5x64xf32>
    %170 = arith.truncf %169 : vector<5x64xf32> to vector<5x64xbf16>
    %c0_163 = arith.constant 0 : index
    %c0_164 = arith.constant 0 : index
    %c0_165 = arith.constant 0 : index
    %171 = vector.load %arg6[%c0_163, %c0_164, %c0_165] : memref<2x64x64xbf16, #tpu.memory_space<vmem>>, vector<1x64x64xbf16>
    %172 = vector.shape_cast %171 : vector<1x64x64xbf16> to vector<64x64xbf16>
    %cst_166 = arith.constant dense<0.000000e+00> : vector<5x64xf32>
    %173 = tpu.matmul %170, %172, %cst_166 {dimension_numbers = #tpu.dot_dimension_numbers<[1], [0], [0], [1], [0, 0, 1, 1], [], []>} : vector<5x64xbf16>, vector<64x64xbf16>, vector<5x64xf32> -> vector<5x64xf32>
    %c0_167 = arith.constant 0 : index
    %c0_168 = arith.constant 0 : index
    %c0_169 = arith.constant 0 : index
    %174 = vector.load %arg7[%c0_167, %c0_168, %c0_169] : memref<2x1x64xf32, #tpu.memory_space<vmem>>, vector<1x1x64xf32>
    %175 = vector.shape_cast %174 : vector<1x1x64xf32> to vector<1x64xf32>
    %176 = vector.broadcast %175 : vector<1x64xf32> to vector<5x64xf32>
    %177 = arith.addf %173, %176 : vector<5x64xf32>
    %178 = arith.addf %1, %177 : vector<5x64xf32>
    %c0_170 = arith.constant 0 : index
    %c1_171 = arith.constant 1 : index
    %c0_172 = arith.constant 0 : index
    %c0_173 = arith.constant 0 : index
    %179 = vector.load %arg2[%c0_170, %c1_171, %c0_172, %c0_173] : memref<2x2x1x64xf32, #tpu.memory_space<vmem>>, vector<1x1x1x64xf32>
    %180 = vector.shape_cast %179 : vector<1x1x1x64xf32> to vector<1x64xf32>
    %c0_174 = arith.constant 0 : index
    %c1_175 = arith.constant 1 : index
    %c0_176 = arith.constant 0 : index
    %c0_177 = arith.constant 0 : index
    %181 = vector.load %arg3[%c0_174, %c1_175, %c0_176, %c0_177] : memref<2x2x1x64xf32, #tpu.memory_space<vmem>>, vector<1x1x1x64xf32>
    %182 = vector.shape_cast %181 : vector<1x1x1x64xf32> to vector<1x64xf32>
    %cst_178 = arith.constant dense<0.000000e+00> : vector<5xf32>
    %183 = vector.multi_reduction <add>, %178, %cst_178 [1] : vector<5x64xf32> to vector<5xf32>
    %184 = vector.shape_cast %183 : vector<5xf32> to vector<5x1xf32>
    %cst_179 = arith.constant 6.400000e+01 : f32
    %185 = vector.broadcast %cst_179 : f32 to vector<5x1xf32>
    %186 = arith.divf %184, %185 : vector<5x1xf32>
    %187 = vector.broadcast %186 : vector<5x1xf32> to vector<5x64xf32>
    %188 = arith.subf %178, %187 : vector<5x64xf32>
    %189 = arith.mulf %188, %188 : vector<5x64xf32>
    %cst_180 = arith.constant dense<0.000000e+00> : vector<5xf32>
    %190 = vector.multi_reduction <add>, %189, %cst_180 [1] : vector<5x64xf32> to vector<5xf32>
    %191 = vector.shape_cast %190 : vector<5xf32> to vector<5x1xf32>
    %cst_181 = arith.constant 6.400000e+01 : f32
    %192 = vector.broadcast %cst_181 : f32 to vector<5x1xf32>
    %193 = arith.divf %191, %192 : vector<5x1xf32>
    %194 = vector.broadcast %186 : vector<5x1xf32> to vector<5x64xf32>
    %195 = arith.subf %178, %194 : vector<5x64xf32>
    %cst_182 = arith.constant 9.99999996E-13 : f32
    %196 = vector.broadcast %cst_182 : f32 to vector<5x1xf32>
    %197 = arith.addf %193, %196 : vector<5x1xf32>
    %198 = math.rsqrt %197 : vector<5x1xf32>
    %199 = vector.broadcast %198 : vector<5x1xf32> to vector<5x64xf32>
    %200 = arith.mulf %195, %199 : vector<5x64xf32>
    %201 = vector.broadcast %180 : vector<1x64xf32> to vector<5x64xf32>
    %202 = arith.mulf %200, %201 : vector<5x64xf32>
    %203 = vector.broadcast %182 : vector<1x64xf32> to vector<5x64xf32>
    %204 = arith.addf %202, %203 : vector<5x64xf32>
    %205 = arith.truncf %204 : vector<5x64xf32> to vector<5x64xbf16>
    %c0_183 = arith.constant 0 : index
    %c0_184 = arith.constant 0 : index
    %c0_185 = arith.constant 0 : index
    %206 = vector.load %arg8[%c0_183, %c0_184, %c0_185] : memref<2x64x128xbf16, #tpu.memory_space<vmem>>, vector<1x64x128xbf16>
    %207 = vector.shape_cast %206 : vector<1x64x128xbf16> to vector<64x128xbf16>
    %cst_186 = arith.constant dense<0.000000e+00> : vector<5x128xf32>
    %208 = tpu.matmul %205, %207, %cst_186 {dimension_numbers = #tpu.dot_dimension_numbers<[1], [0], [0], [1], [0, 0, 1, 1], [], []>} : vector<5x64xbf16>, vector<64x128xbf16>, vector<5x128xf32> -> vector<5x128xf32>
    %c0_187 = arith.constant 0 : index
    %c0_188 = arith.constant 0 : index
    %c0_189 = arith.constant 0 : index
    %209 = vector.load %arg9[%c0_187, %c0_188, %c0_189] : memref<2x1x128xf32, #tpu.memory_space<vmem>>, vector<1x1x128xf32>
    %210 = vector.shape_cast %209 : vector<1x1x128xf32> to vector<1x128xf32>
    %211 = vector.broadcast %210 : vector<1x128xf32> to vector<5x128xf32>
    %212 = arith.addf %208, %211 : vector<5x128xf32>
    %213 = arith.mulf %212, %212 : vector<5x128xf32>
    %214 = arith.mulf %212, %213 : vector<5x128xf32>
    %cst_190 = arith.constant 4.471500e-02 : f32
    %215 = vector.broadcast %cst_190 : f32 to vector<5x128xf32>
    %216 = arith.mulf %215, %214 : vector<5x128xf32>
    %217 = arith.addf %212, %216 : vector<5x128xf32>
    %cst_191 = arith.constant 0.797884583 : f32
    %218 = vector.broadcast %cst_191 : f32 to vector<5x128xf32>
    %219 = arith.mulf %218, %217 : vector<5x128xf32>
    %220 = math.tanh %219 : vector<5x128xf32>
    %cst_192 = arith.constant 1.000000e+00 : f32
    %221 = vector.broadcast %cst_192 : f32 to vector<5x128xf32>
    %222 = arith.addf %221, %220 : vector<5x128xf32>
    %cst_193 = arith.constant 5.000000e-01 : f32
    %223 = vector.broadcast %cst_193 : f32 to vector<5x128xf32>
    %224 = arith.mulf %223, %222 : vector<5x128xf32>
    %225 = arith.mulf %212, %224 : vector<5x128xf32>
    %226 = arith.truncf %225 : vector<5x128xf32> to vector<5x128xbf16>
    %c0_194 = arith.constant 0 : index
    %c0_195 = arith.constant 0 : index
    %c0_196 = arith.constant 0 : index
    %227 = vector.load %arg10[%c0_194, %c0_195, %c0_196] : memref<2x128x64xbf16, #tpu.memory_space<vmem>>, vector<1x128x64xbf16>
    %228 = vector.shape_cast %227 : vector<1x128x64xbf16> to vector<128x64xbf16>
    %cst_197 = arith.constant dense<0.000000e+00> : vector<5x64xf32>
    %229 = tpu.matmul %226, %228, %cst_197 {dimension_numbers = #tpu.dot_dimension_numbers<[1], [0], [0], [1], [0, 0, 1, 1], [], []>} : vector<5x128xbf16>, vector<128x64xbf16>, vector<5x64xf32> -> vector<5x64xf32>
    %c0_198 = arith.constant 0 : index
    %c0_199 = arith.constant 0 : index
    %c0_200 = arith.constant 0 : index
    %230 = vector.load %arg11[%c0_198, %c0_199, %c0_200] : memref<2x1x64xf32, #tpu.memory_space<vmem>>, vector<1x1x64xf32>
    %231 = vector.shape_cast %230 : vector<1x1x64xf32> to vector<1x64xf32>
    %232 = vector.broadcast %231 : vector<1x64xf32> to vector<5x64xf32>
    %233 = arith.addf %229, %232 : vector<5x64xf32>
    %234 = arith.addf %178, %233 : vector<5x64xf32>
    %c1_201 = arith.constant 1 : index
    %c0_202 = arith.constant 0 : index
    %c0_203 = arith.constant 0 : index
    %c0_204 = arith.constant 0 : index
    %235 = vector.load %arg2[%c1_201, %c0_202, %c0_203, %c0_204] : memref<2x2x1x64xf32, #tpu.memory_space<vmem>>, vector<1x1x1x64xf32>
    %236 = vector.shape_cast %235 : vector<1x1x1x64xf32> to vector<1x64xf32>
    %c1_205 = arith.constant 1 : index
    %c0_206 = arith.constant 0 : index
    %c0_207 = arith.constant 0 : index
    %c0_208 = arith.constant 0 : index
    %237 = vector.load %arg3[%c1_205, %c0_206, %c0_207, %c0_208] : memref<2x2x1x64xf32, #tpu.memory_space<vmem>>, vector<1x1x1x64xf32>
    %238 = vector.shape_cast %237 : vector<1x1x1x64xf32> to vector<1x64xf32>
    %cst_209 = arith.constant dense<0.000000e+00> : vector<5xf32>
    %239 = vector.multi_reduction <add>, %234, %cst_209 [1] : vector<5x64xf32> to vector<5xf32>
    %240 = vector.shape_cast %239 : vector<5xf32> to vector<5x1xf32>
    %cst_210 = arith.constant 6.400000e+01 : f32
    %241 = vector.broadcast %cst_210 : f32 to vector<5x1xf32>
    %242 = arith.divf %240, %241 : vector<5x1xf32>
    %243 = vector.broadcast %242 : vector<5x1xf32> to vector<5x64xf32>
    %244 = arith.subf %234, %243 : vector<5x64xf32>
    %245 = arith.mulf %244, %244 : vector<5x64xf32>
    %cst_211 = arith.constant dense<0.000000e+00> : vector<5xf32>
    %246 = vector.multi_reduction <add>, %245, %cst_211 [1] : vector<5x64xf32> to vector<5xf32>
    %247 = vector.shape_cast %246 : vector<5xf32> to vector<5x1xf32>
    %cst_212 = arith.constant 6.400000e+01 : f32
    %248 = vector.broadcast %cst_212 : f32 to vector<5x1xf32>
    %249 = arith.divf %247, %248 : vector<5x1xf32>
    %250 = vector.broadcast %242 : vector<5x1xf32> to vector<5x64xf32>
    %251 = arith.subf %234, %250 : vector<5x64xf32>
    %cst_213 = arith.constant 9.99999996E-13 : f32
    %252 = vector.broadcast %cst_213 : f32 to vector<5x1xf32>
    %253 = arith.addf %249, %252 : vector<5x1xf32>
    %254 = math.rsqrt %253 : vector<5x1xf32>
    %255 = vector.broadcast %254 : vector<5x1xf32> to vector<5x64xf32>
    %256 = arith.mulf %251, %255 : vector<5x64xf32>
    %257 = vector.broadcast %236 : vector<1x64xf32> to vector<5x64xf32>
    %258 = arith.mulf %256, %257 : vector<5x64xf32>
    %259 = vector.broadcast %238 : vector<1x64xf32> to vector<5x64xf32>
    %260 = arith.addf %258, %259 : vector<5x64xf32>
    %261 = arith.truncf %260 : vector<5x64xf32> to vector<5x64xbf16>
    %c1_214 = arith.constant 1 : index
    %c0_215 = arith.constant 0 : index
    %c0_216 = arith.constant 0 : index
    %c0_217 = arith.constant 0 : index
    %c0_218 = arith.constant 0 : index
    %262 = vector.load %arg4[%c1_214, %c0_215, %c0_216, %c0_217, %c0_218] : memref<2x3x4x64x16xbf16, #tpu.memory_space<vmem>>, vector<1x1x1x64x16xbf16>
    %263 = vector.shape_cast %262 : vector<1x1x1x64x16xbf16> to vector<64x16xbf16>
    %cst_219 = arith.constant dense<0.000000e+00> : vector<5x16xf32>
    %264 = tpu.matmul %261, %263, %cst_219 {dimension_numbers = #tpu.dot_dimension_numbers<[1], [0], [0], [1], [0, 0, 1, 1], [], []>} : vector<5x64xbf16>, vector<64x16xbf16>, vector<5x16xf32> -> vector<5x16xf32>
    %c1_220 = arith.constant 1 : index
    %c0_221 = arith.constant 0 : index
    %c0_222 = arith.constant 0 : index
    %c0_223 = arith.constant 0 : index
    %c0_224 = arith.constant 0 : index
    %265 = vector.load %arg5[%c1_220, %c0_221, %c0_222, %c0_223, %c0_224] : memref<2x3x4x1x16xf32, #tpu.memory_space<vmem>>, vector<1x1x1x1x16xf32>
    %266 = vector.shape_cast %265 : vector<1x1x1x1x16xf32> to vector<1x16xf32>
    %267 = vector.broadcast %266 : vector<1x16xf32> to vector<5x16xf32>
    %268 = arith.addf %264, %267 : vector<5x16xf32>
    %c1_225 = arith.constant 1 : index
    %c1_226 = arith.constant 1 : index
    %c0_227 = arith.constant 0 : index
    %c0_228 = arith.constant 0 : index
    %c0_229 = arith.constant 0 : index
    %269 = vector.load %arg4[%c1_225, %c1_226, %c0_227, %c0_228, %c0_229] : memref<2x3x4x64x16xbf16, #tpu.memory_space<vmem>>, vector<1x1x1x64x16xbf16>
    %270 = vector.shape_cast %269 : vector<1x1x1x64x16xbf16> to vector<64x16xbf16>
    %cst_230 = arith.constant dense<0.000000e+00> : vector<5x16xf32>
    %271 = tpu.matmul %261, %270, %cst_230 {dimension_numbers = #tpu.dot_dimension_numbers<[1], [0], [0], [1], [0, 0, 1, 1], [], []>} : vector<5x64xbf16>, vector<64x16xbf16>, vector<5x16xf32> -> vector<5x16xf32>
    %c1_231 = arith.constant 1 : index
    %c1_232 = arith.constant 1 : index
    %c0_233 = arith.constant 0 : index
    %c0_234 = arith.constant 0 : index
    %c0_235 = arith.constant 0 : index
    %272 = vector.load %arg5[%c1_231, %c1_232, %c0_233, %c0_234, %c0_235] : memref<2x3x4x1x16xf32, #tpu.memory_space<vmem>>, vector<1x1x1x1x16xf32>
    %273 = vector.shape_cast %272 : vector<1x1x1x1x16xf32> to vector<1x16xf32>
    %274 = vector.broadcast %273 : vector<1x16xf32> to vector<5x16xf32>
    %275 = arith.addf %271, %274 : vector<5x16xf32>
    %c1_236 = arith.constant 1 : index
    %c2_237 = arith.constant 2 : index
    %c0_238 = arith.constant 0 : index
    %c0_239 = arith.constant 0 : index
    %c0_240 = arith.constant 0 : index
    %276 = vector.load %arg4[%c1_236, %c2_237, %c0_238, %c0_239, %c0_240] : memref<2x3x4x64x16xbf16, #tpu.memory_space<vmem>>, vector<1x1x1x64x16xbf16>
    %277 = vector.shape_cast %276 : vector<1x1x1x64x16xbf16> to vector<64x16xbf16>
    %cst_241 = arith.constant dense<0.000000e+00> : vector<5x16xf32>
    %278 = tpu.matmul %261, %277, %cst_241 {dimension_numbers = #tpu.dot_dimension_numbers<[1], [0], [0], [1], [0, 0, 1, 1], [], []>} : vector<5x64xbf16>, vector<64x16xbf16>, vector<5x16xf32> -> vector<5x16xf32>
    %c1_242 = arith.constant 1 : index
    %c2_243 = arith.constant 2 : index
    %c0_244 = arith.constant 0 : index
    %c0_245 = arith.constant 0 : index
    %c0_246 = arith.constant 0 : index
    %279 = vector.load %arg5[%c1_242, %c2_243, %c0_244, %c0_245, %c0_246] : memref<2x3x4x1x16xf32, #tpu.memory_space<vmem>>, vector<1x1x1x1x16xf32>
    %280 = vector.shape_cast %279 : vector<1x1x1x1x16xf32> to vector<1x16xf32>
    %281 = vector.broadcast %280 : vector<1x16xf32> to vector<5x16xf32>
    %282 = arith.addf %278, %281 : vector<5x16xf32>
    %cst_247 = arith.constant dense<0.000000e+00> : vector<5x5xf32>
    %283 = tpu.matmul %268, %275, %cst_247 {dimension_numbers = #tpu.dot_dimension_numbers<[1], [1], [0], [0], [0, 0, 1, 0], [], []>} : vector<5x16xf32>, vector<5x16xf32>, vector<5x5xf32> -> vector<5x5xf32>
    %cst_248 = arith.constant 2.500000e-01 : f32
    %284 = vector.broadcast %cst_248 : f32 to vector<5x5xf32>
    %285 = arith.mulf %283, %284 : vector<5x5xf32>
    %cst_249 = arith.constant dense<0xFF800000> : vector<5xf32>
    %286 = vector.multi_reduction <maximumf>, %285, %cst_249 [1] : vector<5x5xf32> to vector<5xf32>
    %287 = vector.shape_cast %286 : vector<5xf32> to vector<5x1xf32>
    %288 = vector.broadcast %287 : vector<5x1xf32> to vector<5x5xf32>
    %289 = arith.subf %285, %288 : vector<5x5xf32>
    %290 = math.exp %289 : vector<5x5xf32>
    %cst_250 = arith.constant dense<0.000000e+00> : vector<5xf32>
    %291 = vector.multi_reduction <add>, %290, %cst_250 [1] : vector<5x5xf32> to vector<5xf32>
    %292 = vector.shape_cast %291 : vector<5xf32> to vector<5x1xf32>
    %293 = tpu.reciprocal %292 {approx = true} : vector<5x1xf32> -> vector<5x1xf32>
    %294 = vector.broadcast %293 : vector<5x1xf32> to vector<5x5xf32>
    %295 = arith.mulf %290, %294 : vector<5x5xf32>
    %cst_251 = arith.constant dense<0.000000e+00> : vector<5x16xf32>
    %296 = tpu.matmul %295, %282, %cst_251 {dimension_numbers = #tpu.dot_dimension_numbers<[1], [0], [0], [1], [0, 0, 1, 1], [], []>} : vector<5x5xf32>, vector<5x16xf32>, vector<5x16xf32> -> vector<5x16xf32>
    %c1_252 = arith.constant 1 : index
    %c0_253 = arith.constant 0 : index
    %c1_254 = arith.constant 1 : index
    %c0_255 = arith.constant 0 : index
    %c0_256 = arith.constant 0 : index
    %297 = vector.load %arg4[%c1_252, %c0_253, %c1_254, %c0_255, %c0_256] : memref<2x3x4x64x16xbf16, #tpu.memory_space<vmem>>, vector<1x1x1x64x16xbf16>
    %298 = vector.shape_cast %297 : vector<1x1x1x64x16xbf16> to vector<64x16xbf16>
    %cst_257 = arith.constant dense<0.000000e+00> : vector<5x16xf32>
    %299 = tpu.matmul %261, %298, %cst_257 {dimension_numbers = #tpu.dot_dimension_numbers<[1], [0], [0], [1], [0, 0, 1, 1], [], []>} : vector<5x64xbf16>, vector<64x16xbf16>, vector<5x16xf32> -> vector<5x16xf32>
    %c1_258 = arith.constant 1 : index
    %c0_259 = arith.constant 0 : index
    %c1_260 = arith.constant 1 : index
    %c0_261 = arith.constant 0 : index
    %c0_262 = arith.constant 0 : index
    %300 = vector.load %arg5[%c1_258, %c0_259, %c1_260, %c0_261, %c0_262] : memref<2x3x4x1x16xf32, #tpu.memory_space<vmem>>, vector<1x1x1x1x16xf32>
    %301 = vector.shape_cast %300 : vector<1x1x1x1x16xf32> to vector<1x16xf32>
    %302 = vector.broadcast %301 : vector<1x16xf32> to vector<5x16xf32>
    %303 = arith.addf %299, %302 : vector<5x16xf32>
    %c1_263 = arith.constant 1 : index
    %c1_264 = arith.constant 1 : index
    %c1_265 = arith.constant 1 : index
    %c0_266 = arith.constant 0 : index
    %c0_267 = arith.constant 0 : index
    %304 = vector.load %arg4[%c1_263, %c1_264, %c1_265, %c0_266, %c0_267] : memref<2x3x4x64x16xbf16, #tpu.memory_space<vmem>>, vector<1x1x1x64x16xbf16>
    %305 = vector.shape_cast %304 : vector<1x1x1x64x16xbf16> to vector<64x16xbf16>
    %cst_268 = arith.constant dense<0.000000e+00> : vector<5x16xf32>
    %306 = tpu.matmul %261, %305, %cst_268 {dimension_numbers = #tpu.dot_dimension_numbers<[1], [0], [0], [1], [0, 0, 1, 1], [], []>} : vector<5x64xbf16>, vector<64x16xbf16>, vector<5x16xf32> -> vector<5x16xf32>
    %c1_269 = arith.constant 1 : index
    %c1_270 = arith.constant 1 : index
    %c1_271 = arith.constant 1 : index
    %c0_272 = arith.constant 0 : index
    %c0_273 = arith.constant 0 : index
    %307 = vector.load %arg5[%c1_269, %c1_270, %c1_271, %c0_272, %c0_273] : memref<2x3x4x1x16xf32, #tpu.memory_space<vmem>>, vector<1x1x1x1x16xf32>
    %308 = vector.shape_cast %307 : vector<1x1x1x1x16xf32> to vector<1x16xf32>
    %309 = vector.broadcast %308 : vector<1x16xf32> to vector<5x16xf32>
    %310 = arith.addf %306, %309 : vector<5x16xf32>
    %c1_274 = arith.constant 1 : index
    %c2_275 = arith.constant 2 : index
    %c1_276 = arith.constant 1 : index
    %c0_277 = arith.constant 0 : index
    %c0_278 = arith.constant 0 : index
    %311 = vector.load %arg4[%c1_274, %c2_275, %c1_276, %c0_277, %c0_278] : memref<2x3x4x64x16xbf16, #tpu.memory_space<vmem>>, vector<1x1x1x64x16xbf16>
    %312 = vector.shape_cast %311 : vector<1x1x1x64x16xbf16> to vector<64x16xbf16>
    %cst_279 = arith.constant dense<0.000000e+00> : vector<5x16xf32>
    %313 = tpu.matmul %261, %312, %cst_279 {dimension_numbers = #tpu.dot_dimension_numbers<[1], [0], [0], [1], [0, 0, 1, 1], [], []>} : vector<5x64xbf16>, vector<64x16xbf16>, vector<5x16xf32> -> vector<5x16xf32>
    %c1_280 = arith.constant 1 : index
    %c2_281 = arith.constant 2 : index
    %c1_282 = arith.constant 1 : index
    %c0_283 = arith.constant 0 : index
    %c0_284 = arith.constant 0 : index
    %314 = vector.load %arg5[%c1_280, %c2_281, %c1_282, %c0_283, %c0_284] : memref<2x3x4x1x16xf32, #tpu.memory_space<vmem>>, vector<1x1x1x1x16xf32>
    %315 = vector.shape_cast %314 : vector<1x1x1x1x16xf32> to vector<1x16xf32>
    %316 = vector.broadcast %315 : vector<1x16xf32> to vector<5x16xf32>
    %317 = arith.addf %313, %316 : vector<5x16xf32>
    %cst_285 = arith.constant dense<0.000000e+00> : vector<5x5xf32>
    %318 = tpu.matmul %303, %310, %cst_285 {dimension_numbers = #tpu.dot_dimension_numbers<[1], [1], [0], [0], [0, 0, 1, 0], [], []>} : vector<5x16xf32>, vector<5x16xf32>, vector<5x5xf32> -> vector<5x5xf32>
    %cst_286 = arith.constant 2.500000e-01 : f32
    %319 = vector.broadcast %cst_286 : f32 to vector<5x5xf32>
    %320 = arith.mulf %318, %319 : vector<5x5xf32>
    %cst_287 = arith.constant dense<0xFF800000> : vector<5xf32>
    %321 = vector.multi_reduction <maximumf>, %320, %cst_287 [1] : vector<5x5xf32> to vector<5xf32>
    %322 = vector.shape_cast %321 : vector<5xf32> to vector<5x1xf32>
    %323 = vector.broadcast %322 : vector<5x1xf32> to vector<5x5xf32>
    %324 = arith.subf %320, %323 : vector<5x5xf32>
    %325 = math.exp %324 : vector<5x5xf32>
    %cst_288 = arith.constant dense<0.000000e+00> : vector<5xf32>
    %326 = vector.multi_reduction <add>, %325, %cst_288 [1] : vector<5x5xf32> to vector<5xf32>
    %327 = vector.shape_cast %326 : vector<5xf32> to vector<5x1xf32>
    %328 = tpu.reciprocal %327 {approx = true} : vector<5x1xf32> -> vector<5x1xf32>
    %329 = vector.broadcast %328 : vector<5x1xf32> to vector<5x5xf32>
    %330 = arith.mulf %325, %329 : vector<5x5xf32>
    %cst_289 = arith.constant dense<0.000000e+00> : vector<5x16xf32>
    %331 = tpu.matmul %330, %317, %cst_289 {dimension_numbers = #tpu.dot_dimension_numbers<[1], [0], [0], [1], [0, 0, 1, 1], [], []>} : vector<5x5xf32>, vector<5x16xf32>, vector<5x16xf32> -> vector<5x16xf32>
    %c1_290 = arith.constant 1 : index
    %c0_291 = arith.constant 0 : index
    %c2_292 = arith.constant 2 : index
    %c0_293 = arith.constant 0 : index
    %c0_294 = arith.constant 0 : index
    %332 = vector.load %arg4[%c1_290, %c0_291, %c2_292, %c0_293, %c0_294] : memref<2x3x4x64x16xbf16, #tpu.memory_space<vmem>>, vector<1x1x1x64x16xbf16>
    %333 = vector.shape_cast %332 : vector<1x1x1x64x16xbf16> to vector<64x16xbf16>
    %cst_295 = arith.constant dense<0.000000e+00> : vector<5x16xf32>
    %334 = tpu.matmul %261, %333, %cst_295 {dimension_numbers = #tpu.dot_dimension_numbers<[1], [0], [0], [1], [0, 0, 1, 1], [], []>} : vector<5x64xbf16>, vector<64x16xbf16>, vector<5x16xf32> -> vector<5x16xf32>
    %c1_296 = arith.constant 1 : index
    %c0_297 = arith.constant 0 : index
    %c2_298 = arith.constant 2 : index
    %c0_299 = arith.constant 0 : index
    %c0_300 = arith.constant 0 : index
    %335 = vector.load %arg5[%c1_296, %c0_297, %c2_298, %c0_299, %c0_300] : memref<2x3x4x1x16xf32, #tpu.memory_space<vmem>>, vector<1x1x1x1x16xf32>
    %336 = vector.shape_cast %335 : vector<1x1x1x1x16xf32> to vector<1x16xf32>
    %337 = vector.broadcast %336 : vector<1x16xf32> to vector<5x16xf32>
    %338 = arith.addf %334, %337 : vector<5x16xf32>
    %c1_301 = arith.constant 1 : index
    %c1_302 = arith.constant 1 : index
    %c2_303 = arith.constant 2 : index
    %c0_304 = arith.constant 0 : index
    %c0_305 = arith.constant 0 : index
    %339 = vector.load %arg4[%c1_301, %c1_302, %c2_303, %c0_304, %c0_305] : memref<2x3x4x64x16xbf16, #tpu.memory_space<vmem>>, vector<1x1x1x64x16xbf16>
    %340 = vector.shape_cast %339 : vector<1x1x1x64x16xbf16> to vector<64x16xbf16>
    %cst_306 = arith.constant dense<0.000000e+00> : vector<5x16xf32>
    %341 = tpu.matmul %261, %340, %cst_306 {dimension_numbers = #tpu.dot_dimension_numbers<[1], [0], [0], [1], [0, 0, 1, 1], [], []>} : vector<5x64xbf16>, vector<64x16xbf16>, vector<5x16xf32> -> vector<5x16xf32>
    %c1_307 = arith.constant 1 : index
    %c1_308 = arith.constant 1 : index
    %c2_309 = arith.constant 2 : index
    %c0_310 = arith.constant 0 : index
    %c0_311 = arith.constant 0 : index
    %342 = vector.load %arg5[%c1_307, %c1_308, %c2_309, %c0_310, %c0_311] : memref<2x3x4x1x16xf32, #tpu.memory_space<vmem>>, vector<1x1x1x1x16xf32>
    %343 = vector.shape_cast %342 : vector<1x1x1x1x16xf32> to vector<1x16xf32>
    %344 = vector.broadcast %343 : vector<1x16xf32> to vector<5x16xf32>
    %345 = arith.addf %341, %344 : vector<5x16xf32>
    %c1_312 = arith.constant 1 : index
    %c2_313 = arith.constant 2 : index
    %c2_314 = arith.constant 2 : index
    %c0_315 = arith.constant 0 : index
    %c0_316 = arith.constant 0 : index
    %346 = vector.load %arg4[%c1_312, %c2_313, %c2_314, %c0_315, %c0_316] : memref<2x3x4x64x16xbf16, #tpu.memory_space<vmem>>, vector<1x1x1x64x16xbf16>
    %347 = vector.shape_cast %346 : vector<1x1x1x64x16xbf16> to vector<64x16xbf16>
    %cst_317 = arith.constant dense<0.000000e+00> : vector<5x16xf32>
    %348 = tpu.matmul %261, %347, %cst_317 {dimension_numbers = #tpu.dot_dimension_numbers<[1], [0], [0], [1], [0, 0, 1, 1], [], []>} : vector<5x64xbf16>, vector<64x16xbf16>, vector<5x16xf32> -> vector<5x16xf32>
    %c1_318 = arith.constant 1 : index
    %c2_319 = arith.constant 2 : index
    %c2_320 = arith.constant 2 : index
    %c0_321 = arith.constant 0 : index
    %c0_322 = arith.constant 0 : index
    %349 = vector.load %arg5[%c1_318, %c2_319, %c2_320, %c0_321, %c0_322] : memref<2x3x4x1x16xf32, #tpu.memory_space<vmem>>, vector<1x1x1x1x16xf32>
    %350 = vector.shape_cast %349 : vector<1x1x1x1x16xf32> to vector<1x16xf32>
    %351 = vector.broadcast %350 : vector<1x16xf32> to vector<5x16xf32>
    %352 = arith.addf %348, %351 : vector<5x16xf32>
    %cst_323 = arith.constant dense<0.000000e+00> : vector<5x5xf32>
    %353 = tpu.matmul %338, %345, %cst_323 {dimension_numbers = #tpu.dot_dimension_numbers<[1], [1], [0], [0], [0, 0, 1, 0], [], []>} : vector<5x16xf32>, vector<5x16xf32>, vector<5x5xf32> -> vector<5x5xf32>
    %cst_324 = arith.constant 2.500000e-01 : f32
    %354 = vector.broadcast %cst_324 : f32 to vector<5x5xf32>
    %355 = arith.mulf %353, %354 : vector<5x5xf32>
    %cst_325 = arith.constant dense<0xFF800000> : vector<5xf32>
    %356 = vector.multi_reduction <maximumf>, %355, %cst_325 [1] : vector<5x5xf32> to vector<5xf32>
    %357 = vector.shape_cast %356 : vector<5xf32> to vector<5x1xf32>
    %358 = vector.broadcast %357 : vector<5x1xf32> to vector<5x5xf32>
    %359 = arith.subf %355, %358 : vector<5x5xf32>
    %360 = math.exp %359 : vector<5x5xf32>
    %cst_326 = arith.constant dense<0.000000e+00> : vector<5xf32>
    %361 = vector.multi_reduction <add>, %360, %cst_326 [1] : vector<5x5xf32> to vector<5xf32>
    %362 = vector.shape_cast %361 : vector<5xf32> to vector<5x1xf32>
    %363 = tpu.reciprocal %362 {approx = true} : vector<5x1xf32> -> vector<5x1xf32>
    %364 = vector.broadcast %363 : vector<5x1xf32> to vector<5x5xf32>
    %365 = arith.mulf %360, %364 : vector<5x5xf32>
    %cst_327 = arith.constant dense<0.000000e+00> : vector<5x16xf32>
    %366 = tpu.matmul %365, %352, %cst_327 {dimension_numbers = #tpu.dot_dimension_numbers<[1], [0], [0], [1], [0, 0, 1, 1], [], []>} : vector<5x5xf32>, vector<5x16xf32>, vector<5x16xf32> -> vector<5x16xf32>
    %c1_328 = arith.constant 1 : index
    %c0_329 = arith.constant 0 : index
    %c3_330 = arith.constant 3 : index
    %c0_331 = arith.constant 0 : index
    %c0_332 = arith.constant 0 : index
    %367 = vector.load %arg4[%c1_328, %c0_329, %c3_330, %c0_331, %c0_332] : memref<2x3x4x64x16xbf16, #tpu.memory_space<vmem>>, vector<1x1x1x64x16xbf16>
    %368 = vector.shape_cast %367 : vector<1x1x1x64x16xbf16> to vector<64x16xbf16>
    %cst_333 = arith.constant dense<0.000000e+00> : vector<5x16xf32>
    %369 = tpu.matmul %261, %368, %cst_333 {dimension_numbers = #tpu.dot_dimension_numbers<[1], [0], [0], [1], [0, 0, 1, 1], [], []>} : vector<5x64xbf16>, vector<64x16xbf16>, vector<5x16xf32> -> vector<5x16xf32>
    %c1_334 = arith.constant 1 : index
    %c0_335 = arith.constant 0 : index
    %c3_336 = arith.constant 3 : index
    %c0_337 = arith.constant 0 : index
    %c0_338 = arith.constant 0 : index
    %370 = vector.load %arg5[%c1_334, %c0_335, %c3_336, %c0_337, %c0_338] : memref<2x3x4x1x16xf32, #tpu.memory_space<vmem>>, vector<1x1x1x1x16xf32>
    %371 = vector.shape_cast %370 : vector<1x1x1x1x16xf32> to vector<1x16xf32>
    %372 = vector.broadcast %371 : vector<1x16xf32> to vector<5x16xf32>
    %373 = arith.addf %369, %372 : vector<5x16xf32>
    %c1_339 = arith.constant 1 : index
    %c1_340 = arith.constant 1 : index
    %c3_341 = arith.constant 3 : index
    %c0_342 = arith.constant 0 : index
    %c0_343 = arith.constant 0 : index
    %374 = vector.load %arg4[%c1_339, %c1_340, %c3_341, %c0_342, %c0_343] : memref<2x3x4x64x16xbf16, #tpu.memory_space<vmem>>, vector<1x1x1x64x16xbf16>
    %375 = vector.shape_cast %374 : vector<1x1x1x64x16xbf16> to vector<64x16xbf16>
    %cst_344 = arith.constant dense<0.000000e+00> : vector<5x16xf32>
    %376 = tpu.matmul %261, %375, %cst_344 {dimension_numbers = #tpu.dot_dimension_numbers<[1], [0], [0], [1], [0, 0, 1, 1], [], []>} : vector<5x64xbf16>, vector<64x16xbf16>, vector<5x16xf32> -> vector<5x16xf32>
    %c1_345 = arith.constant 1 : index
    %c1_346 = arith.constant 1 : index
    %c3_347 = arith.constant 3 : index
    %c0_348 = arith.constant 0 : index
    %c0_349 = arith.constant 0 : index
    %377 = vector.load %arg5[%c1_345, %c1_346, %c3_347, %c0_348, %c0_349] : memref<2x3x4x1x16xf32, #tpu.memory_space<vmem>>, vector<1x1x1x1x16xf32>
    %378 = vector.shape_cast %377 : vector<1x1x1x1x16xf32> to vector<1x16xf32>
    %379 = vector.broadcast %378 : vector<1x16xf32> to vector<5x16xf32>
    %380 = arith.addf %376, %379 : vector<5x16xf32>
    %c1_350 = arith.constant 1 : index
    %c2_351 = arith.constant 2 : index
    %c3_352 = arith.constant 3 : index
    %c0_353 = arith.constant 0 : index
    %c0_354 = arith.constant 0 : index
    %381 = vector.load %arg4[%c1_350, %c2_351, %c3_352, %c0_353, %c0_354] : memref<2x3x4x64x16xbf16, #tpu.memory_space<vmem>>, vector<1x1x1x64x16xbf16>
    %382 = vector.shape_cast %381 : vector<1x1x1x64x16xbf16> to vector<64x16xbf16>
    %cst_355 = arith.constant dense<0.000000e+00> : vector<5x16xf32>
    %383 = tpu.matmul %261, %382, %cst_355 {dimension_numbers = #tpu.dot_dimension_numbers<[1], [0], [0], [1], [0, 0, 1, 1], [], []>} : vector<5x64xbf16>, vector<64x16xbf16>, vector<5x16xf32> -> vector<5x16xf32>
    %c1_356 = arith.constant 1 : index
    %c2_357 = arith.constant 2 : index
    %c3_358 = arith.constant 3 : index
    %c0_359 = arith.constant 0 : index
    %c0_360 = arith.constant 0 : index
    %384 = vector.load %arg5[%c1_356, %c2_357, %c3_358, %c0_359, %c0_360] : memref<2x3x4x1x16xf32, #tpu.memory_space<vmem>>, vector<1x1x1x1x16xf32>
    %385 = vector.shape_cast %384 : vector<1x1x1x1x16xf32> to vector<1x16xf32>
    %386 = vector.broadcast %385 : vector<1x16xf32> to vector<5x16xf32>
    %387 = arith.addf %383, %386 : vector<5x16xf32>
    %cst_361 = arith.constant dense<0.000000e+00> : vector<5x5xf32>
    %388 = tpu.matmul %373, %380, %cst_361 {dimension_numbers = #tpu.dot_dimension_numbers<[1], [1], [0], [0], [0, 0, 1, 0], [], []>} : vector<5x16xf32>, vector<5x16xf32>, vector<5x5xf32> -> vector<5x5xf32>
    %cst_362 = arith.constant 2.500000e-01 : f32
    %389 = vector.broadcast %cst_362 : f32 to vector<5x5xf32>
    %390 = arith.mulf %388, %389 : vector<5x5xf32>
    %cst_363 = arith.constant dense<0xFF800000> : vector<5xf32>
    %391 = vector.multi_reduction <maximumf>, %390, %cst_363 [1] : vector<5x5xf32> to vector<5xf32>
    %392 = vector.shape_cast %391 : vector<5xf32> to vector<5x1xf32>
    %393 = vector.broadcast %392 : vector<5x1xf32> to vector<5x5xf32>
    %394 = arith.subf %390, %393 : vector<5x5xf32>
    %395 = math.exp %394 : vector<5x5xf32>
    %cst_364 = arith.constant dense<0.000000e+00> : vector<5xf32>
    %396 = vector.multi_reduction <add>, %395, %cst_364 [1] : vector<5x5xf32> to vector<5xf32>
    %397 = vector.shape_cast %396 : vector<5xf32> to vector<5x1xf32>
    %398 = tpu.reciprocal %397 {approx = true} : vector<5x1xf32> -> vector<5x1xf32>
    %399 = vector.broadcast %398 : vector<5x1xf32> to vector<5x5xf32>
    %400 = arith.mulf %395, %399 : vector<5x5xf32>
    %cst_365 = arith.constant dense<0.000000e+00> : vector<5x16xf32>
    %401 = tpu.matmul %400, %387, %cst_365 {dimension_numbers = #tpu.dot_dimension_numbers<[1], [0], [0], [1], [0, 0, 1, 1], [], []>} : vector<5x5xf32>, vector<5x16xf32>, vector<5x16xf32> -> vector<5x16xf32>
    %402 = tpu.concatenate %296, %331, %366, %401 in 1 : vector<5x16xf32>, vector<5x16xf32>, vector<5x16xf32>, vector<5x16xf32> -> vector<5x64xf32>
    %403 = arith.truncf %402 : vector<5x64xf32> to vector<5x64xbf16>
    %c1_366 = arith.constant 1 : index
    %c0_367 = arith.constant 0 : index
    %c0_368 = arith.constant 0 : index
    %404 = vector.load %arg6[%c1_366, %c0_367, %c0_368] : memref<2x64x64xbf16, #tpu.memory_space<vmem>>, vector<1x64x64xbf16>
    %405 = vector.shape_cast %404 : vector<1x64x64xbf16> to vector<64x64xbf16>
    %cst_369 = arith.constant dense<0.000000e+00> : vector<5x64xf32>
    %406 = tpu.matmul %403, %405, %cst_369 {dimension_numbers = #tpu.dot_dimension_numbers<[1], [0], [0], [1], [0, 0, 1, 1], [], []>} : vector<5x64xbf16>, vector<64x64xbf16>, vector<5x64xf32> -> vector<5x64xf32>
    %c1_370 = arith.constant 1 : index
    %c0_371 = arith.constant 0 : index
    %c0_372 = arith.constant 0 : index
    %407 = vector.load %arg7[%c1_370, %c0_371, %c0_372] : memref<2x1x64xf32, #tpu.memory_space<vmem>>, vector<1x1x64xf32>
    %408 = vector.shape_cast %407 : vector<1x1x64xf32> to vector<1x64xf32>
    %409 = vector.broadcast %408 : vector<1x64xf32> to vector<5x64xf32>
    %410 = arith.addf %406, %409 : vector<5x64xf32>
    %411 = arith.addf %234, %410 : vector<5x64xf32>
    %c1_373 = arith.constant 1 : index
    %c1_374 = arith.constant 1 : index
    %c0_375 = arith.constant 0 : index
    %c0_376 = arith.constant 0 : index
    %412 = vector.load %arg2[%c1_373, %c1_374, %c0_375, %c0_376] : memref<2x2x1x64xf32, #tpu.memory_space<vmem>>, vector<1x1x1x64xf32>
    %413 = vector.shape_cast %412 : vector<1x1x1x64xf32> to vector<1x64xf32>
    %c1_377 = arith.constant 1 : index
    %c1_378 = arith.constant 1 : index
    %c0_379 = arith.constant 0 : index
    %c0_380 = arith.constant 0 : index
    %414 = vector.load %arg3[%c1_377, %c1_378, %c0_379, %c0_380] : memref<2x2x1x64xf32, #tpu.memory_space<vmem>>, vector<1x1x1x64xf32>
    %415 = vector.shape_cast %414 : vector<1x1x1x64xf32> to vector<1x64xf32>
    %cst_381 = arith.constant dense<0.000000e+00> : vector<5xf32>
    %416 = vector.multi_reduction <add>, %411, %cst_381 [1] : vector<5x64xf32> to vector<5xf32>
    %417 = vector.shape_cast %416 : vector<5xf32> to vector<5x1xf32>
    %cst_382 = arith.constant 6.400000e+01 : f32
    %418 = vector.broadcast %cst_382 : f32 to vector<5x1xf32>
    %419 = arith.divf %417, %418 : vector<5x1xf32>
    %420 = vector.broadcast %419 : vector<5x1xf32> to vector<5x64xf32>
    %421 = arith.subf %411, %420 : vector<5x64xf32>
    %422 = arith.mulf %421, %421 : vector<5x64xf32>
    %cst_383 = arith.constant dense<0.000000e+00> : vector<5xf32>
    %423 = vector.multi_reduction <add>, %422, %cst_383 [1] : vector<5x64xf32> to vector<5xf32>
    %424 = vector.shape_cast %423 : vector<5xf32> to vector<5x1xf32>
    %cst_384 = arith.constant 6.400000e+01 : f32
    %425 = vector.broadcast %cst_384 : f32 to vector<5x1xf32>
    %426 = arith.divf %424, %425 : vector<5x1xf32>
    %427 = vector.broadcast %419 : vector<5x1xf32> to vector<5x64xf32>
    %428 = arith.subf %411, %427 : vector<5x64xf32>
    %cst_385 = arith.constant 9.99999996E-13 : f32
    %429 = vector.broadcast %cst_385 : f32 to vector<5x1xf32>
    %430 = arith.addf %426, %429 : vector<5x1xf32>
    %431 = math.rsqrt %430 : vector<5x1xf32>
    %432 = vector.broadcast %431 : vector<5x1xf32> to vector<5x64xf32>
    %433 = arith.mulf %428, %432 : vector<5x64xf32>
    %434 = vector.broadcast %413 : vector<1x64xf32> to vector<5x64xf32>
    %435 = arith.mulf %433, %434 : vector<5x64xf32>
    %436 = vector.broadcast %415 : vector<1x64xf32> to vector<5x64xf32>
    %437 = arith.addf %435, %436 : vector<5x64xf32>
    %438 = arith.truncf %437 : vector<5x64xf32> to vector<5x64xbf16>
    %c1_386 = arith.constant 1 : index
    %c0_387 = arith.constant 0 : index
    %c0_388 = arith.constant 0 : index
    %439 = vector.load %arg8[%c1_386, %c0_387, %c0_388] : memref<2x64x128xbf16, #tpu.memory_space<vmem>>, vector<1x64x128xbf16>
    %440 = vector.shape_cast %439 : vector<1x64x128xbf16> to vector<64x128xbf16>
    %cst_389 = arith.constant dense<0.000000e+00> : vector<5x128xf32>
    %441 = tpu.matmul %438, %440, %cst_389 {dimension_numbers = #tpu.dot_dimension_numbers<[1], [0], [0], [1], [0, 0, 1, 1], [], []>} : vector<5x64xbf16>, vector<64x128xbf16>, vector<5x128xf32> -> vector<5x128xf32>
    %c1_390 = arith.constant 1 : index
    %c0_391 = arith.constant 0 : index
    %c0_392 = arith.constant 0 : index
    %442 = vector.load %arg9[%c1_390, %c0_391, %c0_392] : memref<2x1x128xf32, #tpu.memory_space<vmem>>, vector<1x1x128xf32>
    %443 = vector.shape_cast %442 : vector<1x1x128xf32> to vector<1x128xf32>
    %444 = vector.broadcast %443 : vector<1x128xf32> to vector<5x128xf32>
    %445 = arith.addf %441, %444 : vector<5x128xf32>
    %446 = arith.mulf %445, %445 : vector<5x128xf32>
    %447 = arith.mulf %445, %446 : vector<5x128xf32>
    %cst_393 = arith.constant 4.471500e-02 : f32
    %448 = vector.broadcast %cst_393 : f32 to vector<5x128xf32>
    %449 = arith.mulf %448, %447 : vector<5x128xf32>
    %450 = arith.addf %445, %449 : vector<5x128xf32>
    %cst_394 = arith.constant 0.797884583 : f32
    %451 = vector.broadcast %cst_394 : f32 to vector<5x128xf32>
    %452 = arith.mulf %451, %450 : vector<5x128xf32>
    %453 = math.tanh %452 : vector<5x128xf32>
    %cst_395 = arith.constant 1.000000e+00 : f32
    %454 = vector.broadcast %cst_395 : f32 to vector<5x128xf32>
    %455 = arith.addf %454, %453 : vector<5x128xf32>
    %cst_396 = arith.constant 5.000000e-01 : f32
    %456 = vector.broadcast %cst_396 : f32 to vector<5x128xf32>
    %457 = arith.mulf %456, %455 : vector<5x128xf32>
    %458 = arith.mulf %445, %457 : vector<5x128xf32>
    %459 = arith.truncf %458 : vector<5x128xf32> to vector<5x128xbf16>
    %c1_397 = arith.constant 1 : index
    %c0_398 = arith.constant 0 : index
    %c0_399 = arith.constant 0 : index
    %460 = vector.load %arg10[%c1_397, %c0_398, %c0_399] : memref<2x128x64xbf16, #tpu.memory_space<vmem>>, vector<1x128x64xbf16>
    %461 = vector.shape_cast %460 : vector<1x128x64xbf16> to vector<128x64xbf16>
    %cst_400 = arith.constant dense<0.000000e+00> : vector<5x64xf32>
    %462 = tpu.matmul %459, %461, %cst_400 {dimension_numbers = #tpu.dot_dimension_numbers<[1], [0], [0], [1], [0, 0, 1, 1], [], []>} : vector<5x128xbf16>, vector<128x64xbf16>, vector<5x64xf32> -> vector<5x64xf32>
    %c1_401 = arith.constant 1 : index
    %c0_402 = arith.constant 0 : index
    %c0_403 = arith.constant 0 : index
    %463 = vector.load %arg11[%c1_401, %c0_402, %c0_403] : memref<2x1x64xf32, #tpu.memory_space<vmem>>, vector<1x1x64xf32>
    %464 = vector.shape_cast %463 : vector<1x1x64xf32> to vector<1x64xf32>
    %465 = vector.broadcast %464 : vector<1x64xf32> to vector<5x64xf32>
    %466 = arith.addf %462, %465 : vector<5x64xf32>
    %467 = arith.addf %411, %466 : vector<5x64xf32>
    %c0_404 = arith.constant 0 : index
    %c0_405 = arith.constant 0 : index
    %468 = vector.load %arg12[%c0_404, %c0_405] : memref<1x64xf32, #tpu.memory_space<vmem>>, vector<1x64xf32>
    %c0_406 = arith.constant 0 : index
    %c0_407 = arith.constant 0 : index
    %469 = vector.load %arg13[%c0_406, %c0_407] : memref<1x64xf32, #tpu.memory_space<vmem>>, vector<1x64xf32>
    %cst_408 = arith.constant dense<0.000000e+00> : vector<5xf32>
    %470 = vector.multi_reduction <add>, %467, %cst_408 [1] : vector<5x64xf32> to vector<5xf32>
    %471 = vector.shape_cast %470 : vector<5xf32> to vector<5x1xf32>
    %cst_409 = arith.constant 6.400000e+01 : f32
    %472 = vector.broadcast %cst_409 : f32 to vector<5x1xf32>
    %473 = arith.divf %471, %472 : vector<5x1xf32>
    %474 = vector.broadcast %473 : vector<5x1xf32> to vector<5x64xf32>
    %475 = arith.subf %467, %474 : vector<5x64xf32>
    %476 = arith.mulf %475, %475 : vector<5x64xf32>
    %cst_410 = arith.constant dense<0.000000e+00> : vector<5xf32>
    %477 = vector.multi_reduction <add>, %476, %cst_410 [1] : vector<5x64xf32> to vector<5xf32>
    %478 = vector.shape_cast %477 : vector<5xf32> to vector<5x1xf32>
    %cst_411 = arith.constant 6.400000e+01 : f32
    %479 = vector.broadcast %cst_411 : f32 to vector<5x1xf32>
    %480 = arith.divf %478, %479 : vector<5x1xf32>
    %481 = vector.broadcast %473 : vector<5x1xf32> to vector<5x64xf32>
    %482 = arith.subf %467, %481 : vector<5x64xf32>
    %cst_412 = arith.constant 9.99999996E-13 : f32
    %483 = vector.broadcast %cst_412 : f32 to vector<5x1xf32>
    %484 = arith.addf %480, %483 : vector<5x1xf32>
    %485 = math.rsqrt %484 : vector<5x1xf32>
    %486 = vector.broadcast %485 : vector<5x1xf32> to vector<5x64xf32>
    %487 = arith.mulf %482, %486 : vector<5x64xf32>
    %488 = vector.broadcast %468 : vector<1x64xf32> to vector<5x64xf32>
    %489 = arith.mulf %487, %488 : vector<5x64xf32>
    %490 = vector.broadcast %469 : vector<1x64xf32> to vector<5x64xf32>
    %491 = arith.addf %489, %490 : vector<5x64xf32>
    %c0_413 = arith.constant 0 : index
    %c0_414 = arith.constant 0 : index
    %492 = vector.load %arg15[%c0_413, %c0_414] : memref<1x128xf32, #tpu.memory_space<vmem>>, vector<1x128xf32>
    %493 = vector.extract_strided_slice %491 {offsets = [0, 0], sizes = [1, 64], strides = [1, 1]} : vector<5x64xf32> to vector<1x64xf32>
    %c0_415 = arith.constant 0 : index
    %c0_416 = arith.constant 0 : index
    %c0_417 = arith.constant 0 : index
    %494 = vector.load %arg14[%c0_415, %c0_416, %c0_417] : memref<5x64x128xf32, #tpu.memory_space<vmem>>, vector<1x64x128xf32>
    %495 = vector.shape_cast %494 : vector<1x64x128xf32> to vector<64x128xf32>
    %cst_418 = arith.constant dense<0.000000e+00> : vector<1x128xf32>
    %496 = tpu.matmul %493, %495, %cst_418 {dimension_numbers = #tpu.dot_dimension_numbers<[1], [0], [0], [1], [0, 0, 1, 1], [], []>} : vector<1x64xf32>, vector<64x128xf32>, vector<1x128xf32> -> vector<1x128xf32>
    %497 = arith.addf %492, %496 : vector<1x128xf32>
    %498 = vector.extract_strided_slice %491 {offsets = [1, 0], sizes = [1, 64], strides = [1, 1]} : vector<5x64xf32> to vector<1x64xf32>
    %c1_419 = arith.constant 1 : index
    %c0_420 = arith.constant 0 : index
    %c0_421 = arith.constant 0 : index
    %499 = vector.load %arg14[%c1_419, %c0_420, %c0_421] : memref<5x64x128xf32, #tpu.memory_space<vmem>>, vector<1x64x128xf32>
    %500 = vector.shape_cast %499 : vector<1x64x128xf32> to vector<64x128xf32>
    %cst_422 = arith.constant dense<0.000000e+00> : vector<1x128xf32>
    %501 = tpu.matmul %498, %500, %cst_422 {dimension_numbers = #tpu.dot_dimension_numbers<[1], [0], [0], [1], [0, 0, 1, 1], [], []>} : vector<1x64xf32>, vector<64x128xf32>, vector<1x128xf32> -> vector<1x128xf32>
    %502 = arith.addf %497, %501 : vector<1x128xf32>
    %503 = vector.extract_strided_slice %491 {offsets = [2, 0], sizes = [1, 64], strides = [1, 1]} : vector<5x64xf32> to vector<1x64xf32>
    %c2_423 = arith.constant 2 : index
    %c0_424 = arith.constant 0 : index
    %c0_425 = arith.constant 0 : index
    %504 = vector.load %arg14[%c2_423, %c0_424, %c0_425] : memref<5x64x128xf32, #tpu.memory_space<vmem>>, vector<1x64x128xf32>
    %505 = vector.shape_cast %504 : vector<1x64x128xf32> to vector<64x128xf32>
    %cst_426 = arith.constant dense<0.000000e+00> : vector<1x128xf32>
    %506 = tpu.matmul %503, %505, %cst_426 {dimension_numbers = #tpu.dot_dimension_numbers<[1], [0], [0], [1], [0, 0, 1, 1], [], []>} : vector<1x64xf32>, vector<64x128xf32>, vector<1x128xf32> -> vector<1x128xf32>
    %507 = arith.addf %502, %506 : vector<1x128xf32>
    %508 = vector.extract_strided_slice %491 {offsets = [3, 0], sizes = [1, 64], strides = [1, 1]} : vector<5x64xf32> to vector<1x64xf32>
    %c3_427 = arith.constant 3 : index
    %c0_428 = arith.constant 0 : index
    %c0_429 = arith.constant 0 : index
    %509 = vector.load %arg14[%c3_427, %c0_428, %c0_429] : memref<5x64x128xf32, #tpu.memory_space<vmem>>, vector<1x64x128xf32>
    %510 = vector.shape_cast %509 : vector<1x64x128xf32> to vector<64x128xf32>
    %cst_430 = arith.constant dense<0.000000e+00> : vector<1x128xf32>
    %511 = tpu.matmul %508, %510, %cst_430 {dimension_numbers = #tpu.dot_dimension_numbers<[1], [0], [0], [1], [0, 0, 1, 1], [], []>} : vector<1x64xf32>, vector<64x128xf32>, vector<1x128xf32> -> vector<1x128xf32>
    %512 = arith.addf %507, %511 : vector<1x128xf32>
    %513 = vector.extract_strided_slice %491 {offsets = [4, 0], sizes = [1, 64], strides = [1, 1]} : vector<5x64xf32> to vector<1x64xf32>
    %c4 = arith.constant 4 : index
    %c0_431 = arith.constant 0 : index
    %c0_432 = arith.constant 0 : index
    %514 = vector.load %arg14[%c4, %c0_431, %c0_432] : memref<5x64x128xf32, #tpu.memory_space<vmem>>, vector<1x64x128xf32>
    %515 = vector.shape_cast %514 : vector<1x64x128xf32> to vector<64x128xf32>
    %cst_433 = arith.constant dense<0.000000e+00> : vector<1x128xf32>
    %516 = tpu.matmul %513, %515, %cst_433 {dimension_numbers = #tpu.dot_dimension_numbers<[1], [0], [0], [1], [0, 0, 1, 1], [], []>} : vector<1x64xf32>, vector<64x128xf32>, vector<1x128xf32> -> vector<1x128xf32>
    %517 = arith.addf %512, %516 : vector<1x128xf32>
    %cst_434 = arith.constant dense<0xFF800000> : vector<1xf32>
    %518 = vector.multi_reduction <maximumf>, %517, %cst_434 [1] : vector<1x128xf32> to vector<1xf32>
    %519 = vector.shape_cast %518 : vector<1xf32> to vector<1x1xf32>
    %520 = vector.broadcast %519 : vector<1x1xf32> to vector<1x128xf32>
    %521 = arith.subf %517, %520 : vector<1x128xf32>
    %522 = math.exp %521 : vector<1x128xf32>
    %cst_435 = arith.constant dense<0.000000e+00> : vector<1xf32>
    %523 = vector.multi_reduction <add>, %522, %cst_435 [1] : vector<1x128xf32> to vector<1xf32>
    %524 = vector.shape_cast %523 : vector<1xf32> to vector<1x1xf32>
    %525 = vector.broadcast %524 : vector<1x1xf32> to vector<1x128xf32>
    %526 = arith.divf %522, %525 : vector<1x128xf32>
    %c0_436 = arith.constant 0 : index
    %c0_437 = arith.constant 0 : index
    %c0_438 = arith.constant 0 : index
    %527 = vector.load %arg16[%c0_436, %c0_437, %c0_438] : memref<1x1x128xf32, #tpu.memory_space<vmem>>, vector<1x1x128xf32>
    %528 = vector.shape_cast %527 : vector<1x1x128xf32> to vector<1x128xf32>
    %529 = vector.shape_cast %526 : vector<1x128xf32> to vector<1x1x128xf32>
    tpu.vector_store %arg16[%c0_436, %c0_437, %c0_438], %529 {strides = array<i32>} : memref<1x1x128xf32, #tpu.memory_space<vmem>>, vector<1x1x128xf32>,
    return
  }
  func.func @transform_0(%arg0: i32) -> (i32, i32, i32) {
    %c0_i32 = arith.constant 0 : i32
    %c0_i32_0 = arith.constant 0 : i32
    %c0_i32_1 = arith.constant 0 : i32
    return %arg0, %c0_i32, %c0_i32_0 : i32, i32, i32
  }
  func.func @transform_1(%arg0: i32) -> (i32, i32, i32, i32) {
    %c0_i32 = arith.constant 0 : i32
    %c0_i32_0 = arith.constant 0 : i32
    %c0_i32_1 = arith.constant 0 : i32
    %c0_i32_2 = arith.constant 0 : i32
    %c0_i32_3 = arith.constant 0 : i32
    return %c0_i32, %c0_i32_0, %c0_i32_1, %c0_i32_2 : i32, i32, i32, i32
  }
  func.func @transform_2(%arg0: i32) -> (i32, i32, i32, i32) {
    %c0_i32 = arith.constant 0 : i32
    %c0_i32_0 = arith.constant 0 : i32
    %c0_i32_1 = arith.constant 0 : i32
    %c0_i32_2 = arith.constant 0 : i32
    %c0_i32_3 = arith.constant 0 : i32
    return %c0_i32, %c0_i32_0, %c0_i32_1, %c0_i32_2 : i32, i32, i32, i32
  }
  func.func @transform_3(%arg0: i32) -> (i32, i32, i32, i32, i32) {
    %c0_i32 = arith.constant 0 : i32
    %c0_i32_0 = arith.constant 0 : i32
    %c0_i32_1 = arith.constant 0 : i32
    %c0_i32_2 = arith.constant 0 : i32
    %c0_i32_3 = arith.constant 0 : i32
    %c0_i32_4 = arith.constant 0 : i32
    return %c0_i32, %c0_i32_0, %c0_i32_1, %c0_i32_2, %c0_i32_3 : i32, i32, i32, i32, i32
  }
  func.func @transform_4(%arg0: i32) -> (i32, i32, i32, i32, i32) {
    %c0_i32 = arith.constant 0 : i32
    %c0_i32_0 = arith.constant 0 : i32
    %c0_i32_1 = arith.constant 0 : i32
    %c0_i32_2 = arith.constant 0 : i32
    %c0_i32_3 = arith.constant 0 : i32
    %c0_i32_4 = arith.constant 0 : i32
    return %c0_i32, %c0_i32_0, %c0_i32_1, %c0_i32_2, %c0_i32_3 : i32, i32, i32, i32, i32
  }
  func.func @transform_5(%arg0: i32) -> (i32, i32, i32) {
    %c0_i32 = arith.constant 0 : i32
    %c0_i32_0 = arith.constant 0 : i32
    %c0_i32_1 = arith.constant 0 : i32
    %c0_i32_2 = arith.constant 0 : i32
    return %c0_i32, %c0_i32_0, %c0_i32_1 : i32, i32, i32
  }
  func.func @transform_6(%arg0: i32) -> (i32, i32, i32) {
    %c0_i32 = arith.constant 0 : i32
    %c0_i32_0 = arith.constant 0 : i32
    %c0_i32_1 = arith.constant 0 : i32
    %c0_i32_2 = arith.constant 0 : i32
    return %c0_i32, %c0_i32_0, %c0_i32_1 : i32, i32, i32
  }
  func.func @transform_7(%arg0: i32) -> (i32, i32, i32) {
    %c0_i32 = arith.constant 0 : i32
    %c0_i32_0 = arith.constant 0 : i32
    %c0_i32_1 = arith.constant 0 : i32
    %c0_i32_2 = arith.constant 0 : i32
    return %c0_i32, %c0_i32_0, %c0_i32_1 : i32, i32, i32
  }
  func.func @transform_8(%arg0: i32) -> (i32, i32, i32) {
    %c0_i32 = arith.constant 0 : i32
    %c0_i32_0 = arith.constant 0 : i32
    %c0_i32_1 = arith.constant 0 : i32
    %c0_i32_2 = arith.constant 0 : i32
    return %c0_i32, %c0_i32_0, %c0_i32_1 : i32, i32, i32
  }
  func.func @transform_9(%arg0: i32) -> (i32, i32, i32) {
    %c0_i32 = arith.constant 0 : i32
    %c0_i32_0 = arith.constant 0 : i32
    %c0_i32_1 = arith.constant 0 : i32
    %c0_i32_2 = arith.constant 0 : i32
    return %c0_i32, %c0_i32_0, %c0_i32_1 : i32, i32, i32
  }
  func.func @transform_10(%arg0: i32) -> (i32, i32, i32) {
    %c0_i32 = arith.constant 0 : i32
    %c0_i32_0 = arith.constant 0 : i32
    %c0_i32_1 = arith.constant 0 : i32
    %c0_i32_2 = arith.constant 0 : i32
    return %c0_i32, %c0_i32_0, %c0_i32_1 : i32, i32, i32
  }
  func.func @transform_11(%arg0: i32) -> (i32, i32) {
    %c0_i32 = arith.constant 0 : i32
    %c0_i32_0 = arith.constant 0 : i32
    %c0_i32_1 = arith.constant 0 : i32
    return %c0_i32, %c0_i32_0 : i32, i32
  }
  func.func @transform_12(%arg0: i32) -> (i32, i32) {
    %c0_i32 = arith.constant 0 : i32
    %c0_i32_0 = arith.constant 0 : i32
    %c0_i32_1 = arith.constant 0 : i32
    return %c0_i32, %c0_i32_0 : i32, i32
  }
  func.func @transform_13(%arg0: i32) -> (i32, i32, i32) {
    %c0_i32 = arith.constant 0 : i32
    %c0_i32_0 = arith.constant 0 : i32
    %c0_i32_1 = arith.constant 0 : i32
    %c0_i32_2 = arith.constant 0 : i32
    return %c0_i32, %c0_i32_0, %c0_i32_1 : i32, i32, i32
  }
  func.func @transform_14(%arg0: i32) -> (i32, i32) {
    %c0_i32 = arith.constant 0 : i32
    %c0_i32_0 = arith.constant 0 : i32
    %c0_i32_1 = arith.constant 0 : i32
    return %c0_i32, %c0_i32_0 : i32, i32
  }
  func.func @transform_15(%arg0: i32) -> (i32, i32, i32) {
    %c0_i32 = arith.constant 0 : i32
    %c0_i32_0 = arith.constant 0 : i32
    %c0_i32_1 = arith.constant 0 : i32
    return %arg0, %c0_i32, %c0_i32_0 : i32, i32, i32
  }
}

</mosaic_0001>

<llo_original>
// kernel: vit_baseline_forward.1
$region0: #{vit_baseline_forward.1}
  #allocation0 [shape = 'u32[]', space=smem, size = 0x4, offset = 0x4, fixed_abs, tag = 'smem constant byte address 0x4 - core index']
  #allocation1 [shape = 'u32[72,128]{1,0:T(1,128)}', space=vmem, size = 0x9000, scoped, tag = 'internal scratch']
  %s0 = inlined_call_operand.vmem [shape: f32[2,5,64], index: 0, kind: input, shape index: {}]
  %s1 = inlined_call_operand.vmem [shape: f32[2,2,1,64], index: 1, kind: input, shape index: {}]
  %s2 = inlined_call_operand.vmem [shape: f32[2,2,1,64], index: 2, kind: input, shape index: {}]
  %s3 = inlined_call_operand.vmem [shape: bf16[2,3,4,64,16], index: 3, kind: input, shape index: {}]
  %s4 = inlined_call_operand.vmem [shape: f32[2,3,4,1,16], index: 4, kind: input, shape index: {}]
  %s5 = inlined_call_operand.vmem [shape: bf16[2,64,64], index: 5, kind: input, shape index: {}]
  %s6 = inlined_call_operand.vmem [shape: f32[2,1,64], index: 6, kind: input, shape index: {}]
  %s7 = inlined_call_operand.vmem [shape: bf16[2,64,128], index: 7, kind: input, shape index: {}]
  %s8 = inlined_call_operand.vmem [shape: f32[2,1,128], index: 8, kind: input, shape index: {}]
  %s9 = inlined_call_operand.vmem [shape: bf16[2,128,64], index: 9, kind: input, shape index: {}]
  %s10 = inlined_call_operand.vmem [shape: f32[2,1,64], index: 10, kind: input, shape index: {}]
  %s11 = inlined_call_operand.vmem [shape: f32[1,64], index: 11, kind: input, shape index: {}]
  %s12 = inlined_call_operand.vmem [shape: f32[1,64], index: 12, kind: input, shape index: {}]
  %s13 = inlined_call_operand.vmem [shape: f32[5,64,128], index: 13, kind: input, shape index: {}]
  %s14 = inlined_call_operand.vmem [shape: f32[1,128], index: 14, kind: input, shape index: {}]
  %s15 = inlined_call_operand.hbm [shape: f32[2,1,128], index: 15, kind: output, shape index: {}]
  %s16 = sld [smem:[#allocation0]]
  $region93: #{vit_baseline_forward.1} parent=0
    _
  %s18 = ssub.s32 1, %s16
  %s19 = scalar_select 0, %s18, %s16
  $region1: #{vit_baseline_forward.1} parent=0
    #allocation2 [shape = 'u8[1024]{0}', space=vmem, size = 0x400, scoped, tag = 'output window, operand 0']
    #allocation3 [shape = 's32[2]{0}', space=sflag, size = 0x8, scoped, tag = 'scoped memory for vit_baseline_forward.1']
    %20 = vsyncpa [#allocation3], 0
    %s21 = scalar_lea.sflag [#allocation3], 1
    %22 = vsyncpa %s21, 0
    loop: start=0, step=1, limit=4
    $region2: #{vit_baseline_forward.1} parent=1 // loop_pre_header
      _
    $region3: #{vit_baseline_forward.1} parent=1 // loop_header
      %s24 = sphi 0, %s28
      %p25 = scmp.ge.s32.totalorder %s24, 4
      %s34 = sphi 0, %s36
      %s37 = sphi 0, %s34
      %s38 = sphi 0, %s37
      %s54 = sphi 0, %s38
      %s58 = sphi 0, %s58
      %s60 = sphi 0, %s58
      %s61 = sphi 0, %s60
      %s75 = sphi 0, %s61
      %s79 = sphi 0, %s79
      %s81 = sphi 0, %s79
      %s82 = sphi 0, %s81
      %s96 = sphi 0, %s82
      %s100 = sphi 0, %s100
      %s102 = sphi 0, %s100
      %s103 = sphi 0, %s102
      %s117 = sphi 0, %s103
      %s121 = sphi 0, %s121
      %s123 = sphi 0, %s121
      %s124 = sphi 0, %s123
      %s138 = sphi 0, %s124
      %s142 = sphi 0, %s142
      %s144 = sphi 0, %s142
      %s145 = sphi 0, %s144
      %s159 = sphi 0, %s145
      %s163 = sphi 0, %s163
      %s165 = sphi 0, %s163
      %s166 = sphi 0, %s165
      %s180 = sphi 0, %s166
      %s184 = sphi 0, %s184
      %s186 = sphi 0, %s184
      %s187 = sphi 0, %s186
      %s201 = sphi 0, %s187
      %s205 = sphi 0, %s205
      %s207 = sphi 0, %s205
      %s208 = sphi 0, %s207
      %s222 = sphi 0, %s208
      %s226 = sphi 0, %s226
      %s228 = sphi 0, %s226
      %s229 = sphi 0, %s228
      %s243 = sphi 0, %s229
      %s247 = sphi 0, %s247
      %s249 = sphi 0, %s247
      %s250 = sphi 0, %s249
      %s264 = sphi 0, %s250
      %s268 = sphi 0, %s268
      %s270 = sphi 0, %s268
      %s271 = sphi 0, %s270
      %s285 = sphi 0, %s271
      %s289 = sphi 0, %s289
      %s291 = sphi 0, %s289
      %s292 = sphi 0, %s291
      %s306 = sphi 0, %s292
      %s310 = sphi 0, %s310
      %s312 = sphi 0, %s310
      %s313 = sphi 0, %s312
      %s327 = sphi 0, %s313
      %s331 = sphi 0, %s331
      %s333 = sphi 0, %s331
      %s334 = sphi 0, %s333
      %s348 = sphi 0, %s334
      %s354 = sphi 0, %s356
      %s357 = sphi 0, %s354
      %s358 = sphi 0, %s357
      %s374 = sphi 0, %s358
    $region4: #{vit_baseline_forward.1} parent=1 // loop_header_branch
      %27 = sbr.rel (%p25) target = $region8
    $region5: #{vit_baseline_forward.1} parent=1 // loop_body
      %s29 = ssub.s32 %s24, 1
      %s30 = ssub.s32 %s24, 2
      %s31 = sadd.s32 %s24, 1
      %s32 = ssub.s32 %s24, %s31
      %p33 = scmp.eq.s32.totalorder %s32, 0
      %s35 = sadd.s32 %s34, 1
      %s36 = scalar_select %p33, %s34, %s35
      %p39 = pneg %p33
      %p40 = scmp.eq.s32.totalorder %s24, 1
      %p41 = por %p39, %p40
      %p42 = scmp.ne.s32.totalorder %s34, %s37
      %p43 = scmp.eq.s32.totalorder %s24, 0
      %p44 = por %p42, %p43
      %p45 = scmp.ne.s32.totalorder %s34, %s37
      %p46 = scmp.eq.s32.totalorder %s29, 1
      %p47 = por %p45, %p46
      %p48 = scmp.ne.s32.totalorder %s37, %s38
      %p49 = scmp.eq.s32.totalorder %s29, 0
      %p50 = por %p48, %p49
      %p51 = scmp.ne.s32.totalorder %s37, %s38
      %p52 = scmp.eq.s32.totalorder %s30, 1
      %p53 = por %p51, %p52
      %p55 = scmp.ne.s32.totalorder %s38, %s54
      %p56 = scmp.eq.s32.totalorder %s30, 0
      %p57 = por %p55, %p56
      %s59 = sadd.s32 %s58, 1
      %p62 = scmp.eq.s32.totalorder %s24, 1
      %p63 = scmp.ne.s32.totalorder %s58, %s60
      %p64 = scmp.eq.s32.totalorder %s24, 0
      %p65 = por %p63, %p64
      %p66 = scmp.ne.s32.totalorder %s58, %s60
      %p67 = scmp.eq.s32.totalorder %s29, 1
      %p68 = por %p66, %p67
      %p69 = scmp.ne.s32.totalorder %s60, %s61
      %p70 = scmp.eq.s32.totalorder %s29, 0
      %p71 = por %p69, %p70
      %p72 = scmp.ne.s32.totalorder %s60, %s61
      %p73 = scmp.eq.s32.totalorder %s30, 1
      %p74 = por %p72, %p73
      %p76 = scmp.ne.s32.totalorder %s61, %s75
      %p77 = scmp.eq.s32.totalorder %s30, 0
      %p78 = por %p76, %p77
      %s80 = sadd.s32 %s79, 1
      %p83 = scmp.eq.s32.totalorder %s24, 1
      %p84 = scmp.ne.s32.totalorder %s79, %s81
      %p85 = scmp.eq.s32.totalorder %s24, 0
      %p86 = por %p84, %p85
      %p87 = scmp.ne.s32.totalorder %s79, %s81
      %p88 = scmp.eq.s32.totalorder %s29, 1
      %p89 = por %p87, %p88
      %p90 = scmp.ne.s32.totalorder %s81, %s82
      %p91 = scmp.eq.s32.totalorder %s29, 0
      %p92 = por %p90, %p91
      %p93 = scmp.ne.s32.totalorder %s81, %s82
      %p94 = scmp.eq.s32.totalorder %s30, 1
      %p95 = por %p93, %p94
      %p97 = scmp.ne.s32.totalorder %s82, %s96
      %p98 = scmp.eq.s32.totalorder %s30, 0
      %p99 = por %p97, %p98
      %s101 = sadd.s32 %s100, 1
      %p104 = scmp.eq.s32.totalorder %s24, 1
      %p105 = scmp.ne.s32.totalorder %s100, %s102
      %p106 = scmp.eq.s32.totalorder %s24, 0
      %p107 = por %p105, %p106
      %p108 = scmp.ne.s32.totalorder %s100, %s102
      %p109 = scmp.eq.s32.totalorder %s29, 1
      %p110 = por %p108, %p109
      %p111 = scmp.ne.s32.totalorder %s102, %s103
      %p112 = scmp.eq.s32.totalorder %s29, 0
      %p113 = por %p111, %p112
      %p114 = scmp.ne.s32.totalorder %s102, %s103
      %p115 = scmp.eq.s32.totalorder %s30, 1
      %p116 = por %p114, %p115
      %p118 = scmp.ne.s32.totalorder %s103, %s117
      %p119 = scmp.eq.s32.totalorder %s30, 0
      %p120 = por %p118, %p119
      %s122 = sadd.s32 %s121, 1
      %p125 = scmp.eq.s32.totalorder %s24, 1
      %p126 = scmp.ne.s32.totalorder %s121, %s123
      %p127 = scmp.eq.s32.totalorder %s24, 0
      %p128 = por %p126, %p127
      %p129 = scmp.ne.s32.totalorder %s121, %s123
      %p130 = scmp.eq.s32.totalorder %s29, 1
      %p131 = por %p129, %p130
      %p132 = scmp.ne.s32.totalorder %s123, %s124
      %p133 = scmp.eq.s32.totalorder %s29, 0
      %p134 = por %p132, %p133
      %p135 = scmp.ne.s32.totalorder %s123, %s124
      %p136 = scmp.eq.s32.totalorder %s30, 1
      %p137 = por %p135, %p136
      %p139 = scmp.ne.s32.totalorder %s124, %s138
      %p140 = scmp.eq.s32.totalorder %s30, 0
      %p141 = por %p139, %p140
      %s143 = sadd.s32 %s142, 1
      %p146 = scmp.eq.s32.totalorder %s24, 1
      %p147 = scmp.ne.s32.totalorder %s142, %s144
      %p148 = scmp.eq.s32.totalorder %s24, 0
      %p149 = por %p147, %p148
      %p150 = scmp.ne.s32.totalorder %s142, %s144
      %p151 = scmp.eq.s32.totalorder %s29, 1
      %p152 = por %p150, %p151
      %p153 = scmp.ne.s32.totalorder %s144, %s145
      %p154 = scmp.eq.s32.totalorder %s29, 0
      %p155 = por %p153, %p154
      %p156 = scmp.ne.s32.totalorder %s144, %s145
      %p157 = scmp.eq.s32.totalorder %s30, 1
      %p158 = por %p156, %p157
      %p160 = scmp.ne.s32.totalorder %s145, %s159
      %p161 = scmp.eq.s32.totalorder %s30, 0
      %p162 = por %p160, %p161
      %s164 = sadd.s32 %s163, 1
      %p167 = scmp.eq.s32.totalorder %s24, 1
      %p168 = scmp.ne.s32.totalorder %s163, %s165
      %p169 = scmp.eq.s32.totalorder %s24, 0
      %p170 = por %p168, %p169
      %p171 = scmp.ne.s32.totalorder %s163, %s165
      %p172 = scmp.eq.s32.totalorder %s29, 1
      %p173 = por %p171, %p172
      %p174 = scmp.ne.s32.totalorder %s165, %s166
      %p175 = scmp.eq.s32.totalorder %s29, 0
      %p176 = por %p174, %p175
      %p177 = scmp.ne.s32.totalorder %s165, %s166
      %p178 = scmp.eq.s32.totalorder %s30, 1
      %p179 = por %p177, %p178
      %p181 = scmp.ne.s32.totalorder %s166, %s180
      %p182 = scmp.eq.s32.totalorder %s30, 0
      %p183 = por %p181, %p182
      %s185 = sadd.s32 %s184, 1
      %p188 = scmp.eq.s32.totalorder %s24, 1
      %p189 = scmp.ne.s32.totalorder %s184, %s186
      %p190 = scmp.eq.s32.totalorder %s24, 0
      %p191 = por %p189, %p190
      %p192 = scmp.ne.s32.totalorder %s184, %s186
      %p193 = scmp.eq.s32.totalorder %s29, 1
      %p194 = por %p192, %p193
      %p195 = scmp.ne.s32.totalorder %s186, %s187
      %p196 = scmp.eq.s32.totalorder %s29, 0
      %p197 = por %p195, %p196
      %p198 = scmp.ne.s32.totalorder %s186, %s187
      %p199 = scmp.eq.s32.totalorder %s30, 1
      %p200 = por %p198, %p199
      %p202 = scmp.ne.s32.totalorder %s187, %s201
      %p203 = scmp.eq.s32.totalorder %s30, 0
      %p204 = por %p202, %p203
      %s206 = sadd.s32 %s205, 1
      %p209 = scmp.eq.s32.totalorder %s24, 1
      %p210 = scmp.ne.s32.totalorder %s205, %s207
      %p211 = scmp.eq.s32.totalorder %s24, 0
      %p212 = por %p210, %p211
      %p213 = scmp.ne.s32.totalorder %s205, %s207
      %p214 = scmp.eq.s32.totalorder %s29, 1
      %p215 = por %p213, %p214
      %p216 = scmp.ne.s32.totalorder %s207, %s208
      %p217 = scmp.eq.s32.totalorder %s29, 0
      %p218 = por %p216, %p217
      %p219 = scmp.ne.s32.totalorder %s207, %s208
      %p220 = scmp.eq.s32.totalorder %s30, 1
      %p221 = por %p219, %p220
      %p223 = scmp.ne.s32.totalorder %s208, %s222
      %p224 = scmp.eq.s32.totalorder %s30, 0
      %p225 = por %p223, %p224
      %s227 = sadd.s32 %s226, 1
      %p230 = scmp.eq.s32.totalorder %s24, 1
      %p231 = scmp.ne.s32.totalorder %s226, %s228
      %p232 = scmp.eq.s32.totalorder %s24, 0
      %p233 = por %p231, %p232
      %p234 = scmp.ne.s32.totalorder %s226, %s228
      %p235 = scmp.eq.s32.totalorder %s29, 1
      %p236 = por %p234, %p235
      %p237 = scmp.ne.s32.totalorder %s228, %s229
      %p238 = scmp.eq.s32.totalorder %s29, 0
      %p239 = por %p237, %p238
      %p240 = scmp.ne.s32.totalorder %s228, %s229
      %p241 = scmp.eq.s32.totalorder %s30, 1
      %p242 = por %p240, %p241
      %p244 = scmp.ne.s32.totalorder %s229, %s243
      %p245 = scmp.eq.s32.totalorder %s30, 0
      %p246 = por %p244, %p245
      %s248 = sadd.s32 %s247, 1
      %p251 = scmp.eq.s32.totalorder %s24, 1
      %p252 = scmp.ne.s32.totalorder %s247, %s249
      %p253 = scmp.eq.s32.totalorder %s24, 0
      %p254 = por %p252, %p253
      %p255 = scmp.ne.s32.totalorder %s247, %s249
      %p256 = scmp.eq.s32.totalorder %s29, 1
      %p257 = por %p255, %p256
      %p258 = scmp.ne.s32.totalorder %s249, %s250
      %p259 = scmp.eq.s32.totalorder %s29, 0
      %p260 = por %p258, %p259
      %p261 = scmp.ne.s32.totalorder %s249, %s250
      %p262 = scmp.eq.s32.totalorder %s30, 1
      %p263 = por %p261, %p262
      %p265 = scmp.ne.s32.totalorder %s250, %s264
      %p266 = scmp.eq.s32.totalorder %s30, 0
      %p267 = por %p265, %p266
      %s269 = sadd.s32 %s268, 1
      %p272 = scmp.eq.s32.totalorder %s24, 1
      %p273 = scmp.ne.s32.totalorder %s268, %s270
      %p274 = scmp.eq.s32.totalorder %s24, 0
      %p275 = por %p273, %p274
      %p276 = scmp.ne.s32.totalorder %s268, %s270
      %p277 = scmp.eq.s32.totalorder %s29, 1
      %p278 = por %p276, %p277
      %p279 = scmp.ne.s32.totalorder %s270, %s271
      %p280 = scmp.eq.s32.totalorder %s29, 0
      %p281 = por %p279, %p280
      %p282 = scmp.ne.s32.totalorder %s270, %s271
      %p283 = scmp.eq.s32.totalorder %s30, 1
      %p284 = por %p282, %p283
      %p286 = scmp.ne.s32.totalorder %s271, %s285
      %p287 = scmp.eq.s32.totalorder %s30, 0
      %p288 = por %p286, %p287
      %s290 = sadd.s32 %s289, 1
      %p293 = scmp.eq.s32.totalorder %s24, 1
      %p294 = scmp.ne.s32.totalorder %s289, %s291
      %p295 = scmp.eq.s32.totalorder %s24, 0
      %p296 = por %p294, %p295
      %p297 = scmp.ne.s32.totalorder %s289, %s291
      %p298 = scmp.eq.s32.totalorder %s29, 1
      %p299 = por %p297, %p298
      %p300 = scmp.ne.s32.totalorder %s291, %s292
      %p301 = scmp.eq.s32.totalorder %s29, 0
      %p302 = por %p300, %p301
      %p303 = scmp.ne.s32.totalorder %s291, %s292
      %p304 = scmp.eq.s32.totalorder %s30, 1
      %p305 = por %p303, %p304
      %p307 = scmp.ne.s32.totalorder %s292, %s306
      %p308 = scmp.eq.s32.totalorder %s30, 0
      %p309 = por %p307, %p308
      %s311 = sadd.s32 %s310, 1
      %p314 = scmp.eq.s32.totalorder %s24, 1
      %p315 = scmp.ne.s32.totalorder %s310, %s312
      %p316 = scmp.eq.s32.totalorder %s24, 0
      %p317 = por %p315, %p316
      %p318 = scmp.ne.s32.totalorder %s310, %s312
      %p319 = scmp.eq.s32.totalorder %s29, 1
      %p320 = por %p318, %p319
      %p321 = scmp.ne.s32.totalorder %s312, %s313
      %p322 = scmp.eq.s32.totalorder %s29, 0
      %p323 = por %p321, %p322
      %p324 = scmp.ne.s32.totalorder %s312, %s313
      %p325 = scmp.eq.s32.totalorder %s30, 1
      %p326 = por %p324, %p325
      %p328 = scmp.ne.s32.totalorder %s313, %s327
      %p329 = scmp.eq.s32.totalorder %s30, 0
      %p330 = por %p328, %p329
      %s332 = sadd.s32 %s331, 1
      %p335 = scmp.eq.s32.totalorder %s24, 1
      %p336 = scmp.ne.s32.totalorder %s331, %s333
      %p337 = scmp.eq.s32.totalorder %s24, 0
      %p338 = por %p336, %p337
      %p339 = scmp.ne.s32.totalorder %s331, %s333
      %p340 = scmp.eq.s32.totalorder %s29, 1
      %p341 = por %p339, %p340
      %p342 = scmp.ne.s32.totalorder %s333, %s334
      %p343 = scmp.eq.s32.totalorder %s29, 0
      %p344 = por %p342, %p343
      %p345 = scmp.ne.s32.totalorder %s333, %s334
      %p346 = scmp.eq.s32.totalorder %s30, 1
      %p347 = por %p345, %p346
      %p349 = scmp.ne.s32.totalorder %s334, %s348
      %p350 = scmp.eq.s32.totalorder %s30, 0
      %p351 = por %p349, %p350
      %s352 = ssub.s32 %s24, %s31
      %p353 = scmp.eq.s32.totalorder %s352, 0
      %s355 = sadd.s32 %s354, 1
      %s356 = scalar_select %p353, %s354, %s355
      %p359 = pneg %p353
      %p360 = scmp.eq.s32.totalorder %s24, 1
      %p361 = por %p359, %p360
      %p362 = scmp.ne.s32.totalorder %s354, %s357
      %p363 = scmp.eq.s32.totalorder %s24, 0
      %p364 = por %p362, %p363
      %p365 = scmp.ne.s32.totalorder %s354, %s357
      %p366 = scmp.eq.s32.totalorder %s29, 1
      %p367 = por %p365, %p366
      %p368 = scmp.ne.s32.totalorder %s357, %s358
      %p369 = scmp.eq.s32.totalorder %s29, 0
      %p370 = por %p368, %p369
      %p371 = scmp.ne.s32.totalorder %s357, %s358
      %p372 = scmp.eq.s32.totalorder %s30, 1
      %p373 = por %p371, %p372
      %p375 = scmp.ne.s32.totalorder %s358, %s374
      %p376 = scmp.eq.s32.totalorder %s30, 0
      %p377 = por %p375, %p376
      %p378 = scmp.le.s32.totalorder 1, %s24
      %p379 = scmp.lt.s32.totalorder %s24, 3
      %p380 = pnand %p378, %p379
      %p381 = pneg %p380
      // Predicated region
      $region9: #{vit_baseline_forward.1} parent=5 // pred_check
        _
      $region10: #{vit_baseline_forward.1} parent=5 // pred_check_branch
        %383 = sbr.rel (%p380) target = $region12
      $region11: #{vit_baseline_forward.1} parent=5 // pred_region
        %s384 = ssub.s32 %s24, 1
        // Predicated region
        $region13: #{vit_baseline_forward.1} parent=11 // pred_check
          %p385 = pneg %p71
        $region14: #{vit_baseline_forward.1} parent=11 // pred_check_branch
          %387 = sbr.rel (%p385) target = $region16
        $region15: #{vit_baseline_forward.1} parent=11 // pred_region
          _
        $region16: #{vit_baseline_forward.1} parent=11 // pred_fallthru
          _
        // Predicated region
        $region17: #{vit_baseline_forward.1} parent=11 // pred_check
          %p388 = pneg %p92
        $region18: #{vit_baseline_forward.1} parent=11 // pred_check_branch
          %390 = sbr.rel (%p388) target = $region20
        $region19: #{vit_baseline_forward.1} parent=11 // pred_region
          _
        $region20: #{vit_baseline_forward.1} parent=11 // pred_fallthru
          _
        // Predicated region
        $region21: #{vit_baseline_forward.1} parent=11 // pred_check
          %p391 = pneg %p113
        $region22: #{vit_baseline_forward.1} parent=11 // pred_check_branch
          %393 = sbr.rel (%p391) target = $region24
        $region23: #{vit_baseline_forward.1} parent=11 // pred_region
          _
        $region24: #{vit_baseline_forward.1} parent=11 // pred_fallthru
          _
        // Predicated region
        $region25: #{vit_baseline_forward.1} parent=11 // pred_check
          %p394 = pneg %p134
        $region26: #{vit_baseline_forward.1} parent=11 // pred_check_branch
          %396 = sbr.rel (%p394) target = $region28
        $region27: #{vit_baseline_forward.1} parent=11 // pred_region
          _
        $region28: #{vit_baseline_forward.1} parent=11 // pred_fallthru
          _
        // Predicated region
        $region29: #{vit_baseline_forward.1} parent=11 // pred_check
          %p397 = pneg %p155
        $region30: #{vit_baseline_forward.1} parent=11 // pred_check_branch
          %399 = sbr.rel (%p397) target = $region32
        $region31: #{vit_baseline_forward.1} parent=11 // pred_region
          _
        $region32: #{vit_baseline_forward.1} parent=11 // pred_fallthru
          _
        // Predicated region
        $region33: #{vit_baseline_forward.1} parent=11 // pred_check
          %p400 = pneg %p176
        $region34: #{vit_baseline_forward.1} parent=11 // pred_check_branch
          %402 = sbr.rel (%p400) target = $region36
        $region35: #{vit_baseline_forward.1} parent=11 // pred_region
          _
        $region36: #{vit_baseline_forward.1} parent=11 // pred_fallthru
          _
        // Predicated region
        $region37: #{vit_baseline_forward.1} parent=11 // pred_check
          %p403 = pneg %p197
        $region38: #{vit_baseline_forward.1} parent=11 // pred_check_branch
          %405 = sbr.rel (%p403) target = $region40
        $region39: #{vit_baseline_forward.1} parent=11 // pred_region
          _
        $region40: #{vit_baseline_forward.1} parent=11 // pred_fallthru
          _
        // Predicated region
        $region41: #{vit_baseline_forward.1} parent=11 // pred_check
          %p406 = pneg %p218
        $region42: #{vit_baseline_forward.1} parent=11 // pred_check_branch
          %408 = sbr.rel (%p406) target = $region44
        $region43: #{vit_baseline_forward.1} parent=11 // pred_region
          _
        $region44: #{vit_baseline_forward.1} parent=11 // pred_fallthru
          _
        // Predicated region
        $region45: #{vit_baseline_forward.1} parent=11 // pred_check
          %p409 = pneg %p239
        $region46: #{vit_baseline_forward.1} parent=11 // pred_check_branch
          %411 = sbr.rel (%p409) target = $region48
        $region47: #{vit_baseline_forward.1} parent=11 // pred_region
          _
        $region48: #{vit_baseline_forward.1} parent=11 // pred_fallthru
          _
        // Predicated region
        $region49: #{vit_baseline_forward.1} parent=11 // pred_check
          %p412 = pneg %p260
        $region50: #{vit_baseline_forward.1} parent=11 // pred_check_branch
          %414 = sbr.rel (%p412) target = $region52
        $region51: #{vit_baseline_forward.1} parent=11 // pred_region
          _
        $region52: #{vit_baseline_forward.1} parent=11 // pred_fallthru
          _
        // Predicated region
        $region53: #{vit_baseline_forward.1} parent=11 // pred_check
          %p415 = pneg %p281
        $region54: #{vit_baseline_forward.1} parent=11 // pred_check_branch
          %417 = sbr.rel (%p415) target = $region56
        $region55: #{vit_baseline_forward.1} parent=11 // pred_region
          _
        $region56: #{vit_baseline_forward.1} parent=11 // pred_fallthru
          _
        // Predicated region
        $region57: #{vit_baseline_forward.1} parent=11 // pred_check
          %p418 = pneg %p302
        $region58: #{vit_baseline_forward.1} parent=11 // pred_check_branch
          %420 = sbr.rel (%p418) target = $region60
        $region59: #{vit_baseline_forward.1} parent=11 // pred_region
          _
        $region60: #{vit_baseline_forward.1} parent=11 // pred_fallthru
          _
        // Predicated region
        $region61: #{vit_baseline_forward.1} parent=11 // pred_check
          %p421 = pneg %p323
        $region62: #{vit_baseline_forward.1} parent=11 // pred_check_branch
          %423 = sbr.rel (%p421) target = $region64
        $region63: #{vit_baseline_forward.1} parent=11 // pred_region
          _
        $region64: #{vit_baseline_forward.1} parent=11 // pred_fallthru
          _
        // Predicated region
        $region65: #{vit_baseline_forward.1} parent=11 // pred_check
          %p424 = pneg %p344
        $region66: #{vit_baseline_forward.1} parent=11 // pred_check_branch
          %426 = sbr.rel (%p424) target = $region68
        $region67: #{vit_baseline_forward.1} parent=11 // pred_region
          _
        $region68: #{vit_baseline_forward.1} parent=11 // pred_fallthru
          _
      $region12: #{vit_baseline_forward.1} parent=5 // pred_fallthru
        _
      %p427 = scmp.lt.s32.totalorder %s24, 2
      // Predicated region
      $region69: #{vit_baseline_forward.1} parent=5 // pred_check
        %p428 = pneg %p427
      $region70: #{vit_baseline_forward.1} parent=5 // pred_check_branch
        %430 = sbr.rel (%p428) target = $region72
      $region71: #{vit_baseline_forward.1} parent=5 // pred_region
        // Predicated region
        $region73: #{vit_baseline_forward.1} parent=71 // pred_check
          %p431 = pneg %p44
        $region74: #{vit_baseline_forward.1} parent=71 // pred_check_branch
          %433 = sbr.rel (%p431) target = $region76
        $region75: #{vit_baseline_forward.1} parent=71 // pred_region
          %p434 = scmp.lt.s32.totalorder %s24, 1
          %s435 = scalar_select %p434, %s24, 1
          %s436 = smul.addr %s435, 8
          %s437 = scalar_lea.vmem %s0, %s436
        $region76: #{vit_baseline_forward.1} parent=71 // pred_fallthru
          _
      $region72: #{vit_baseline_forward.1} parent=5 // pred_fallthru
        _
      %p438 = scmp.le.s32.totalorder 1, %s24
      %p439 = scmp.lt.s32.totalorder %s24, 3
      %p440 = pnand %p438, %p439
      %p441 = pneg %p440
      // Predicated region
      $region77: #{vit_baseline_forward.1} parent=5 // pred_check
        _
      $region78: #{vit_baseline_forward.1} parent=5 // pred_check_branch
        %443 = sbr.rel (%p440) target = $region80
      $region79: #{vit_baseline_forward.1} parent=5 // pred_region
        %s444 = ssub.s32 %s24, 1
        %p445 = scmp.lt.s32.totalorder %s29, 1
        %s446 = scalar_select %p445, %s29, 1
        %s447 = smul.addr %s446, 8
        %s448 = scalar_lea.vmem %s0, %s447
        %p449 = pneg %p50
        %p450 = pneg %p47
        %p451 = pneg %p71
        %p452 = pneg %p68
        %p453 = pneg %p92
        %p454 = pneg %p89
        %p455 = pneg %p113
        %p456 = pneg %p110
        %p457 = pneg %p134
        %p458 = pneg %p131
        %p459 = pneg %p155
        %p460 = pneg %p152
        %p461 = pneg %p176
        %p462 = pneg %p173
        %p463 = pneg %p197
        %p464 = pneg %p194
        %p465 = pneg %p218
        %p466 = pneg %p215
        %p467 = pneg %p239
        %p468 = pneg %p236
        %p469 = pneg %p260
        %p470 = pneg %p257
        %p471 = pneg %p281
        %p472 = pneg %p278
        %p473 = pneg %p302
        %p474 = pneg %p299
        %p475 = pneg %p323
        %p476 = pneg %p320
        %p477 = pneg %p344
        %p478 = pneg %p341
        %p479 = pneg %p370
        %p480 = pneg %p367
        %s481 = sand.u32 %s357, 1
        %s482 = scalar_lea.sflag [#allocation3], %s481
        %s483 = sand.u32 %s357, 1
        %s484 = scalar_lea.vmem [#allocation2], %s483
        %p485 = scmp.lt.s32.totalorder %s29, 1
        %s486 = scalar_select %p485, %s29, 1
        %s487 = smul.addr %s486, 8
        %s488 = scalar_lea.vmem %s0, %s487
        %v490 = vld [vmem:[%s488] sm:$0x1f]
        %v491 = vld [vmem:[%s1] sm:$0x1]
        %v492 = vld [vmem:[%s2] sm:$0x1]
        %vm493 = vcmask 520192
        %v494 = vsel %vm493, %v490, 0.0
        %495 = vadd.xlane.f32.xlu0 %v494
        %v496 = vpop.xlane.xlu0 %495
        %v497 = vrcp.pop 64.0
        %v498 = vmul.f32 64.0, %v497
        %v499 = vsub.f32 1.0, %v498
        %v500 = vmul.f32 %v497, %v499
        %v501 = vadd.f32 %v497, %v500
        %vm502 = vweird.f32 %v497
        %v503 = vsel %vm502, %v497, %v501
        %v504 = vmul.f32 %v496, %v503
        %v505 = vsub.f32 %v490, %v504
        %v506 = vmul.f32 %v505, %v505
        %v507 = vsel %vm493, %v506, 0.0
        %508 = vadd.xlane.f32.xlu0 %v507
        %v509 = vpop.xlane.xlu0 %508
        %v510 = vmul.f32 %v509, %v503
        %v511 = vadd.f32 %v510, 1e-12
        %v512 = vrsqrt.pop %v511
        %v513 = vmul.f32 %v512, %v511
        %v514 = vmul.f32 %v513, %v512
        %v515 = vmul.f32 0.5, %v514
        %v516 = vsub.f32 1.5, %v515
        %v517 = vmul.f32 %v512, %v516
        %vm518 = vweird.f32 %v511
        %vm519 = vweird.f32 %v512
        %vm520 = vmor %vm518, %vm519
        %v521 = vsel %vm520, %v512, %v517
        %v522 = vmul.f32 %v505, %v521
        %v524 = vperm.slane %v491, 0
        %v526 = vmul.f32 %v522, %v524
        %v528 = vperm.slane %v492, 0
        %v530 = vadd.f32 %v526, %v528
        %v531 = vpack.c.bf16 %v530, %v530
        %v532 = vld [vmem:[%s3] sm:$0xf]
        %v533 = vld [vmem:[%s3 + $0x4] sm:$0xf]
        %v534 = vld [vmem:[%s3 + $0x8] sm:$0xf]
        %v535 = vld [vmem:[%s3 + $0xc] sm:$0xf]
        %v536 = vld [vmem:[%s3 + $0x10] sm:$0xf]
        %v537 = vld [vmem:[%s3 + $0x14] sm:$0xf]
        %v538 = vld [vmem:[%s3 + $0x18] sm:$0xf]
        %v539 = vld [vmem:[%s3 + $0x1c] sm:$0xf]
        %v540 = vld [vmem:[%s4] sm:$0x1]
        %v542 = vperm.slane %v540, 0
        %v552 = vunpack.c.l.b16 %v532
        %v553 = vunpack.c.l.b16 %v533
        %v554 = vunpack.c.l.b16 %v534
        %v555 = vunpack.c.l.b16 %v535
        %v556 = vunpack.c.l.b16 %v536
        %v557 = vunpack.c.l.b16 %v537
        %v558 = vunpack.c.l.b16 %v538
        %v559 = vunpack.c.l.b16 %v539
        %v560 = vpack.c.b16 %v553, %v552
        %v561 = vpack.c.b16 %v555, %v554
        %v562 = vpack.c.b16 %v557, %v556
        %v563 = vpack.c.b16 %v559, %v558
        %vm568 = vcmask 523264
        %v570 = vsel %vm568, %v531, 0
        %572 = vmatpush.bf16.msra.mxu0 0
        %573 = vmatpush.bf16.msra.mxu0 0
        %574 = vmatpush.bf16.msra.mxu0 0
        %575 = vmatpush.bf16.msra.mxu0 0
        %576 = vmatpush.bf16.msra.mxu0 %v563
        %577 = vmatpush.bf16.msra.mxu0 %v562
        %578 = vmatpush.bf16.msra.mxu0 %v561
        %579 = vmatpush.bf16.msra.mxu0 %v560
        %580 = vmatmul.bf16.gmra.mxu0 %v570
        %v581 = vpop.f32.mrf.mxu0
        %v582 = vadd.f32 %v542, %v581
        %v583 = vpop.f32.mrf.mxu0
        %584 = vdwg.mxu0
        %s585 = scalar_lea.vmem %s3, 128
        %v586 = vld [vmem:[%s585] sm:$0xf]
        %v587 = vld [vmem:[%s585 + $0x4] sm:$0xf]
        %v588 = vld [vmem:[%s585 + $0x8] sm:$0xf]
        %v589 = vld [vmem:[%s585 + $0xc] sm:$0xf]
        %v590 = vld [vmem:[%s585 + $0x10] sm:$0xf]
        %v591 = vld [vmem:[%s585 + $0x14] sm:$0xf]
        %v592 = vld [vmem:[%s585 + $0x18] sm:$0xf]
        %v593 = vld [vmem:[%s585 + $0x1c] sm:$0xf]
        %s594 = scalar_lea.vmem %s4, 4
        %v595 = vld [vmem:[%s594] sm:$0x1]
        %v597 = vperm.slane %v595, 0
        %v607 = vunpack.c.l.b16 %v586
        %v608 = vunpack.c.l.b16 %v587
        %v609 = vunpack.c.l.b16 %v588
        %v610 = vunpack.c.l.b16 %v589
        %v611 = vunpack.c.l.b16 %v590
        %v612 = vunpack.c.l.b16 %v591
        %v613 = vunpack.c.l.b16 %v592
        %v614 = vunpack.c.l.b16 %v593
        %v615 = vpack.c.b16 %v608, %v607
        %v616 = vpack.c.b16 %v610, %v609
        %v617 = vpack.c.b16 %v612, %v611
        %v618 = vpack.c.b16 %v614, %v613
        %623 = vmatpush.bf16.msra.mxu0 0
        %624 = vmatpush.bf16.msra.mxu0 0
        %625 = vmatpush.bf16.msra.mxu0 0
        %626 = vmatpush.bf16.msra.mxu0 0
        %627 = vmatpush.bf16.msra.mxu0 %v618
        %628 = vmatpush.bf16.msra.mxu0 %v617
        %629 = vmatpush.bf16.msra.mxu0 %v616
        %630 = vmatpush.bf16.msra.mxu0 %v615
        %631 = vmatmul.bf16.gmra.mxu0 %v570
        %v632 = vpop.f32.mrf.mxu0
        %v633 = vadd.f32 %v597, %v632
        %v634 = vpop.f32.mrf.mxu0
        %635 = vdwg.mxu0
        %s636 = scalar_lea.vmem %s3, 256
        %v637 = vld [vmem:[%s636] sm:$0xf]
        %v638 = vld [vmem:[%s636 + $0x4] sm:$0xf]
        %v639 = vld [vmem:[%s636 + $0x8] sm:$0xf]
        %v640 = vld [vmem:[%s636 + $0xc] sm:$0xf]
        %v641 = vld [vmem:[%s636 + $0x10] sm:$0xf]
        %v642 = vld [vmem:[%s636 + $0x14] sm:$0xf]
        %v643 = vld [vmem:[%s636 + $0x18] sm:$0xf]
        %v644 = vld [vmem:[%s636 + $0x1c] sm:$0xf]
        %s645 = scalar_lea.vmem %s4, 8
        %v646 = vld [vmem:[%s645] sm:$0x1]
        %v648 = vperm.slane %v646, 0
        %v658 = vunpack.c.l.b16 %v637
        %v659 = vunpack.c.l.b16 %v638
        %v660 = vunpack.c.l.b16 %v639
        %v661 = vunpack.c.l.b16 %v640
        %v662 = vunpack.c.l.b16 %v641
        %v663 = vunpack.c.l.b16 %v642
        %v664 = vunpack.c.l.b16 %v643
        %v665 = vunpack.c.l.b16 %v644
        %v666 = vpack.c.b16 %v659, %v658
        %v667 = vpack.c.b16 %v661, %v660
        %v668 = vpack.c.b16 %v663, %v662
        %v669 = vpack.c.b16 %v665, %v664
        %674 = vmatpush.bf16.msra.mxu0 0
        %675 = vmatpush.bf16.msra.mxu0 0
        %676 = vmatpush.bf16.msra.mxu0 0
        %677 = vmatpush.bf16.msra.mxu0 0
        %678 = vmatpush.bf16.msra.mxu0 %v669
        %679 = vmatpush.bf16.msra.mxu0 %v668
        %680 = vmatpush.bf16.msra.mxu0 %v667
        %681 = vmatpush.bf16.msra.mxu0 %v666
        %682 = vmatmul.bf16.gmra.mxu0 %v570
        %v683 = vpop.f32.mrf.mxu0
        %v684 = vadd.f32 %v648, %v683
        %v685 = vpop.f32.mrf.mxu0
        %686 = vdwg.mxu0
        %vm687 = vcmask 130048
        %v689 = vsel %vm687, %v582, 0
        %v692 = vsel %vm687, %v633, 0
        %694 = vmatpush.xpose.msra.mxu0 0.0
        %695 = vmatpush.xpose.msra.mxu0 0.0
        %696 = vmatpush.xpose.msra.mxu0 0.0
        %697 = vmatpush.xpose.msra.mxu0 0.0
        %698 = vmatpush.xpose.msra.mxu0 0.0
        %699 = vmatpush.xpose.msra.mxu0 0.0
        %700 = vmatpush.xpose.msra.mxu0 0.0
        %701 = vmatpush.xpose.msra.mxu0 0.0
        %702 = vmatpush.xpose.msra.mxu0 0.0
        %703 = vmatpush.xpose.msra.mxu0 0.0
        %704 = vmatpush.xpose.msra.mxu0 0.0
        %705 = vmatpush.xpose.msra.mxu0 0.0
        %706 = vmatpush.xpose.msra.mxu0 0.0
        %707 = vmatpush.xpose.msra.mxu0 0.0
        %708 = vmatpush.xpose.msra.mxu0 0.0
        %709 = vmatpush.xpose.msra.mxu0 %v692
        %710 = vmatmul.f32.gmra.mxu0 %v689
        %v711 = vpop.f32.mrf.mxu0
        %v712 = vadd.f32 0.0, %v711
        %713 = vdwg.mxu0
        %v714 = vmul.f32 %v712, 0.25
        %vm715 = vcmask 36864
        %v716 = vsel %vm715, %v714, -inf
        %717 = vmax.xlane.f32.xlu0 %v716
        %v718 = vpop.xlane.xlu0 %717
        %v719 = vsub.f32 %v714, %v718
        %v720 = vmul.f32 %v719, 1.442695
        %v721 = vpow.pop %v720
        %v722 = vsel %vm715, %v721, 0.0
        %723 = vadd.xlane.f32.xlu0 %v722
        %v724 = vpop.xlane.xlu0 %723
        %v725 = vrcp.pop %v724
        %v726 = vmul.f32 %v721, %v725
        %vm727 = vcmask 39936
        %v729 = vsel %vm727, %v726, 0
        %vm731 = vcmask 1044480
        %v733 = vsel %vm731, %v684, 0
        %735 = vmatpush.msra.mxu0 0.0
        %736 = vmatpush.msra.mxu0 0.0
        %737 = vmatpush.msra.mxu0 0.0
        %738 = vmatpush.msra.mxu0 0.0
        %739 = vmatpush.msra.mxu0 0.0
        %740 = vmatpush.msra.mxu0 0.0
        %741 = vmatpush.msra.mxu0 0.0
        %742 = vmatpush.msra.mxu0 0.0
        %743 = vmatpush.msra.mxu0 0.0
        %744 = vmatpush.msra.mxu0 0.0
        %745 = vmatpush.msra.mxu0 0.0
        %746 = vmatpush.msra.mxu0 0.0
        %747 = vmatpush.msra.mxu0 0.0
        %748 = vmatpush.msra.mxu0 0.0
        %749 = vmatpush.msra.mxu0 0.0
        %750 = vmatpush.msra.mxu0 %v733
        %751 = vmatmul.f32.gmra.mxu0 %v729
        %v752 = vpop.f32.mrf.mxu0
        %v753 = vadd.f32 0.0, %v752
        %754 = vdwg.mxu0
        %s755 = scalar_lea.vmem %s3, 32
        %v756 = vld [vmem:[%s755] sm:$0xf]
        %v757 = vld [vmem:[%s755 + $0x4] sm:$0xf]
        %v758 = vld [vmem:[%s755 + $0x8] sm:$0xf]
        %v759 = vld [vmem:[%s755 + $0xc] sm:$0xf]
        %v760 = vld [vmem:[%s755 + $0x10] sm:$0xf]
        %v761 = vld [vmem:[%s755 + $0x14] sm:$0xf]
        %v762 = vld [vmem:[%s755 + $0x18] sm:$0xf]
        %v763 = vld [vmem:[%s755 + $0x1c] sm:$0xf]
        %s764 = scalar_lea.vmem %s4, 1
        %v765 = vld [vmem:[%s764] sm:$0x1]
        %v767 = vperm.slane %v765, 0
        %v777 = vunpack.c.l.b16 %v756
        %v778 = vunpack.c.l.b16 %v757
        %v779 = vunpack.c.l.b16 %v758
        %v780 = vunpack.c.l.b16 %v759
        %v781 = vunpack.c.l.b16 %v760
        %v782 = vunpack.c.l.b16 %v761
        %v783 = vunpack.c.l.b16 %v762
        %v784 = vunpack.c.l.b16 %v763
        %v785 = vpack.c.b16 %v778, %v777
        %v786 = vpack.c.b16 %v780, %v779
        %v787 = vpack.c.b16 %v782, %v781
        %v788 = vpack.c.b16 %v784, %v783
        %793 = vmatpush.bf16.msra.mxu0 0
        %794 = vmatpush.bf16.msra.mxu0 0
        %795 = vmatpush.bf16.msra.mxu0 0
        %796 = vmatpush.bf16.msra.mxu0 0
        %797 = vmatpush.bf16.msra.mxu0 %v788
        %798 = vmatpush.bf16.msra.mxu0 %v787
        %799 = vmatpush.bf16.msra.mxu0 %v786
        %800 = vmatpush.bf16.msra.mxu0 %v785
        %801 = vmatmul.bf16.gmra.mxu0 %v570
        %v802 = vpop.f32.mrf.mxu0
        %v803 = vadd.f32 %v767, %v802
        %v804 = vpop.f32.mrf.mxu0
        %805 = vdwg.mxu0
        %s806 = scalar_lea.vmem %s3, 160
        %v807 = vld [vmem:[%s806] sm:$0xf]
        %v808 = vld [vmem:[%s806 + $0x4] sm:$0xf]
        %v809 = vld [vmem:[%s806 + $0x8] sm:$0xf]
        %v810 = vld [vmem:[%s806 + $0xc] sm:$0xf]
        %v811 = vld [vmem:[%s806 + $0x10] sm:$0xf]
        %v812 = vld [vmem:[%s806 + $0x14] sm:$0xf]
        %v813 = vld [vmem:[%s806 + $0x18] sm:$0xf]
        %v814 = vld [vmem:[%s806 + $0x1c] sm:$0xf]
        %s815 = scalar_lea.vmem %s4, 5
        %v816 = vld [vmem:[%s815] sm:$0x1]
        %v818 = vperm.slane %v816, 0
        %v828 = vunpack.c.l.b16 %v807
        %v829 = vunpack.c.l.b16 %v808
        %v830 = vunpack.c.l.b16 %v809
        %v831 = vunpack.c.l.b16 %v810
        %v832 = vunpack.c.l.b16 %v811
        %v833 = vunpack.c.l.b16 %v812
        %v834 = vunpack.c.l.b16 %v813
        %v835 = vunpack.c.l.b16 %v814
        %v836 = vpack.c.b16 %v829, %v828
        %v837 = vpack.c.b16 %v831, %v830
        %v838 = vpack.c.b16 %v833, %v832
        %v839 = vpack.c.b16 %v835, %v834
        %844 = vmatpush.bf16.msra.mxu0 0
        %845 = vmatpush.bf16.msra.mxu0 0
        %846 = vmatpush.bf16.msra.mxu0 0
        %847 = vmatpush.bf16.msra.mxu0 0
        %848 = vmatpush.bf16.msra.mxu0 %v839
        %849 = vmatpush.bf16.msra.mxu0 %v838
        %850 = vmatpush.bf16.msra.mxu0 %v837
        %851 = vmatpush.bf16.msra.mxu0 %v836
        %852 = vmatmul.bf16.gmra.mxu0 %v570
        %v853 = vpop.f32.mrf.mxu0
        %v854 = vadd.f32 %v818, %v853
        %v855 = vpop.f32.mrf.mxu0
        %856 = vdwg.mxu0
        %s857 = scalar_lea.vmem %s3, 288
        %v858 = vld [vmem:[%s857] sm:$0xf]
        %v859 = vld [vmem:[%s857 + $0x4] sm:$0xf]
        %v860 = vld [vmem:[%s857 + $0x8] sm:$0xf]
        %v861 = vld [vmem:[%s857 + $0xc] sm:$0xf]
        %v862 = vld [vmem:[%s857 + $0x10] sm:$0xf]
        %v863 = vld [vmem:[%s857 + $0x14] sm:$0xf]
        %v864 = vld [vmem:[%s857 + $0x18] sm:$0xf]
        %v865 = vld [vmem:[%s857 + $0x1c] sm:$0xf]
        %s866 = scalar_lea.vmem %s4, 9
        %v867 = vld [vmem:[%s866] sm:$0x1]
        %v869 = vperm.slane %v867, 0
        %v879 = vunpack.c.l.b16 %v858
        %v880 = vunpack.c.l.b16 %v859
        %v881 = vunpack.c.l.b16 %v860
        %v882 = vunpack.c.l.b16 %v861
        %v883 = vunpack.c.l.b16 %v862
        %v884 = vunpack.c.l.b16 %v863
        %v885 = vunpack.c.l.b16 %v864
        %v886 = vunpack.c.l.b16 %v865
        %v887 = vpack.c.b16 %v880, %v879
        %v888 = vpack.c.b16 %v882, %v881
        %v889 = vpack.c.b16 %v884, %v883
        %v890 = vpack.c.b16 %v886, %v885
        %895 = vmatpush.bf16.msra.mxu0 0
        %896 = vmatpush.bf16.msra.mxu0 0
        %897 = vmatpush.bf16.msra.mxu0 0
        %898 = vmatpush.bf16.msra.mxu0 0
        %899 = vmatpush.bf16.msra.mxu0 %v890
        %900 = vmatpush.bf16.msra.mxu0 %v889
        %901 = vmatpush.bf16.msra.mxu0 %v888
        %902 = vmatpush.bf16.msra.mxu0 %v887
        %903 = vmatmul.bf16.gmra.mxu0 %v570
        %v904 = vpop.f32.mrf.mxu0
        %v905 = vadd.f32 %v869, %v904
        %v906 = vpop.f32.mrf.mxu0
        %907 = vdwg.mxu0
        %v909 = vsel %vm687, %v803, 0
        %v912 = vsel %vm687, %v854, 0
        %914 = vmatpush.xpose.msra.mxu0 0.0
        %915 = vmatpush.xpose.msra.mxu0 0.0
        %916 = vmatpush.xpose.msra.mxu0 0.0
        %917 = vmatpush.xpose.msra.mxu0 0.0
        %918 = vmatpush.xpose.msra.mxu0 0.0
        %919 = vmatpush.xpose.msra.mxu0 0.0
        %920 = vmatpush.xpose.msra.mxu0 0.0
        %921 = vmatpush.xpose.msra.mxu0 0.0
        %922 = vmatpush.xpose.msra.mxu0 0.0
        %923 = vmatpush.xpose.msra.mxu0 0.0
        %924 = vmatpush.xpose.msra.mxu0 0.0
        %925 = vmatpush.xpose.msra.mxu0 0.0
        %926 = vmatpush.xpose.msra.mxu0 0.0
        %927 = vmatpush.xpose.msra.mxu0 0.0
        %928 = vmatpush.xpose.msra.mxu0 0.0
        %929 = vmatpush.xpose.msra.mxu0 %v912
        %930 = vmatmul.f32.gmra.mxu0 %v909
        %v931 = vpop.f32.mrf.mxu0
        %v932 = vadd.f32 0.0, %v931
        %933 = vdwg.mxu0
        %v934 = vmul.f32 %v932, 0.25
        %v935 = vsel %vm715, %v934, -inf
        %936 = vmax.xlane.f32.xlu0 %v935
        %v937 = vpop.xlane.xlu0 %936
        %v938 = vsub.f32 %v934, %v937
        %v939 = vmul.f32 %v938, 1.442695
        %v940 = vpow.pop %v939
        %v941 = vsel %vm715, %v940, 0.0
        %942 = vadd.xlane.f32.xlu0 %v941
        %v943 = vpop.xlane.xlu0 %942
        %v944 = vrcp.pop %v943
        %v945 = vmul.f32 %v940, %v944
        %v947 = vsel %vm727, %v945, 0
        %v950 = vsel %vm731, %v905, 0
        %952 = vmatpush.msra.mxu0 0.0
        %953 = vmatpush.msra.mxu0 0.0
        %954 = vmatpush.msra.mxu0 0.0
        %955 = vmatpush.msra.mxu0 0.0
        %956 = vmatpush.msra.mxu0 0.0
        %957 = vmatpush.msra.mxu0 0.0
        %958 = vmatpush.msra.mxu0 0.0
        %959 = vmatpush.msra.mxu0 0.0
        %960 = vmatpush.msra.mxu0 0.0
        %961 = vmatpush.msra.mxu0 0.0
        %962 = vmatpush.msra.mxu0 0.0
        %963 = vmatpush.msra.mxu0 0.0
        %964 = vmatpush.msra.mxu0 0.0
        %965 = vmatpush.msra.mxu0 0.0
        %966 = vmatpush.msra.mxu0 0.0
        %967 = vmatpush.msra.mxu0 %v950
        %968 = vmatmul.f32.gmra.mxu0 %v947
        %v969 = vpop.f32.mrf.mxu0
        %v970 = vadd.f32 0.0, %v969
        %971 = vdwg.mxu0
        %s972 = scalar_lea.vmem %s3, 64
        %v973 = vld [vmem:[%s972] sm:$0xf]
        %v974 = vld [vmem:[%s972 + $0x4] sm:$0xf]
        %v975 = vld [vmem:[%s972 + $0x8] sm:$0xf]
        %v976 = vld [vmem:[%s972 + $0xc] sm:$0xf]
        %v977 = vld [vmem:[%s972 + $0x10] sm:$0xf]
        %v978 = vld [vmem:[%s972 + $0x14] sm:$0xf]
        %v979 = vld [vmem:[%s972 + $0x18] sm:$0xf]
        %v980 = vld [vmem:[%s972 + $0x1c] sm:$0xf]
        %s981 = scalar_lea.vmem %s4, 2
        %v982 = vld [vmem:[%s981] sm:$0x1]
        %v984 = vperm.slane %v982, 0
        %v994 = vunpack.c.l.b16 %v973
        %v995 = vunpack.c.l.b16 %v974
        %v996 = vunpack.c.l.b16 %v975
        %v997 = vunpack.c.l.b16 %v976
        %v998 = vunpack.c.l.b16 %v977
        %v999 = vunpack.c.l.b16 %v978
        %v1000 = vunpack.c.l.b16 %v979
        %v1001 = vunpack.c.l.b16 %v980
        %v1002 = vpack.c.b16 %v995, %v994
        %v1003 = vpack.c.b16 %v997, %v996
        %v1004 = vpack.c.b16 %v999, %v998
        %v1005 = vpack.c.b16 %v1001, %v1000
        %1010 = vmatpush.bf16.msra.mxu0 0
        %1011 = vmatpush.bf16.msra.mxu0 0
        %1012 = vmatpush.bf16.msra.mxu0 0
        %1013 = vmatpush.bf16.msra.mxu0 0
        %1014 = vmatpush.bf16.msra.mxu0 %v1005
        %1015 = vmatpush.bf16.msra.mxu0 %v1004
        %1016 = vmatpush.bf16.msra.mxu0 %v1003
        %1017 = vmatpush.bf16.msra.mxu0 %v1002
        %1018 = vmatmul.bf16.gmra.mxu0 %v570
        %v1019 = vpop.f32.mrf.mxu0
        %v1020 = vadd.f32 %v984, %v1019
        %v1021 = vpop.f32.mrf.mxu0
        %1022 = vdwg.mxu0
        %s1023 = scalar_lea.vmem %s3, 192
        %v1024 = vld [vmem:[%s1023] sm:$0xf]
        %v1025 = vld [vmem:[%s1023 + $0x4] sm:$0xf]
        %v1026 = vld [vmem:[%s1023 + $0x8] sm:$0xf]
        %v1027 = vld [vmem:[%s1023 + $0xc] sm:$0xf]
        %v1028 = vld [vmem:[%s1023 + $0x10] sm:$0xf]
        %v1029 = vld [vmem:[%s1023 + $0x14] sm:$0xf]
        %v1030 = vld [vmem:[%s1023 + $0x18] sm:$0xf]
        %v1031 = vld [vmem:[%s1023 + $0x1c] sm:$0xf]
        %s1032 = scalar_lea.vmem %s4, 6
        %v1033 = vld [vmem:[%s1032] sm:$0x1]
        %v1035 = vperm.slane %v1033, 0
        %v1045 = vunpack.c.l.b16 %v1024
        %v1046 = vunpack.c.l.b16 %v1025
        %v1047 = vunpack.c.l.b16 %v1026
        %v1048 = vunpack.c.l.b16 %v1027
        %v1049 = vunpack.c.l.b16 %v1028
        %v1050 = vunpack.c.l.b16 %v1029
        %v1051 = vunpack.c.l.b16 %v1030
        %v1052 = vunpack.c.l.b16 %v1031
        %v1053 = vpack.c.b16 %v1046, %v1045
        %v1054 = vpack.c.b16 %v1048, %v1047
        %v1055 = vpack.c.b16 %v1050, %v1049
        %v1056 = vpack.c.b16 %v1052, %v1051
        %1061 = vmatpush.bf16.msra.mxu0 0
        %1062 = vmatpush.bf16.msra.mxu0 0
        %1063 = vmatpush.bf16.msra.mxu0 0
        %1064 = vmatpush.bf16.msra.mxu0 0
        %1065 = vmatpush.bf16.msra.mxu0 %v1056
        %1066 = vmatpush.bf16.msra.mxu0 %v1055
        %1067 = vmatpush.bf16.msra.mxu0 %v1054
        %1068 = vmatpush.bf16.msra.mxu0 %v1053
        %1069 = vmatmul.bf16.gmra.mxu0 %v570
        %v1070 = vpop.f32.mrf.mxu0
        %v1071 = vadd.f32 %v1035, %v1070
        %v1072 = vpop.f32.mrf.mxu0
        %1073 = vdwg.mxu0
        %s1074 = scalar_lea.vmem %s3, 320
        %v1075 = vld [vmem:[%s1074] sm:$0xf]
        %v1076 = vld [vmem:[%s1074 + $0x4] sm:$0xf]
        %v1077 = vld [vmem:[%s1074 + $0x8] sm:$0xf]
        %v1078 = vld [vmem:[%s1074 + $0xc] sm:$0xf]
        %v1079 = vld [vmem:[%s1074 + $0x10] sm:$0xf]
        %v1080 = vld [vmem:[%s1074 + $0x14] sm:$0xf]
        %v1081 = vld [vmem:[%s1074 + $0x18] sm:$0xf]
        %v1082 = vld [vmem:[%s1074 + $0x1c] sm:$0xf]
        %s1083 = scalar_lea.vmem %s4, 10
        %v1084 = vld [vmem:[%s1083] sm:$0x1]
        %v1086 = vperm.slane %v1084, 0
        %v1096 = vunpack.c.l.b16 %v1075
        %v1097 = vunpack.c.l.b16 %v1076
        %v1098 = vunpack.c.l.b16 %v1077
        %v1099 = vunpack.c.l.b16 %v1078
        %v1100 = vunpack.c.l.b16 %v1079
        %v1101 = vunpack.c.l.b16 %v1080
        %v1102 = vunpack.c.l.b16 %v1081
        %v1103 = vunpack.c.l.b16 %v1082
        %v1104 = vpack.c.b16 %v1097, %v1096
        %v1105 = vpack.c.b16 %v1099, %v1098
        %v1106 = vpack.c.b16 %v1101, %v1100
        %v1107 = vpack.c.b16 %v1103, %v1102
        %1112 = vmatpush.bf16.msra.mxu0 0
        %1113 = vmatpush.bf16.msra.mxu0 0
        %1114 = vmatpush.bf16.msra.mxu0 0
        %1115 = vmatpush.bf16.msra.mxu0 0
        %1116 = vmatpush.bf16.msra.mxu0 %v1107
        %1117 = vmatpush.bf16.msra.mxu0 %v1106
        %1118 = vmatpush.bf16.msra.mxu0 %v1105
        %1119 = vmatpush.bf16.msra.mxu0 %v1104
        %1120 = vmatmul.bf16.gmra.mxu0 %v570
        %v1121 = vpop.f32.mrf.mxu0
        %v1122 = vadd.f32 %v1086, %v1121
        %v1123 = vpop.f32.mrf.mxu0
        %1124 = vdwg.mxu0
        %v1126 = vsel %vm687, %v1020, 0
        %v1129 = vsel %vm687, %v1071, 0
        %1131 = vmatpush.xpose.msra.mxu0 0.0
        %1132 = vmatpush.xpose.msra.mxu0 0.0
        %1133 = vmatpush.xpose.msra.mxu0 0.0
        %1134 = vmatpush.xpose.msra.mxu0 0.0
        %1135 = vmatpush.xpose.msra.mxu0 0.0
        %1136 = vmatpush.xpose.msra.mxu0 0.0
        %1137 = vmatpush.xpose.msra.mxu0 0.0
        %1138 = vmatpush.xpose.msra.mxu0 0.0
        %1139 = vmatpush.xpose.msra.mxu0 0.0
        %1140 = vmatpush.xpose.msra.mxu0 0.0
        %1141 = vmatpush.xpose.msra.mxu0 0.0
        %1142 = vmatpush.xpose.msra.mxu0 0.0
        %1143 = vmatpush.xpose.msra.mxu0 0.0
        %1144 = vmatpush.xpose.msra.mxu0 0.0
        %1145 = vmatpush.xpose.msra.mxu0 0.0
        %1146 = vmatpush.xpose.msra.mxu0 %v1129
        %1147 = vmatmul.f32.gmra.mxu0 %v1126
        %v1148 = vpop.f32.mrf.mxu0
        %v1149 = vadd.f32 0.0, %v1148
        %1150 = vdwg.mxu0
        %v1151 = vmul.f32 %v1149, 0.25
        %v1152 = vsel %vm715, %v1151, -inf
        %1153 = vmax.xlane.f32.xlu0 %v1152
        %v1154 = vpop.xlane.xlu0 %1153
        %v1155 = vsub.f32 %v1151, %v1154
        %v1156 = vmul.f32 %v1155, 1.442695
        %v1157 = vpow.pop %v1156
        %v1158 = vsel %vm715, %v1157, 0.0
        %1159 = vadd.xlane.f32.xlu0 %v1158
        %v1160 = vpop.xlane.xlu0 %1159
        %v1161 = vrcp.pop %v1160
        %v1162 = vmul.f32 %v1157, %v1161
        %v1164 = vsel %vm727, %v1162, 0
        %v1167 = vsel %vm731, %v1122, 0
        %1169 = vmatpush.msra.mxu0 0.0
        %1170 = vmatpush.msra.mxu0 0.0
        %1171 = vmatpush.msra.mxu0 0.0
        %1172 = vmatpush.msra.mxu0 0.0
        %1173 = vmatpush.msra.mxu0 0.0
        %1174 = vmatpush.msra.mxu0 0.0
        %1175 = vmatpush.msra.mxu0 0.0
        %1176 = vmatpush.msra.mxu0 0.0
        %1177 = vmatpush.msra.mxu0 0.0
        %1178 = vmatpush.msra.mxu0 0.0
        %1179 = vmatpush.msra.mxu0 0.0
        %1180 = vmatpush.msra.mxu0 0.0
        %1181 = vmatpush.msra.mxu0 0.0
        %1182 = vmatpush.msra.mxu0 0.0
        %1183 = vmatpush.msra.mxu0 0.0
        %1184 = vmatpush.msra.mxu0 %v1167
        %1185 = vmatmul.f32.gmra.mxu0 %v1164
        %v1186 = vpop.f32.mrf.mxu0
        %v1187 = vadd.f32 0.0, %v1186
        %1188 = vdwg.mxu0
        %s1189 = scalar_lea.vmem %s3, 96
        %v1190 = vld [vmem:[%s1189] sm:$0xf]
        %v1191 = vld [vmem:[%s1189 + $0x4] sm:$0xf]
        %v1192 = vld [vmem:[%s1189 + $0x8] sm:$0xf]
        %v1193 = vld [vmem:[%s1189 + $0xc] sm:$0xf]
        %v1194 = vld [vmem:[%s1189 + $0x10] sm:$0xf]
        %v1195 = vld [vmem:[%s1189 + $0x14] sm:$0xf]
        %v1196 = vld [vmem:[%s1189 + $0x18] sm:$0xf]
        %v1197 = vld [vmem:[%s1189 + $0x1c] sm:$0xf]
        %s1198 = scalar_lea.vmem %s4, 3
        %v1199 = vld [vmem:[%s1198] sm:$0x1]
        %v1201 = vperm.slane %v1199, 0
        %v1211 = vunpack.c.l.b16 %v1190
        %v1212 = vunpack.c.l.b16 %v1191
        %v1213 = vunpack.c.l.b16 %v1192
        %v1214 = vunpack.c.l.b16 %v1193
        %v1215 = vunpack.c.l.b16 %v1194
        %v1216 = vunpack.c.l.b16 %v1195
        %v1217 = vunpack.c.l.b16 %v1196
        %v1218 = vunpack.c.l.b16 %v1197
        %v1219 = vpack.c.b16 %v1212, %v1211
        %v1220 = vpack.c.b16 %v1214, %v1213
        %v1221 = vpack.c.b16 %v1216, %v1215
        %v1222 = vpack.c.b16 %v1218, %v1217
        %1227 = vmatpush.bf16.msra.mxu0 0
        %1228 = vmatpush.bf16.msra.mxu0 0
        %1229 = vmatpush.bf16.msra.mxu0 0
        %1230 = vmatpush.bf16.msra.mxu0 0
        %1231 = vmatpush.bf16.msra.mxu0 %v1222
        %1232 = vmatpush.bf16.msra.mxu0 %v1221
        %1233 = vmatpush.bf16.msra.mxu0 %v1220
        %1234 = vmatpush.bf16.msra.mxu0 %v1219
        %1235 = vmatmul.bf16.gmra.mxu0 %v570
        %v1236 = vpop.f32.mrf.mxu0
        %v1237 = vadd.f32 %v1201, %v1236
        %v1238 = vpop.f32.mrf.mxu0
        %1239 = vdwg.mxu0
        %s1240 = scalar_lea.vmem %s3, 224
        %v1241 = vld [vmem:[%s1240] sm:$0xf]
        %v1242 = vld [vmem:[%s1240 + $0x4] sm:$0xf]
        %v1243 = vld [vmem:[%s1240 + $0x8] sm:$0xf]
        %v1244 = vld [vmem:[%s1240 + $0xc] sm:$0xf]
        %v1245 = vld [vmem:[%s1240 + $0x10] sm:$0xf]
        %v1246 = vld [vmem:[%s1240 + $0x14] sm:$0xf]
        %v1247 = vld [vmem:[%s1240 + $0x18] sm:$0xf]
        %v1248 = vld [vmem:[%s1240 + $0x1c] sm:$0xf]
        %s1249 = scalar_lea.vmem %s4, 7
        %v1250 = vld [vmem:[%s1249] sm:$0x1]
        %v1252 = vperm.slane %v1250, 0
        %v1262 = vunpack.c.l.b16 %v1241
        %v1263 = vunpack.c.l.b16 %v1242
        %v1264 = vunpack.c.l.b16 %v1243
        %v1265 = vunpack.c.l.b16 %v1244
        %v1266 = vunpack.c.l.b16 %v1245
        %v1267 = vunpack.c.l.b16 %v1246
        %v1268 = vunpack.c.l.b16 %v1247
        %v1269 = vunpack.c.l.b16 %v1248
        %v1270 = vpack.c.b16 %v1263, %v1262
        %v1271 = vpack.c.b16 %v1265, %v1264
        %v1272 = vpack.c.b16 %v1267, %v1266
        %v1273 = vpack.c.b16 %v1269, %v1268
        %1278 = vmatpush.bf16.msra.mxu0 0
        %1279 = vmatpush.bf16.msra.mxu0 0
        %1280 = vmatpush.bf16.msra.mxu0 0
        %1281 = vmatpush.bf16.msra.mxu0 0
        %1282 = vmatpush.bf16.msra.mxu0 %v1273
        %1283 = vmatpush.bf16.msra.mxu0 %v1272
        %1284 = vmatpush.bf16.msra.mxu0 %v1271
        %1285 = vmatpush.bf16.msra.mxu0 %v1270
        %1286 = vmatmul.bf16.gmra.mxu0 %v570
        %v1287 = vpop.f32.mrf.mxu0
        %v1288 = vadd.f32 %v1252, %v1287
        %v1289 = vpop.f32.mrf.mxu0
        %1290 = vdwg.mxu0
        %s1291 = scalar_lea.vmem %s3, 352
        %v1292 = vld [vmem:[%s1291] sm:$0xf]
        %v1293 = vld [vmem:[%s1291 + $0x4] sm:$0xf]
        %v1294 = vld [vmem:[%s1291 + $0x8] sm:$0xf]
        %v1295 = vld [vmem:[%s1291 + $0xc] sm:$0xf]
        %v1296 = vld [vmem:[%s1291 + $0x10] sm:$0xf]
        %v1297 = vld [vmem:[%s1291 + $0x14] sm:$0xf]
        %v1298 = vld [vmem:[%s1291 + $0x18] sm:$0xf]
        %v1299 = vld [vmem:[%s1291 + $0x1c] sm:$0xf]
        %s1300 = scalar_lea.vmem %s4, 11
        %v1301 = vld [vmem:[%s1300] sm:$0x1]
        %v1303 = vperm.slane %v1301, 0
        %v1313 = vunpack.c.l.b16 %v1292
        %v1314 = vunpack.c.l.b16 %v1293
        %v1315 = vunpack.c.l.b16 %v1294
        %v1316 = vunpack.c.l.b16 %v1295
        %v1317 = vunpack.c.l.b16 %v1296
        %v1318 = vunpack.c.l.b16 %v1297
        %v1319 = vunpack.c.l.b16 %v1298
        %v1320 = vunpack.c.l.b16 %v1299
        %v1321 = vpack.c.b16 %v1314, %v1313
        %v1322 = vpack.c.b16 %v1316, %v1315
        %v1323 = vpack.c.b16 %v1318, %v1317
        %v1324 = vpack.c.b16 %v1320, %v1319
        %1329 = vmatpush.bf16.msra.mxu0 0
        %1330 = vmatpush.bf16.msra.mxu0 0
        %1331 = vmatpush.bf16.msra.mxu0 0
        %1332 = vmatpush.bf16.msra.mxu0 0
        %1333 = vmatpush.bf16.msra.mxu0 %v1324
        %1334 = vmatpush.bf16.msra.mxu0 %v1323
        %1335 = vmatpush.bf16.msra.mxu0 %v1322
        %1336 = vmatpush.bf16.msra.mxu0 %v1321
        %1337 = vmatmul.bf16.gmra.mxu0 %v570
        %v1338 = vpop.f32.mrf.mxu0
        %v1339 = vadd.f32 %v1303, %v1338
        %v1340 = vpop.f32.mrf.mxu0
        %1341 = vdwg.mxu0
        %v1343 = vsel %vm687, %v1237, 0
        %v1346 = vsel %vm687, %v1288, 0
        %1348 = vmatpush.xpose.msra.mxu0 0.0
        %1349 = vmatpush.xpose.msra.mxu0 0.0
        %1350 = vmatpush.xpose.msra.mxu0 0.0
        %1351 = vmatpush.xpose.msra.mxu0 0.0
        %1352 = vmatpush.xpose.msra.mxu0 0.0
        %1353 = vmatpush.xpose.msra.mxu0 0.0
        %1354 = vmatpush.xpose.msra.mxu0 0.0
        %1355 = vmatpush.xpose.msra.mxu0 0.0
        %1356 = vmatpush.xpose.msra.mxu0 0.0
        %1357 = vmatpush.xpose.msra.mxu0 0.0
        %1358 = vmatpush.xpose.msra.mxu0 0.0
        %1359 = vmatpush.xpose.msra.mxu0 0.0
        %1360 = vmatpush.xpose.msra.mxu0 0.0
        %1361 = vmatpush.xpose.msra.mxu0 0.0
        %1362 = vmatpush.xpose.msra.mxu0 0.0
        %1363 = vmatpush.xpose.msra.mxu0 %v1346
        %1364 = vmatmul.f32.gmra.mxu0 %v1343
        %v1365 = vpop.f32.mrf.mxu0
        %v1366 = vadd.f32 0.0, %v1365
        %1367 = vdwg.mxu0
        %v1368 = vmul.f32 %v1366, 0.25
        %v1369 = vsel %vm715, %v1368, -inf
        %1370 = vmax.xlane.f32.xlu0 %v1369
        %v1371 = vpop.xlane.xlu0 %1370
        %v1372 = vsub.f32 %v1368, %v1371
        %v1373 = vmul.f32 %v1372, 1.442695
        %v1374 = vpow.pop %v1373
        %v1375 = vsel %vm715, %v1374, 0.0
        %1376 = vadd.xlane.f32.xlu0 %v1375
        %v1377 = vpop.xlane.xlu0 %1376
        %v1378 = vrcp.pop %v1377
        %v1379 = vmul.f32 %v1374, %v1378
        %v1381 = vsel %vm727, %v1379, 0
        %v1384 = vsel %vm731, %v1339, 0
        %1386 = vmatpush.msra.mxu0 0.0
        %1387 = vmatpush.msra.mxu0 0.0
        %1388 = vmatpush.msra.mxu0 0.0
        %1389 = vmatpush.msra.mxu0 0.0
        %1390 = vmatpush.msra.mxu0 0.0
        %1391 = vmatpush.msra.mxu0 0.0
        %1392 = vmatpush.msra.mxu0 0.0
        %1393 = vmatpush.msra.mxu0 0.0
        %1394 = vmatpush.msra.mxu0 0.0
        %1395 = vmatpush.msra.mxu0 0.0
        %1396 = vmatpush.msra.mxu0 0.0
        %1397 = vmatpush.msra.mxu0 0.0
        %1398 = vmatpush.msra.mxu0 0.0
        %1399 = vmatpush.msra.mxu0 0.0
        %1400 = vmatpush.msra.mxu0 0.0
        %1401 = vmatpush.msra.mxu0 %v1384
        %1402 = vmatmul.f32.gmra.mxu0 %v1381
        %v1403 = vpop.f32.mrf.mxu0
        %v1404 = vadd.f32 0.0, %v1403
        %1405 = vdwg.mxu0
        %1407 = vrot.lane.b32.xlu0 %v970, 16
        %v1408 = vpop.permute.xlu0 %1407
        %1411 = vrot.lane.b32.xlu0 %v1187, 32
        %v1412 = vpop.permute.xlu0 %1411
        %1415 = vrot.lane.b32.xlu0 %v1404, 48
        %v1416 = vpop.permute.xlu0 %1415
        %v1418 = vsel %vm687, %v753, %v1408
        %vm1419 = vcmask 261120
        %v1420 = vsel %vm1419, %v1418, %v1412
        %vm1421 = vcmask 392192
        %v1422 = vsel %vm1421, %v1420, %v1416
        %v1423 = vpack.c.bf16 %v1422, %v1422
        %v1424 = vld [vmem:[%s5] sm:$0xf]
        %v1425 = vld [vmem:[%s5 + $0x4] sm:$0xf]
        %v1426 = vld [vmem:[%s5 + $0x8] sm:$0xf]
        %v1427 = vld [vmem:[%s5 + $0xc] sm:$0xf]
        %v1428 = vld [vmem:[%s5 + $0x10] sm:$0xf]
        %v1429 = vld [vmem:[%s5 + $0x14] sm:$0xf]
        %v1430 = vld [vmem:[%s5 + $0x18] sm:$0xf]
        %v1431 = vld [vmem:[%s5 + $0x1c] sm:$0xf]
        %v1432 = vld [vmem:[%s6] sm:$0x1]
        %v1434 = vperm.slane %v1432, 0
        %v1444 = vunpack.c.l.b16 %v1424
        %v1445 = vunpack.c.l.b16 %v1425
        %v1446 = vunpack.c.l.b16 %v1426
        %v1447 = vunpack.c.l.b16 %v1427
        %v1448 = vunpack.c.l.b16 %v1428
        %v1449 = vunpack.c.l.b16 %v1429
        %v1450 = vunpack.c.l.b16 %v1430
        %v1451 = vunpack.c.l.b16 %v1431
        %v1452 = vpack.c.b16 %v1445, %v1444
        %v1453 = vpack.c.b16 %v1447, %v1446
        %v1454 = vpack.c.b16 %v1449, %v1448
        %v1455 = vpack.c.b16 %v1451, %v1450
        %v1461 = vsel %vm568, %v1423, 0
        %1463 = vmatpush.bf16.msra.mxu0 0
        %1464 = vmatpush.bf16.msra.mxu0 0
        %1465 = vmatpush.bf16.msra.mxu0 0
        %1466 = vmatpush.bf16.msra.mxu0 0
        %1467 = vmatpush.bf16.msra.mxu0 %v1455
        %1468 = vmatpush.bf16.msra.mxu0 %v1454
        %1469 = vmatpush.bf16.msra.mxu0 %v1453
        %1470 = vmatpush.bf16.msra.mxu0 %v1452
        %1471 = vmatmul.bf16.gmra.mxu0 %v1461
        %v1472 = vpop.f32.mrf.mxu0
        %v1473 = vadd.f32 %v1434, %v1472
        %v1474 = vpop.f32.mrf.mxu0
        %1475 = vdwg.mxu0
        %v1476 = vadd.f32 %v490, %v1473
        %s1477 = scalar_lea.vmem %s1, 1
        %v1478 = vld [vmem:[%s1477] sm:$0x1]
        %s1479 = scalar_lea.vmem %s2, 1
        %v1480 = vld [vmem:[%s1479] sm:$0x1]
        %v1481 = vsel %vm493, %v1476, 0.0
        %1482 = vadd.xlane.f32.xlu0 %v1481
        %v1483 = vpop.xlane.xlu0 %1482
        %v1484 = vmul.f32 %v1483, %v503
        %v1485 = vsub.f32 %v1476, %v1484
        %v1486 = vmul.f32 %v1485, %v1485
        %v1487 = vsel %vm493, %v1486, 0.0
        %1488 = vadd.xlane.f32.xlu0 %v1487
        %v1489 = vpop.xlane.xlu0 %1488
        %v1490 = vmul.f32 %v1489, %v503
        %v1491 = vadd.f32 %v1490, 1e-12
        %v1492 = vrsqrt.pop %v1491
        %v1493 = vmul.f32 %v1492, %v1491
        %v1494 = vmul.f32 %v1493, %v1492
        %v1495 = vmul.f32 0.5, %v1494
        %v1496 = vsub.f32 1.5, %v1495
        %v1497 = vmul.f32 %v1492, %v1496
        %vm1498 = vweird.f32 %v1491
        %vm1499 = vweird.f32 %v1492
        %vm1500 = vmor %vm1498, %vm1499
        %v1501 = vsel %vm1500, %v1492, %v1497
        %v1502 = vmul.f32 %v1485, %v1501
        %v1504 = vperm.slane %v1478, 0
        %v1506 = vmul.f32 %v1502, %v1504
        %v1508 = vperm.slane %v1480, 0
        %v1510 = vadd.f32 %v1506, %v1508
        %v1511 = vpack.c.bf16 %v1510, %v1510
        %v1512 = vld [vmem:[%s7] sm:$0xf]
        %v1513 = vld [vmem:[%s7 + $0x4] sm:$0xf]
        %v1514 = vld [vmem:[%s7 + $0x8] sm:$0xf]
        %v1515 = vld [vmem:[%s7 + $0xc] sm:$0xf]
        %v1516 = vld [vmem:[%s7 + $0x10] sm:$0xf]
        %v1517 = vld [vmem:[%s7 + $0x14] sm:$0xf]
        %v1518 = vld [vmem:[%s7 + $0x18] sm:$0xf]
        %v1519 = vld [vmem:[%s7 + $0x1c] sm:$0xf]
        %v1520 = vld [vmem:[%s8] sm:$0x1]
        %v1522 = vperm.slane %v1520, 0
        %v1532 = vunpack.c.l.b16 %v1512
        %v1533 = vunpack.c.l.b16 %v1513
        %v1534 = vunpack.c.l.b16 %v1514
        %v1535 = vunpack.c.l.b16 %v1515
        %v1536 = vunpack.c.l.b16 %v1516
        %v1537 = vunpack.c.l.b16 %v1517
        %v1538 = vunpack.c.l.b16 %v1518
        %v1539 = vunpack.c.l.b16 %v1519
        %v1540 = vpack.c.b16 %v1533, %v1532
        %v1541 = vpack.c.b16 %v1535, %v1534
        %v1542 = vpack.c.b16 %v1537, %v1536
        %v1543 = vpack.c.b16 %v1539, %v1538
        %v1549 = vsel %vm568, %v1511, 0
        %1551 = vmatpush.bf16.msra.mxu0 0
        %1552 = vmatpush.bf16.msra.mxu0 0
        %1553 = vmatpush.bf16.msra.mxu0 0
        %1554 = vmatpush.bf16.msra.mxu0 0
        %1555 = vmatpush.bf16.msra.mxu0 %v1543
        %1556 = vmatpush.bf16.msra.mxu0 %v1542
        %1557 = vmatpush.bf16.msra.mxu0 %v1541
        %1558 = vmatpush.bf16.msra.mxu0 %v1540
        %1559 = vmatmul.bf16.gmra.mxu0 %v1549
        %v1560 = vpop.f32.mrf.mxu0
        %v1561 = vadd.f32 %v1522, %v1560
        %v1562 = vpop.f32.mrf.mxu0
        %1563 = vdwg.mxu0
        %v1564 = vmul.f32 %v1561, %v1561
        %v1565 = vmul.f32 %v1561, %v1564
        %v1566 = vmul.f32 %v1565, 0.044715
        %v1567 = vadd.f32 %v1561, %v1566
        %v1568 = vmul.f32 %v1567, 0.7978846
        %v1569 = vtanh.pop %v1568
        %v1570 = vadd.f32 %v1569, 1.0
        %v1571 = vmul.f32 %v1570, 0.5
        %v1572 = vmul.f32 %v1561, %v1571
        %v1573 = vpack.c.bf16 %v1572, %v1572
        %v1574 = vld [vmem:[%s9] sm:$0xf]
        %v1575 = vld [vmem:[%s9 + $0x4] sm:$0xf]
        %v1576 = vld [vmem:[%s9 + $0x8] sm:$0xf]
        %v1577 = vld [vmem:[%s9 + $0xc] sm:$0xf]
        %v1578 = vld [vmem:[%s9 + $0x10] sm:$0xf]
        %v1579 = vld [vmem:[%s9 + $0x14] sm:$0xf]
        %v1580 = vld [vmem:[%s9 + $0x18] sm:$0xf]
        %v1581 = vld [vmem:[%s9 + $0x1c] sm:$0xf]
        %v1582 = vld [vmem:[%s9 + $0x20] sm:$0xf]
        %v1583 = vld [vmem:[%s9 + $0x24] sm:$0xf]
        %v1584 = vld [vmem:[%s9 + $0x28] sm:$0xf]
        %v1585 = vld [vmem:[%s9 + $0x2c] sm:$0xf]
        %v1586 = vld [vmem:[%s9 + $0x30] sm:$0xf]
        %v1587 = vld [vmem:[%s9 + $0x34] sm:$0xf]
        %v1588 = vld [vmem:[%s9 + $0x38] sm:$0xf]
        %v1589 = vld [vmem:[%s9 + $0x3c] sm:$0xf]
        %v1590 = vld [vmem:[%s10] sm:$0x1]
        %v1592 = vperm.slane %v1590, 0
        %v1610 = vunpack.c.l.b16 %v1574
        %v1611 = vunpack.c.l.b16 %v1575
        %v1612 = vunpack.c.l.b16 %v1576
        %v1613 = vunpack.c.l.b16 %v1577
        %v1614 = vunpack.c.l.b16 %v1578
        %v1615 = vunpack.c.l.b16 %v1579
        %v1616 = vunpack.c.l.b16 %v1580
        %v1617 = vunpack.c.l.b16 %v1581
        %v1618 = vunpack.c.l.b16 %v1582
        %v1619 = vunpack.c.l.b16 %v1583
        %v1620 = vunpack.c.l.b16 %v1584
        %v1621 = vunpack.c.l.b16 %v1585
        %v1622 = vunpack.c.l.b16 %v1586
        %v1623 = vunpack.c.l.b16 %v1587
        %v1624 = vunpack.c.l.b16 %v1588
        %v1625 = vunpack.c.l.b16 %v1589
        %v1626 = vpack.c.b16 %v1611, %v1610
        %v1627 = vpack.c.b16 %v1613, %v1612
        %v1628 = vpack.c.b16 %v1615, %v1614
        %v1629 = vpack.c.b16 %v1617, %v1616
        %v1630 = vpack.c.b16 %v1619, %v1618
        %v1631 = vpack.c.b16 %v1621, %v1620
        %v1632 = vpack.c.b16 %v1623, %v1622
        %v1633 = vpack.c.b16 %v1625, %v1624
        %1642 = vmatpush.bf16.msra.mxu0 %v1633
        %1643 = vmatpush.bf16.msra.mxu0 %v1632
        %1644 = vmatpush.bf16.msra.mxu0 %v1631
        %1645 = vmatpush.bf16.msra.mxu0 %v1630
        %1646 = vmatpush.bf16.msra.mxu0 %v1629
        %1647 = vmatpush.bf16.msra.mxu0 %v1628
        %1648 = vmatpush.bf16.msra.mxu0 %v1627
        %1649 = vmatpush.bf16.msra.mxu0 %v1626
        %1650 = vmatmul.bf16.gmra.mxu0 %v1573
        %v1651 = vpop.f32.mrf.mxu0
        %v1652 = vadd.f32 %v1592, %v1651
        %v1653 = vpop.f32.mrf.mxu0
        %1654 = vdwg.mxu0
        %v1655 = vadd.f32 %v1476, %v1652
        %s1656 = scalar_lea.vmem %s1, 2
        %v1657 = vld [vmem:[%s1656] sm:$0x1]
        %s1658 = scalar_lea.vmem %s2, 2
        %v1659 = vld [vmem:[%s1658] sm:$0x1]
        %v1660 = vsel %vm493, %v1655, 0.0
        %1661 = vadd.xlane.f32.xlu0 %v1660
        %v1662 = vpop.xlane.xlu0 %1661
        %v1663 = vmul.f32 %v1662, %v503
        %v1664 = vsub.f32 %v1655, %v1663
        %v1665 = vmul.f32 %v1664, %v1664
        %v1666 = vsel %vm493, %v1665, 0.0
        %1667 = vadd.xlane.f32.xlu0 %v1666
        %v1668 = vpop.xlane.xlu0 %1667
        %v1669 = vmul.f32 %v1668, %v503
        %v1670 = vadd.f32 %v1669, 1e-12
        %v1671 = vrsqrt.pop %v1670
        %v1672 = vmul.f32 %v1671, %v1670
        %v1673 = vmul.f32 %v1672, %v1671
        %v1674 = vmul.f32 0.5, %v1673
        %v1675 = vsub.f32 1.5, %v1674
        %v1676 = vmul.f32 %v1671, %v1675
        %vm1677 = vweird.f32 %v1670
        %vm1678 = vweird.f32 %v1671
        %vm1679 = vmor %vm1677, %vm1678
        %v1680 = vsel %vm1679, %v1671, %v1676
        %v1681 = vmul.f32 %v1664, %v1680
        %v1683 = vperm.slane %v1657, 0
        %v1685 = vmul.f32 %v1681, %v1683
        %v1687 = vperm.slane %v1659, 0
        %v1689 = vadd.f32 %v1685, %v1687
        %v1690 = vpack.c.bf16 %v1689, %v1689
        %s1691 = scalar_lea.vmem %s3, 384
        %v1692 = vld [vmem:[%s1691] sm:$0xf]
        %v1693 = vld [vmem:[%s1691 + $0x4] sm:$0xf]
        %v1694 = vld [vmem:[%s1691 + $0x8] sm:$0xf]
        %v1695 = vld [vmem:[%s1691 + $0xc] sm:$0xf]
        %v1696 = vld [vmem:[%s1691 + $0x10] sm:$0xf]
        %v1697 = vld [vmem:[%s1691 + $0x14] sm:$0xf]
        %v1698 = vld [vmem:[%s1691 + $0x18] sm:$0xf]
        %v1699 = vld [vmem:[%s1691 + $0x1c] sm:$0xf]
        %s1700 = scalar_lea.vmem %s4, 12
        %v1701 = vld [vmem:[%s1700] sm:$0x1]
        %v1703 = vperm.slane %v1701, 0
        %v1713 = vunpack.c.l.b16 %v1692
        %v1714 = vunpack.c.l.b16 %v1693
        %v1715 = vunpack.c.l.b16 %v1694
        %v1716 = vunpack.c.l.b16 %v1695
        %v1717 = vunpack.c.l.b16 %v1696
        %v1718 = vunpack.c.l.b16 %v1697
        %v1719 = vunpack.c.l.b16 %v1698
        %v1720 = vunpack.c.l.b16 %v1699
        %v1721 = vpack.c.b16 %v1714, %v1713
        %v1722 = vpack.c.b16 %v1716, %v1715
        %v1723 = vpack.c.b16 %v1718, %v1717
        %v1724 = vpack.c.b16 %v1720, %v1719
        %v1730 = vsel %vm568, %v1690, 0
        %1732 = vmatpush.bf16.msra.mxu0 0
        %1733 = vmatpush.bf16.msra.mxu0 0
        %1734 = vmatpush.bf16.msra.mxu0 0
        %1735 = vmatpush.bf16.msra.mxu0 0
        %1736 = vmatpush.bf16.msra.mxu0 %v1724
        %1737 = vmatpush.bf16.msra.mxu0 %v1723
        %1738 = vmatpush.bf16.msra.mxu0 %v1722
        %1739 = vmatpush.bf16.msra.mxu0 %v1721
        %1740 = vmatmul.bf16.gmra.mxu0 %v1730
        %v1741 = vpop.f32.mrf.mxu0
        %v1742 = vadd.f32 %v1703, %v1741
        %v1743 = vpop.f32.mrf.mxu0
        %1744 = vdwg.mxu0
        %s1745 = scalar_lea.vmem %s3, 512
        %v1746 = vld [vmem:[%s1745] sm:$0xf]
        %v1747 = vld [vmem:[%s1745 + $0x4] sm:$0xf]
        %v1748 = vld [vmem:[%s1745 + $0x8] sm:$0xf]
        %v1749 = vld [vmem:[%s1745 + $0xc] sm:$0xf]
        %v1750 = vld [vmem:[%s1745 + $0x10] sm:$0xf]
        %v1751 = vld [vmem:[%s1745 + $0x14] sm:$0xf]
        %v1752 = vld [vmem:[%s1745 + $0x18] sm:$0xf]
        %v1753 = vld [vmem:[%s1745 + $0x1c] sm:$0xf]
        %s1754 = scalar_lea.vmem %s4, 16
        %v1755 = vld [vmem:[%s1754] sm:$0x1]
        %v1757 = vperm.slane %v1755, 0
        %v1767 = vunpack.c.l.b16 %v1746
        %v1768 = vunpack.c.l.b16 %v1747
        %v1769 = vunpack.c.l.b16 %v1748
        %v1770 = vunpack.c.l.b16 %v1749
        %v1771 = vunpack.c.l.b16 %v1750
        %v1772 = vunpack.c.l.b16 %v1751
        %v1773 = vunpack.c.l.b16 %v1752
        %v1774 = vunpack.c.l.b16 %v1753
        %v1775 = vpack.c.b16 %v1768, %v1767
        %v1776 = vpack.c.b16 %v1770, %v1769
        %v1777 = vpack.c.b16 %v1772, %v1771
        %v1778 = vpack.c.b16 %v1774, %v1773
        %1783 = vmatpush.bf16.msra.mxu0 0
        %1784 = vmatpush.bf16.msra.mxu0 0
        %1785 = vmatpush.bf16.msra.mxu0 0
        %1786 = vmatpush.bf16.msra.mxu0 0
        %1787 = vmatpush.bf16.msra.mxu0 %v1778
        %1788 = vmatpush.bf16.msra.mxu0 %v1777
        %1789 = vmatpush.bf16.msra.mxu0 %v1776
        %1790 = vmatpush.bf16.msra.mxu0 %v1775
        %1791 = vmatmul.bf16.gmra.mxu0 %v1730
        %v1792 = vpop.f32.mrf.mxu0
        %v1793 = vadd.f32 %v1757, %v1792
        %v1794 = vpop.f32.mrf.mxu0
        %1795 = vdwg.mxu0
        %s1796 = scalar_lea.vmem %s3, 640
        %v1797 = vld [vmem:[%s1796] sm:$0xf]
        %v1798 = vld [vmem:[%s1796 + $0x4] sm:$0xf]
        %v1799 = vld [vmem:[%s1796 + $0x8] sm:$0xf]
        %v1800 = vld [vmem:[%s1796 + $0xc] sm:$0xf]
        %v1801 = vld [vmem:[%s1796 + $0x10] sm:$0xf]
        %v1802 = vld [vmem:[%s1796 + $0x14] sm:$0xf]
        %v1803 = vld [vmem:[%s1796 + $0x18] sm:$0xf]
        %v1804 = vld [vmem:[%s1796 + $0x1c] sm:$0xf]
        %s1805 = scalar_lea.vmem %s4, 20
        %v1806 = vld [vmem:[%s1805] sm:$0x1]
        %v1808 = vperm.slane %v1806, 0
        %v1818 = vunpack.c.l.b16 %v1797
        %v1819 = vunpack.c.l.b16 %v1798
        %v1820 = vunpack.c.l.b16 %v1799
        %v1821 = vunpack.c.l.b16 %v1800
        %v1822 = vunpack.c.l.b16 %v1801
        %v1823 = vunpack.c.l.b16 %v1802
        %v1824 = vunpack.c.l.b16 %v1803
        %v1825 = vunpack.c.l.b16 %v1804
        %v1826 = vpack.c.b16 %v1819, %v1818
        %v1827 = vpack.c.b16 %v1821, %v1820
        %v1828 = vpack.c.b16 %v1823, %v1822
        %v1829 = vpack.c.b16 %v1825, %v1824
        %1834 = vmatpush.bf16.msra.mxu0 0
        %1835 = vmatpush.bf16.msra.mxu0 0
        %1836 = vmatpush.bf16.msra.mxu0 0
        %1837 = vmatpush.bf16.msra.mxu0 0
        %1838 = vmatpush.bf16.msra.mxu0 %v1829
        %1839 = vmatpush.bf16.msra.mxu0 %v1828
        %1840 = vmatpush.bf16.msra.mxu0 %v1827
        %1841 = vmatpush.bf16.msra.mxu0 %v1826
        %1842 = vmatmul.bf16.gmra.mxu0 %v1730
        %v1843 = vpop.f32.mrf.mxu0
        %v1844 = vadd.f32 %v1808, %v1843
        %v1845 = vpop.f32.mrf.mxu0
        %1846 = vdwg.mxu0
        %v1848 = vsel %vm687, %v1742, 0
        %v1851 = vsel %vm687, %v1793, 0
        %1853 = vmatpush.xpose.msra.mxu0 0.0
        %1854 = vmatpush.xpose.msra.mxu0 0.0
        %1855 = vmatpush.xpose.msra.mxu0 0.0
        %1856 = vmatpush.xpose.msra.mxu0 0.0
        %1857 = vmatpush.xpose.msra.mxu0 0.0
        %1858 = vmatpush.xpose.msra.mxu0 0.0
        %1859 = vmatpush.xpose.msra.mxu0 0.0
        %1860 = vmatpush.xpose.msra.mxu0 0.0
        %1861 = vmatpush.xpose.msra.mxu0 0.0
        %1862 = vmatpush.xpose.msra.mxu0 0.0
        %1863 = vmatpush.xpose.msra.mxu0 0.0
        %1864 = vmatpush.xpose.msra.mxu0 0.0
        %1865 = vmatpush.xpose.msra.mxu0 0.0
        %1866 = vmatpush.xpose.msra.mxu0 0.0
        %1867 = vmatpush.xpose.msra.mxu0 0.0
        %1868 = vmatpush.xpose.msra.mxu0 %v1851
        %1869 = vmatmul.f32.gmra.mxu0 %v1848
        %v1870 = vpop.f32.mrf.mxu0
        %v1871 = vadd.f32 0.0, %v1870
        %1872 = vdwg.mxu0
        %v1873 = vmul.f32 %v1871, 0.25
        %v1874 = vsel %vm715, %v1873, -inf
        %1875 = vmax.xlane.f32.xlu0 %v1874
        %v1876 = vpop.xlane.xlu0 %1875
        %v1877 = vsub.f32 %v1873, %v1876
        %v1878 = vmul.f32 %v1877, 1.442695
        %v1879 = vpow.pop %v1878
        %v1880 = vsel %vm715, %v1879, 0.0
        %1881 = vadd.xlane.f32.xlu0 %v1880
        %v1882 = vpop.xlane.xlu0 %1881
        %v1883 = vrcp.pop %v1882
        %v1884 = vmul.f32 %v1879, %v1883
        %v1886 = vsel %vm727, %v1884, 0
        %v1889 = vsel %vm731, %v1844, 0
        %1891 = vmatpush.msra.mxu0 0.0
        %1892 = vmatpush.msra.mxu0 0.0
        %1893 = vmatpush.msra.mxu0 0.0
        %1894 = vmatpush.msra.mxu0 0.0
        %1895 = vmatpush.msra.mxu0 0.0
        %1896 = vmatpush.msra.mxu0 0.0
        %1897 = vmatpush.msra.mxu0 0.0
        %1898 = vmatpush.msra.mxu0 0.0
        %1899 = vmatpush.msra.mxu0 0.0
        %1900 = vmatpush.msra.mxu0 0.0
        %1901 = vmatpush.msra.mxu0 0.0
        %1902 = vmatpush.msra.mxu0 0.0
        %1903 = vmatpush.msra.mxu0 0.0
        %1904 = vmatpush.msra.mxu0 0.0
        %1905 = vmatpush.msra.mxu0 0.0
        %1906 = vmatpush.msra.mxu0 %v1889
        %1907 = vmatmul.f32.gmra.mxu0 %v1886
        %v1908 = vpop.f32.mrf.mxu0
        %v1909 = vadd.f32 0.0, %v1908
        %1910 = vdwg.mxu0
        %s1911 = scalar_lea.vmem %s3, 416
        %v1912 = vld [vmem:[%s1911] sm:$0xf]
        %v1913 = vld [vmem:[%s1911 + $0x4] sm:$0xf]
        %v1914 = vld [vmem:[%s1911 + $0x8] sm:$0xf]
        %v1915 = vld [vmem:[%s1911 + $0xc] sm:$0xf]
        %v1916 = vld [vmem:[%s1911 + $0x10] sm:$0xf]
        %v1917 = vld [vmem:[%s1911 + $0x14] sm:$0xf]
        %v1918 = vld [vmem:[%s1911 + $0x18] sm:$0xf]
        %v1919 = vld [vmem:[%s1911 + $0x1c] sm:$0xf]
        %s1920 = scalar_lea.vmem %s4, 13
        %v1921 = vld [vmem:[%s1920] sm:$0x1]
        %v1923 = vperm.slane %v1921, 0
        %v1933 = vunpack.c.l.b16 %v1912
        %v1934 = vunpack.c.l.b16 %v1913
        %v1935 = vunpack.c.l.b16 %v1914
        %v1936 = vunpack.c.l.b16 %v1915
        %v1937 = vunpack.c.l.b16 %v1916
        %v1938 = vunpack.c.l.b16 %v1917
        %v1939 = vunpack.c.l.b16 %v1918
        %v1940 = vunpack.c.l.b16 %v1919
        %v1941 = vpack.c.b16 %v1934, %v1933
        %v1942 = vpack.c.b16 %v1936, %v1935
        %v1943 = vpack.c.b16 %v1938, %v1937
        %v1944 = vpack.c.b16 %v1940, %v1939
        %1949 = vmatpush.bf16.msra.mxu0 0
        %1950 = vmatpush.bf16.msra.mxu0 0
        %1951 = vmatpush.bf16.msra.mxu0 0
        %1952 = vmatpush.bf16.msra.mxu0 0
        %1953 = vmatpush.bf16.msra.mxu0 %v1944
        %1954 = vmatpush.bf16.msra.mxu0 %v1943
        %1955 = vmatpush.bf16.msra.mxu0 %v1942
        %1956 = vmatpush.bf16.msra.mxu0 %v1941
        %1957 = vmatmul.bf16.gmra.mxu0 %v1730
        %v1958 = vpop.f32.mrf.mxu0
        %v1959 = vadd.f32 %v1923, %v1958
        %v1960 = vpop.f32.mrf.mxu0
        %1961 = vdwg.mxu0
        %s1962 = scalar_lea.vmem %s3, 544
        %v1963 = vld [vmem:[%s1962] sm:$0xf]
        %v1964 = vld [vmem:[%s1962 + $0x4] sm:$0xf]
        %v1965 = vld [vmem:[%s1962 + $0x8] sm:$0xf]
        %v1966 = vld [vmem:[%s1962 + $0xc] sm:$0xf]
        %v1967 = vld [vmem:[%s1962 + $0x10] sm:$0xf]
        %v1968 = vld [vmem:[%s1962 + $0x14] sm:$0xf]
        %v1969 = vld [vmem:[%s1962 + $0x18] sm:$0xf]
        %v1970 = vld [vmem:[%s1962 + $0x1c] sm:$0xf]
        %s1971 = scalar_lea.vmem %s4, 17
        %v1972 = vld [vmem:[%s1971] sm:$0x1]
        %v1974 = vperm.slane %v1972, 0
        %v1984 = vunpack.c.l.b16 %v1963
        %v1985 = vunpack.c.l.b16 %v1964
        %v1986 = vunpack.c.l.b16 %v1965
        %v1987 = vunpack.c.l.b16 %v1966
        %v1988 = vunpack.c.l.b16 %v1967
        %v1989 = vunpack.c.l.b16 %v1968
        %v1990 = vunpack.c.l.b16 %v1969
        %v1991 = vunpack.c.l.b16 %v1970
        %v1992 = vpack.c.b16 %v1985, %v1984
        %v1993 = vpack.c.b16 %v1987, %v1986
        %v1994 = vpack.c.b16 %v1989, %v1988
        %v1995 = vpack.c.b16 %v1991, %v1990
        %2000 = vmatpush.bf16.msra.mxu0 0
        %2001 = vmatpush.bf16.msra.mxu0 0
        %2002 = vmatpush.bf16.msra.mxu0 0
        %2003 = vmatpush.bf16.msra.mxu0 0
        %2004 = vmatpush.bf16.msra.mxu0 %v1995
        %2005 = vmatpush.bf16.msra.mxu0 %v1994
        %2006 = vmatpush.bf16.msra.mxu0 %v1993
        %2007 = vmatpush.bf16.msra.mxu0 %v1992
        %2008 = vmatmul.bf16.gmra.mxu0 %v1730
        %v2009 = vpop.f32.mrf.mxu0
        %v2010 = vadd.f32 %v1974, %v2009
        %v2011 = vpop.f32.mrf.mxu0
        %2012 = vdwg.mxu0
        %s2013 = scalar_lea.vmem %s3, 672
        %v2014 = vld [vmem:[%s2013] sm:$0xf]
        %v2015 = vld [vmem:[%s2013 + $0x4] sm:$0xf]
        %v2016 = vld [vmem:[%s2013 + $0x8] sm:$0xf]
        %v2017 = vld [vmem:[%s2013 + $0xc] sm:$0xf]
        %v2018 = vld [vmem:[%s2013 + $0x10] sm:$0xf]
        %v2019 = vld [vmem:[%s2013 + $0x14] sm:$0xf]
        %v2020 = vld [vmem:[%s2013 + $0x18] sm:$0xf]
        %v2021 = vld [vmem:[%s2013 + $0x1c] sm:$0xf]
        %s2022 = scalar_lea.vmem %s4, 21
        %v2023 = vld [vmem:[%s2022] sm:$0x1]
        %v2025 = vperm.slane %v2023, 0
        %v2035 = vunpack.c.l.b16 %v2014
        %v2036 = vunpack.c.l.b16 %v2015
        %v2037 = vunpack.c.l.b16 %v2016
        %v2038 = vunpack.c.l.b16 %v2017
        %v2039 = vunpack.c.l.b16 %v2018
        %v2040 = vunpack.c.l.b16 %v2019
        %v2041 = vunpack.c.l.b16 %v2020
        %v2042 = vunpack.c.l.b16 %v2021
        %v2043 = vpack.c.b16 %v2036, %v2035
        %v2044 = vpack.c.b16 %v2038, %v2037
        %v2045 = vpack.c.b16 %v2040, %v2039
        %v2046 = vpack.c.b16 %v2042, %v2041
        %2051 = vmatpush.bf16.msra.mxu0 0
        %2052 = vmatpush.bf16.msra.mxu0 0
        %2053 = vmatpush.bf16.msra.mxu0 0
        %2054 = vmatpush.bf16.msra.mxu0 0
        %2055 = vmatpush.bf16.msra.mxu0 %v2046
        %2056 = vmatpush.bf16.msra.mxu0 %v2045
        %2057 = vmatpush.bf16.msra.mxu0 %v2044
        %2058 = vmatpush.bf16.msra.mxu0 %v2043
        %2059 = vmatmul.bf16.gmra.mxu0 %v1730
        %v2060 = vpop.f32.mrf.mxu0
        %v2061 = vadd.f32 %v2025, %v2060
        %v2062 = vpop.f32.mrf.mxu0
        %2063 = vdwg.mxu0
        %v2065 = vsel %vm687, %v1959, 0
        %v2068 = vsel %vm687, %v2010, 0
        %2070 = vmatpush.xpose.msra.mxu0 0.0
        %2071 = vmatpush.xpose.msra.mxu0 0.0
        %2072 = vmatpush.xpose.msra.mxu0 0.0
        %2073 = vmatpush.xpose.msra.mxu0 0.0
        %2074 = vmatpush.xpose.msra.mxu0 0.0
        %2075 = vmatpush.xpose.msra.mxu0 0.0
        %2076 = vmatpush.xpose.msra.mxu0 0.0
        %2077 = vmatpush.xpose.msra.mxu0 0.0
        %2078 = vmatpush.xpose.msra.mxu0 0.0
        %2079 = vmatpush.xpose.msra.mxu0 0.0
        %2080 = vmatpush.xpose.msra.mxu0 0.0
        %2081 = vmatpush.xpose.msra.mxu0 0.0
        %2082 = vmatpush.xpose.msra.mxu0 0.0
        %2083 = vmatpush.xpose.msra.mxu0 0.0
        %2084 = vmatpush.xpose.msra.mxu0 0.0
        %2085 = vmatpush.xpose.msra.mxu0 %v2068
        %2086 = vmatmul.f32.gmra.mxu0 %v2065
        %v2087 = vpop.f32.mrf.mxu0
        %v2088 = vadd.f32 0.0, %v2087
        %2089 = vdwg.mxu0
        %v2090 = vmul.f32 %v2088, 0.25
        %v2091 = vsel %vm715, %v2090, -inf
        %2092 = vmax.xlane.f32.xlu0 %v2091
        %v2093 = vpop.xlane.xlu0 %2092
        %v2094 = vsub.f32 %v2090, %v2093
        %v2095 = vmul.f32 %v2094, 1.442695
        %v2096 = vpow.pop %v2095
        %v2097 = vsel %vm715, %v2096, 0.0
        %2098 = vadd.xlane.f32.xlu0 %v2097
        %v2099 = vpop.xlane.xlu0 %2098
        %v2100 = vrcp.pop %v2099
        %v2101 = vmul.f32 %v2096, %v2100
        %v2103 = vsel %vm727, %v2101, 0
        %v2106 = vsel %vm731, %v2061, 0
        %2108 = vmatpush.msra.mxu0 0.0
        %2109 = vmatpush.msra.mxu0 0.0
        %2110 = vmatpush.msra.mxu0 0.0
        %2111 = vmatpush.msra.mxu0 0.0
        %2112 = vmatpush.msra.mxu0 0.0
        %2113 = vmatpush.msra.mxu0 0.0
        %2114 = vmatpush.msra.mxu0 0.0
        %2115 = vmatpush.msra.mxu0 0.0
        %2116 = vmatpush.msra.mxu0 0.0
        %2117 = vmatpush.msra.mxu0 0.0
        %2118 = vmatpush.msra.mxu0 0.0
        %2119 = vmatpush.msra.mxu0 0.0
        %2120 = vmatpush.msra.mxu0 0.0
        %2121 = vmatpush.msra.mxu0 0.0
        %2122 = vmatpush.msra.mxu0 0.0
        %2123 = vmatpush.msra.mxu0 %v2106
        %2124 = vmatmul.f32.gmra.mxu0 %v2103
        %v2125 = vpop.f32.mrf.mxu0
        %v2126 = vadd.f32 0.0, %v2125
        %2127 = vdwg.mxu0
        %s2128 = scalar_lea.vmem %s3, 448
        %v2129 = vld [vmem:[%s2128] sm:$0xf]
        %v2130 = vld [vmem:[%s2128 + $0x4] sm:$0xf]
        %v2131 = vld [vmem:[%s2128 + $0x8] sm:$0xf]
        %v2132 = vld [vmem:[%s2128 + $0xc] sm:$0xf]
        %v2133 = vld [vmem:[%s2128 + $0x10] sm:$0xf]
        %v2134 = vld [vmem:[%s2128 + $0x14] sm:$0xf]
        %v2135 = vld [vmem:[%s2128 + $0x18] sm:$0xf]
        %v2136 = vld [vmem:[%s2128 + $0x1c] sm:$0xf]
        %s2137 = scalar_lea.vmem %s4, 14
        %v2138 = vld [vmem:[%s2137] sm:$0x1]
        %v2140 = vperm.slane %v2138, 0
        %v2150 = vunpack.c.l.b16 %v2129
        %v2151 = vunpack.c.l.b16 %v2130
        %v2152 = vunpack.c.l.b16 %v2131
        %v2153 = vunpack.c.l.b16 %v2132
        %v2154 = vunpack.c.l.b16 %v2133
        %v2155 = vunpack.c.l.b16 %v2134
        %v2156 = vunpack.c.l.b16 %v2135
        %v2157 = vunpack.c.l.b16 %v2136
        %v2158 = vpack.c.b16 %v2151, %v2150
        %v2159 = vpack.c.b16 %v2153, %v2152
        %v2160 = vpack.c.b16 %v2155, %v2154
        %v2161 = vpack.c.b16 %v2157, %v2156
        %2166 = vmatpush.bf16.msra.mxu0 0
        %2167 = vmatpush.bf16.msra.mxu0 0
        %2168 = vmatpush.bf16.msra.mxu0 0
        %2169 = vmatpush.bf16.msra.mxu0 0
        %2170 = vmatpush.bf16.msra.mxu0 %v2161
        %2171 = vmatpush.bf16.msra.mxu0 %v2160
        %2172 = vmatpush.bf16.msra.mxu0 %v2159
        %2173 = vmatpush.bf16.msra.mxu0 %v2158
        %2174 = vmatmul.bf16.gmra.mxu0 %v1730
        %v2175 = vpop.f32.mrf.mxu0
        %v2176 = vadd.f32 %v2140, %v2175
        %v2177 = vpop.f32.mrf.mxu0
        %2178 = vdwg.mxu0
        %s2179 = scalar_lea.vmem %s3, 576
        %v2180 = vld [vmem:[%s2179] sm:$0xf]
        %v2181 = vld [vmem:[%s2179 + $0x4] sm:$0xf]
        %v2182 = vld [vmem:[%s2179 + $0x8] sm:$0xf]
        %v2183 = vld [vmem:[%s2179 + $0xc] sm:$0xf]
        %v2184 = vld [vmem:[%s2179 + $0x10] sm:$0xf]
        %v2185 = vld [vmem:[%s2179 + $0x14] sm:$0xf]
        %v2186 = vld [vmem:[%s2179 + $0x18] sm:$0xf]
        %v2187 = vld [vmem:[%s2179 + $0x1c] sm:$0xf]
        %s2188 = scalar_lea.vmem %s4, 18
        %v2189 = vld [vmem:[%s2188] sm:$0x1]
        %v2191 = vperm.slane %v2189, 0
        %v2201 = vunpack.c.l.b16 %v2180
        %v2202 = vunpack.c.l.b16 %v2181
        %v2203 = vunpack.c.l.b16 %v2182
        %v2204 = vunpack.c.l.b16 %v2183
        %v2205 = vunpack.c.l.b16 %v2184
        %v2206 = vunpack.c.l.b16 %v2185
        %v2207 = vunpack.c.l.b16 %v2186
        %v2208 = vunpack.c.l.b16 %v2187
        %v2209 = vpack.c.b16 %v2202, %v2201
        %v2210 = vpack.c.b16 %v2204, %v2203
        %v2211 = vpack.c.b16 %v2206, %v2205
        %v2212 = vpack.c.b16 %v2208, %v2207
        %2217 = vmatpush.bf16.msra.mxu0 0
        %2218 = vmatpush.bf16.msra.mxu0 0
        %2219 = vmatpush.bf16.msra.mxu0 0
        %2220 = vmatpush.bf16.msra.mxu0 0
        %2221 = vmatpush.bf16.msra.mxu0 %v2212
        %2222 = vmatpush.bf16.msra.mxu0 %v2211
        %2223 = vmatpush.bf16.msra.mxu0 %v2210
        %2224 = vmatpush.bf16.msra.mxu0 %v2209
        %2225 = vmatmul.bf16.gmra.mxu0 %v1730
        %v2226 = vpop.f32.mrf.mxu0
        %v2227 = vadd.f32 %v2191, %v2226
        %v2228 = vpop.f32.mrf.mxu0
        %2229 = vdwg.mxu0
        %s2230 = scalar_lea.vmem %s3, 704
        %v2231 = vld [vmem:[%s2230] sm:$0xf]
        %v2232 = vld [vmem:[%s2230 + $0x4] sm:$0xf]
        %v2233 = vld [vmem:[%s2230 + $0x8] sm:$0xf]
        %v2234 = vld [vmem:[%s2230 + $0xc] sm:$0xf]
        %v2235 = vld [vmem:[%s2230 + $0x10] sm:$0xf]
        %v2236 = vld [vmem:[%s2230 + $0x14] sm:$0xf]
        %v2237 = vld [vmem:[%s2230 + $0x18] sm:$0xf]
        %v2238 = vld [vmem:[%s2230 + $0x1c] sm:$0xf]
        %s2239 = scalar_lea.vmem %s4, 22
        %v2240 = vld [vmem:[%s2239] sm:$0x1]
        %v2242 = vperm.slane %v2240, 0
        %v2252 = vunpack.c.l.b16 %v2231
        %v2253 = vunpack.c.l.b16 %v2232
        %v2254 = vunpack.c.l.b16 %v2233
        %v2255 = vunpack.c.l.b16 %v2234
        %v2256 = vunpack.c.l.b16 %v2235
        %v2257 = vunpack.c.l.b16 %v2236
        %v2258 = vunpack.c.l.b16 %v2237
        %v2259 = vunpack.c.l.b16 %v2238
        %v2260 = vpack.c.b16 %v2253, %v2252
        %v2261 = vpack.c.b16 %v2255, %v2254
        %v2262 = vpack.c.b16 %v2257, %v2256
        %v2263 = vpack.c.b16 %v2259, %v2258
        %2268 = vmatpush.bf16.msra.mxu0 0
        %2269 = vmatpush.bf16.msra.mxu0 0
        %2270 = vmatpush.bf16.msra.mxu0 0
        %2271 = vmatpush.bf16.msra.mxu0 0
        %2272 = vmatpush.bf16.msra.mxu0 %v2263
        %2273 = vmatpush.bf16.msra.mxu0 %v2262
        %2274 = vmatpush.bf16.msra.mxu0 %v2261
        %2275 = vmatpush.bf16.msra.mxu0 %v2260
        %2276 = vmatmul.bf16.gmra.mxu0 %v1730
        %v2277 = vpop.f32.mrf.mxu0
        %v2278 = vadd.f32 %v2242, %v2277
        %v2279 = vpop.f32.mrf.mxu0
        %2280 = vdwg.mxu0
        %v2282 = vsel %vm687, %v2176, 0
        %v2285 = vsel %vm687, %v2227, 0
        %2287 = vmatpush.xpose.msra.mxu0 0.0
        %2288 = vmatpush.xpose.msra.mxu0 0.0
        %2289 = vmatpush.xpose.msra.mxu0 0.0
        %2290 = vmatpush.xpose.msra.mxu0 0.0
        %2291 = vmatpush.xpose.msra.mxu0 0.0
        %2292 = vmatpush.xpose.msra.mxu0 0.0
        %2293 = vmatpush.xpose.msra.mxu0 0.0
        %2294 = vmatpush.xpose.msra.mxu0 0.0
        %2295 = vmatpush.xpose.msra.mxu0 0.0
        %2296 = vmatpush.xpose.msra.mxu0 0.0
        %2297 = vmatpush.xpose.msra.mxu0 0.0
        %2298 = vmatpush.xpose.msra.mxu0 0.0
        %2299 = vmatpush.xpose.msra.mxu0 0.0
        %2300 = vmatpush.xpose.msra.mxu0 0.0
        %2301 = vmatpush.xpose.msra.mxu0 0.0
        %2302 = vmatpush.xpose.msra.mxu0 %v2285
        %2303 = vmatmul.f32.gmra.mxu0 %v2282
        %v2304 = vpop.f32.mrf.mxu0
        %v2305 = vadd.f32 0.0, %v2304
        %2306 = vdwg.mxu0
        %v2307 = vmul.f32 %v2305, 0.25
        %v2308 = vsel %vm715, %v2307, -inf
        %2309 = vmax.xlane.f32.xlu0 %v2308
        %v2310 = vpop.xlane.xlu0 %2309
        %v2311 = vsub.f32 %v2307, %v2310
        %v2312 = vmul.f32 %v2311, 1.442695
        %v2313 = vpow.pop %v2312
        %v2314 = vsel %vm715, %v2313, 0.0
        %2315 = vadd.xlane.f32.xlu0 %v2314
        %v2316 = vpop.xlane.xlu0 %2315
        %v2317 = vrcp.pop %v2316
        %v2318 = vmul.f32 %v2313, %v2317
        %v2320 = vsel %vm727, %v2318, 0
        %v2323 = vsel %vm731, %v2278, 0
        %2325 = vmatpush.msra.mxu0 0.0
        %2326 = vmatpush.msra.mxu0 0.0
        %2327 = vmatpush.msra.mxu0 0.0
        %2328 = vmatpush.msra.mxu0 0.0
        %2329 = vmatpush.msra.mxu0 0.0
        %2330 = vmatpush.msra.mxu0 0.0
        %2331 = vmatpush.msra.mxu0 0.0
        %2332 = vmatpush.msra.mxu0 0.0
        %2333 = vmatpush.msra.mxu0 0.0
        %2334 = vmatpush.msra.mxu0 0.0
        %2335 = vmatpush.msra.mxu0 0.0
        %2336 = vmatpush.msra.mxu0 0.0
        %2337 = vmatpush.msra.mxu0 0.0
        %2338 = vmatpush.msra.mxu0 0.0
        %2339 = vmatpush.msra.mxu0 0.0
        %2340 = vmatpush.msra.mxu0 %v2323
        %2341 = vmatmul.f32.gmra.mxu0 %v2320
        %v2342 = vpop.f32.mrf.mxu0
        %v2343 = vadd.f32 0.0, %v2342
        %2344 = vdwg.mxu0
        %s2345 = scalar_lea.vmem %s3, 480
        %v2346 = vld [vmem:[%s2345] sm:$0xf]
        %v2347 = vld [vmem:[%s2345 + $0x4] sm:$0xf]
        %v2348 = vld [vmem:[%s2345 + $0x8] sm:$0xf]
        %v2349 = vld [vmem:[%s2345 + $0xc] sm:$0xf]
        %v2350 = vld [vmem:[%s2345 + $0x10] sm:$0xf]
        %v2351 = vld [vmem:[%s2345 + $0x14] sm:$0xf]
        %v2352 = vld [vmem:[%s2345 + $0x18] sm:$0xf]
        %v2353 = vld [vmem:[%s2345 + $0x1c] sm:$0xf]
        %s2354 = scalar_lea.vmem %s4, 15
        %v2355 = vld [vmem:[%s2354] sm:$0x1]
        %v2357 = vperm.slane %v2355, 0
        %v2367 = vunpack.c.l.b16 %v2346
        %v2368 = vunpack.c.l.b16 %v2347
        %v2369 = vunpack.c.l.b16 %v2348
        %v2370 = vunpack.c.l.b16 %v2349
        %v2371 = vunpack.c.l.b16 %v2350
        %v2372 = vunpack.c.l.b16 %v2351
        %v2373 = vunpack.c.l.b16 %v2352
        %v2374 = vunpack.c.l.b16 %v2353
        %v2375 = vpack.c.b16 %v2368, %v2367
        %v2376 = vpack.c.b16 %v2370, %v2369
        %v2377 = vpack.c.b16 %v2372, %v2371
        %v2378 = vpack.c.b16 %v2374, %v2373
        %2383 = vmatpush.bf16.msra.mxu0 0
        %2384 = vmatpush.bf16.msra.mxu0 0
        %2385 = vmatpush.bf16.msra.mxu0 0
        %2386 = vmatpush.bf16.msra.mxu0 0
        %2387 = vmatpush.bf16.msra.mxu0 %v2378
        %2388 = vmatpush.bf16.msra.mxu0 %v2377
        %2389 = vmatpush.bf16.msra.mxu0 %v2376
        %2390 = vmatpush.bf16.msra.mxu0 %v2375
        %2391 = vmatmul.bf16.gmra.mxu0 %v1730
        %v2392 = vpop.f32.mrf.mxu0
        %v2393 = vadd.f32 %v2357, %v2392
        %v2394 = vpop.f32.mrf.mxu0
        %2395 = vdwg.mxu0
        %s2396 = scalar_lea.vmem %s3, 608
        %v2397 = vld [vmem:[%s2396] sm:$0xf]
        %v2398 = vld [vmem:[%s2396 + $0x4] sm:$0xf]
        %v2399 = vld [vmem:[%s2396 + $0x8] sm:$0xf]
        %v2400 = vld [vmem:[%s2396 + $0xc] sm:$0xf]
        %v2401 = vld [vmem:[%s2396 + $0x10] sm:$0xf]
        %v2402 = vld [vmem:[%s2396 + $0x14] sm:$0xf]
        %v2403 = vld [vmem:[%s2396 + $0x18] sm:$0xf]
        %v2404 = vld [vmem:[%s2396 + $0x1c] sm:$0xf]
        %s2405 = scalar_lea.vmem %s4, 19
        %v2406 = vld [vmem:[%s2405] sm:$0x1]
        %v2408 = vperm.slane %v2406, 0
        %v2418 = vunpack.c.l.b16 %v2397
        %v2419 = vunpack.c.l.b16 %v2398
        %v2420 = vunpack.c.l.b16 %v2399
        %v2421 = vunpack.c.l.b16 %v2400
        %v2422 = vunpack.c.l.b16 %v2401
        %v2423 = vunpack.c.l.b16 %v2402
        %v2424 = vunpack.c.l.b16 %v2403
        %v2425 = vunpack.c.l.b16 %v2404
        %v2426 = vpack.c.b16 %v2419, %v2418
        %v2427 = vpack.c.b16 %v2421, %v2420
        %v2428 = vpack.c.b16 %v2423, %v2422
        %v2429 = vpack.c.b16 %v2425, %v2424
        %2434 = vmatpush.bf16.msra.mxu0 0
        %2435 = vmatpush.bf16.msra.mxu0 0
        %2436 = vmatpush.bf16.msra.mxu0 0
        %2437 = vmatpush.bf16.msra.mxu0 0
        %2438 = vmatpush.bf16.msra.mxu0 %v2429
        %2439 = vmatpush.bf16.msra.mxu0 %v2428
        %2440 = vmatpush.bf16.msra.mxu0 %v2427
        %2441 = vmatpush.bf16.msra.mxu0 %v2426
        %2442 = vmatmul.bf16.gmra.mxu0 %v1730
        %v2443 = vpop.f32.mrf.mxu0
        %v2444 = vadd.f32 %v2408, %v2443
        %v2445 = vpop.f32.mrf.mxu0
        %2446 = vdwg.mxu0
        %s2447 = scalar_lea.vmem %s3, 736
        %v2448 = vld [vmem:[%s2447] sm:$0xf]
        %v2449 = vld [vmem:[%s2447 + $0x4] sm:$0xf]
        %v2450 = vld [vmem:[%s2447 + $0x8] sm:$0xf]
        %v2451 = vld [vmem:[%s2447 + $0xc] sm:$0xf]
        %v2452 = vld [vmem:[%s2447 + $0x10] sm:$0xf]
        %v2453 = vld [vmem:[%s2447 + $0x14] sm:$0xf]
        %v2454 = vld [vmem:[%s2447 + $0x18] sm:$0xf]
        %v2455 = vld [vmem:[%s2447 + $0x1c] sm:$0xf]
        %s2456 = scalar_lea.vmem %s4, 23
        %v2457 = vld [vmem:[%s2456] sm:$0x1]
        %v2459 = vperm.slane %v2457, 0
        %v2469 = vunpack.c.l.b16 %v2448
        %v2470 = vunpack.c.l.b16 %v2449
        %v2471 = vunpack.c.l.b16 %v2450
        %v2472 = vunpack.c.l.b16 %v2451
        %v2473 = vunpack.c.l.b16 %v2452
        %v2474 = vunpack.c.l.b16 %v2453
        %v2475 = vunpack.c.l.b16 %v2454
        %v2476 = vunpack.c.l.b16 %v2455
        %v2477 = vpack.c.b16 %v2470, %v2469
        %v2478 = vpack.c.b16 %v2472, %v2471
        %v2479 = vpack.c.b16 %v2474, %v2473
        %v2480 = vpack.c.b16 %v2476, %v2475
        %2485 = vmatpush.bf16.msra.mxu0 0
        %2486 = vmatpush.bf16.msra.mxu0 0
        %2487 = vmatpush.bf16.msra.mxu0 0
        %2488 = vmatpush.bf16.msra.mxu0 0
        %2489 = vmatpush.bf16.msra.mxu0 %v2480
        %2490 = vmatpush.bf16.msra.mxu0 %v2479
        %2491 = vmatpush.bf16.msra.mxu0 %v2478
        %2492 = vmatpush.bf16.msra.mxu0 %v2477
        %2493 = vmatmul.bf16.gmra.mxu0 %v1730
        %v2494 = vpop.f32.mrf.mxu0
        %v2495 = vadd.f32 %v2459, %v2494
        %v2496 = vpop.f32.mrf.mxu0
        %2497 = vdwg.mxu0
        %v2499 = vsel %vm687, %v2393, 0
        %v2502 = vsel %vm687, %v2444, 0
        %2504 = vmatpush.xpose.msra.mxu0 0.0
        %2505 = vmatpush.xpose.msra.mxu0 0.0
        %2506 = vmatpush.xpose.msra.mxu0 0.0
        %2507 = vmatpush.xpose.msra.mxu0 0.0
        %2508 = vmatpush.xpose.msra.mxu0 0.0
        %2509 = vmatpush.xpose.msra.mxu0 0.0
        %2510 = vmatpush.xpose.msra.mxu0 0.0
        %2511 = vmatpush.xpose.msra.mxu0 0.0
        %2512 = vmatpush.xpose.msra.mxu0 0.0
        %2513 = vmatpush.xpose.msra.mxu0 0.0
        %2514 = vmatpush.xpose.msra.mxu0 0.0
        %2515 = vmatpush.xpose.msra.mxu0 0.0
        %2516 = vmatpush.xpose.msra.mxu0 0.0
        %2517 = vmatpush.xpose.msra.mxu0 0.0
        %2518 = vmatpush.xpose.msra.mxu0 0.0
        %2519 = vmatpush.xpose.msra.mxu0 %v2502
        %2520 = vmatmul.f32.gmra.mxu0 %v2499
        %v2521 = vpop.f32.mrf.mxu0
        %v2522 = vadd.f32 0.0, %v2521
        %2523 = vdwg.mxu0
        %v2524 = vmul.f32 %v2522, 0.25
        %v2525 = vsel %vm715, %v2524, -inf
        %2526 = vmax.xlane.f32.xlu0 %v2525
        %v2527 = vpop.xlane.xlu0 %2526
        %v2528 = vsub.f32 %v2524, %v2527
        %v2529 = vmul.f32 %v2528, 1.442695
        %v2530 = vpow.pop %v2529
        %v2531 = vsel %vm715, %v2530, 0.0
        %2532 = vadd.xlane.f32.xlu0 %v2531
        %v2533 = vpop.xlane.xlu0 %2532
        %v2534 = vrcp.pop %v2533
        %v2535 = vmul.f32 %v2530, %v2534
        %v2537 = vsel %vm727, %v2535, 0
        %v2540 = vsel %vm731, %v2495, 0
        %2542 = vmatpush.msra.mxu0 0.0
        %2543 = vmatpush.msra.mxu0 0.0
        %2544 = vmatpush.msra.mxu0 0.0
        %2545 = vmatpush.msra.mxu0 0.0
        %2546 = vmatpush.msra.mxu0 0.0
        %2547 = vmatpush.msra.mxu0 0.0
        %2548 = vmatpush.msra.mxu0 0.0
        %2549 = vmatpush.msra.mxu0 0.0
        %2550 = vmatpush.msra.mxu0 0.0
        %2551 = vmatpush.msra.mxu0 0.0
        %2552 = vmatpush.msra.mxu0 0.0
        %2553 = vmatpush.msra.mxu0 0.0
        %2554 = vmatpush.msra.mxu0 0.0
        %2555 = vmatpush.msra.mxu0 0.0
        %2556 = vmatpush.msra.mxu0 0.0
        %2557 = vmatpush.msra.mxu0 %v2540
        %2558 = vmatmul.f32.gmra.mxu0 %v2537
        %v2559 = vpop.f32.mrf.mxu0
        %v2560 = vadd.f32 0.0, %v2559
        %2561 = vdwg.mxu0
        %2563 = vrot.lane.b32.xlu0 %v2126, 16
        %v2564 = vpop.permute.xlu0 %2563
        %2567 = vrot.lane.b32.xlu0 %v2343, 32
        %v2568 = vpop.permute.xlu0 %2567
        %2571 = vrot.lane.b32.xlu0 %v2560, 48
        %v2572 = vpop.permute.xlu0 %2571
        %v2574 = vsel %vm687, %v1909, %v2564
        %v2575 = vsel %vm1419, %v2574, %v2568
        %v2576 = vsel %vm1421, %v2575, %v2572
        %v2577 = vpack.c.bf16 %v2576, %v2576
        %s2578 = scalar_lea.vmem %s5, 32
        %v2579 = vld [vmem:[%s2578] sm:$0xf]
        %v2580 = vld [vmem:[%s2578 + $0x4] sm:$0xf]
        %v2581 = vld [vmem:[%s2578 + $0x8] sm:$0xf]
        %v2582 = vld [vmem:[%s2578 + $0xc] sm:$0xf]
        %v2583 = vld [vmem:[%s2578 + $0x10] sm:$0xf]
        %v2584 = vld [vmem:[%s2578 + $0x14] sm:$0xf]
        %v2585 = vld [vmem:[%s2578 + $0x18] sm:$0xf]
        %v2586 = vld [vmem:[%s2578 + $0x1c] sm:$0xf]
        %s2587 = scalar_lea.vmem %s6, 1
        %v2588 = vld [vmem:[%s2587] sm:$0x1]
        %v2590 = vperm.slane %v2588, 0
        %v2600 = vunpack.c.l.b16 %v2579
        %v2601 = vunpack.c.l.b16 %v2580
        %v2602 = vunpack.c.l.b16 %v2581
        %v2603 = vunpack.c.l.b16 %v2582
        %v2604 = vunpack.c.l.b16 %v2583
        %v2605 = vunpack.c.l.b16 %v2584
        %v2606 = vunpack.c.l.b16 %v2585
        %v2607 = vunpack.c.l.b16 %v2586
        %v2608 = vpack.c.b16 %v2601, %v2600
        %v2609 = vpack.c.b16 %v2603, %v2602
        %v2610 = vpack.c.b16 %v2605, %v2604
        %v2611 = vpack.c.b16 %v2607, %v2606
        %v2617 = vsel %vm568, %v2577, 0
        %2619 = vmatpush.bf16.msra.mxu0 0
        %2620 = vmatpush.bf16.msra.mxu0 0
        %2621 = vmatpush.bf16.msra.mxu0 0
        %2622 = vmatpush.bf16.msra.mxu0 0
        %2623 = vmatpush.bf16.msra.mxu0 %v2611
        %2624 = vmatpush.bf16.msra.mxu0 %v2610
        %2625 = vmatpush.bf16.msra.mxu0 %v2609
        %2626 = vmatpush.bf16.msra.mxu0 %v2608
        %2627 = vmatmul.bf16.gmra.mxu0 %v2617
        %v2628 = vpop.f32.mrf.mxu0
        %v2629 = vadd.f32 %v2590, %v2628
        %v2630 = vpop.f32.mrf.mxu0
        %2631 = vdwg.mxu0
        %v2632 = vadd.f32 %v1655, %v2629
        %s2633 = scalar_lea.vmem %s1, 3
        %v2634 = vld [vmem:[%s2633] sm:$0x1]
        %s2635 = scalar_lea.vmem %s2, 3
        %v2636 = vld [vmem:[%s2635] sm:$0x1]
        %v2637 = vsel %vm493, %v2632, 0.0
        %2638 = vadd.xlane.f32.xlu0 %v2637
        %v2639 = vpop.xlane.xlu0 %2638
        %v2640 = vmul.f32 %v2639, %v503
        %v2641 = vsub.f32 %v2632, %v2640
        %v2642 = vmul.f32 %v2641, %v2641
        %v2643 = vsel %vm493, %v2642, 0.0
        %2644 = vadd.xlane.f32.xlu0 %v2643
        %v2645 = vpop.xlane.xlu0 %2644
        %v2646 = vmul.f32 %v2645, %v503
        %v2647 = vadd.f32 %v2646, 1e-12
        %v2648 = vrsqrt.pop %v2647
        %v2649 = vmul.f32 %v2648, %v2647
        %v2650 = vmul.f32 %v2649, %v2648
        %v2651 = vmul.f32 0.5, %v2650
        %v2652 = vsub.f32 1.5, %v2651
        %v2653 = vmul.f32 %v2648, %v2652
        %vm2654 = vweird.f32 %v2647
        %vm2655 = vweird.f32 %v2648
        %vm2656 = vmor %vm2654, %vm2655
        %v2657 = vsel %vm2656, %v2648, %v2653
        %v2658 = vmul.f32 %v2641, %v2657
        %v2660 = vperm.slane %v2634, 0
        %v2662 = vmul.f32 %v2658, %v2660
        %v2664 = vperm.slane %v2636, 0
        %v2666 = vadd.f32 %v2662, %v2664
        %v2667 = vpack.c.bf16 %v2666, %v2666
        %s2668 = scalar_lea.vmem %s7, 32
        %v2669 = vld [vmem:[%s2668] sm:$0xf]
        %v2670 = vld [vmem:[%s2668 + $0x4] sm:$0xf]
        %v2671 = vld [vmem:[%s2668 + $0x8] sm:$0xf]
        %v2672 = vld [vmem:[%s2668 + $0xc] sm:$0xf]
        %v2673 = vld [vmem:[%s2668 + $0x10] sm:$0xf]
        %v2674 = vld [vmem:[%s2668 + $0x14] sm:$0xf]
        %v2675 = vld [vmem:[%s2668 + $0x18] sm:$0xf]
        %v2676 = vld [vmem:[%s2668 + $0x1c] sm:$0xf]
        %s2677 = scalar_lea.vmem %s8, 1
        %v2678 = vld [vmem:[%s2677] sm:$0x1]
        %v2680 = vperm.slane %v2678, 0
        %v2690 = vunpack.c.l.b16 %v2669
        %v2691 = vunpack.c.l.b16 %v2670
        %v2692 = vunpack.c.l.b16 %v2671
        %v2693 = vunpack.c.l.b16 %v2672
        %v2694 = vunpack.c.l.b16 %v2673
        %v2695 = vunpack.c.l.b16 %v2674
        %v2696 = vunpack.c.l.b16 %v2675
        %v2697 = vunpack.c.l.b16 %v2676
        %v2698 = vpack.c.b16 %v2691, %v2690
        %v2699 = vpack.c.b16 %v2693, %v2692
        %v2700 = vpack.c.b16 %v2695, %v2694
        %v2701 = vpack.c.b16 %v2697, %v2696
        %v2707 = vsel %vm568, %v2667, 0
        %2709 = vmatpush.bf16.msra.mxu0 0
        %2710 = vmatpush.bf16.msra.mxu0 0
        %2711 = vmatpush.bf16.msra.mxu0 0
        %2712 = vmatpush.bf16.msra.mxu0 0
        %2713 = vmatpush.bf16.msra.mxu0 %v2701
        %2714 = vmatpush.bf16.msra.mxu0 %v2700
        %2715 = vmatpush.bf16.msra.mxu0 %v2699
        %2716 = vmatpush.bf16.msra.mxu0 %v2698
        %2717 = vmatmul.bf16.gmra.mxu0 %v2707
        %v2718 = vpop.f32.mrf.mxu0
        %v2719 = vadd.f32 %v2680, %v2718
        %v2720 = vpop.f32.mrf.mxu0
        %2721 = vdwg.mxu0
        %v2722 = vmul.f32 %v2719, %v2719
        %v2723 = vmul.f32 %v2719, %v2722
        %v2724 = vmul.f32 %v2723, 0.044715
        %v2725 = vadd.f32 %v2719, %v2724
        %v2726 = vmul.f32 %v2725, 0.7978846
        %v2727 = vtanh.pop %v2726
        %v2728 = vadd.f32 %v2727, 1.0
        %v2729 = vmul.f32 %v2728, 0.5
        %v2730 = vmul.f32 %v2719, %v2729
        %v2731 = vpack.c.bf16 %v2730, %v2730
        %s2732 = scalar_lea.vmem %s9, 64
        %v2733 = vld [vmem:[%s2732] sm:$0xf]
        %v2734 = vld [vmem:[%s2732 + $0x4] sm:$0xf]
        %v2735 = vld [vmem:[%s2732 + $0x8] sm:$0xf]
        %v2736 = vld [vmem:[%s2732 + $0xc] sm:$0xf]
        %v2737 = vld [vmem:[%s2732 + $0x10] sm:$0xf]
        %v2738 = vld [vmem:[%s2732 + $0x14] sm:$0xf]
        %v2739 = vld [vmem:[%s2732 + $0x18] sm:$0xf]
        %v2740 = vld [vmem:[%s2732 + $0x1c] sm:$0xf]
        %v2741 = vld [vmem:[%s2732 + $0x20] sm:$0xf]
        %v2742 = vld [vmem:[%s2732 + $0x24] sm:$0xf]
        %v2743 = vld [vmem:[%s2732 + $0x28] sm:$0xf]
        %v2744 = vld [vmem:[%s2732 + $0x2c] sm:$0xf]
        %v2745 = vld [vmem:[%s2732 + $0x30] sm:$0xf]
        %v2746 = vld [vmem:[%s2732 + $0x34] sm:$0xf]
        %v2747 = vld [vmem:[%s2732 + $0x38] sm:$0xf]
        %v2748 = vld [vmem:[%s2732 + $0x3c] sm:$0xf]
        %s2749 = scalar_lea.vmem %s10, 1
        %v2750 = vld [vmem:[%s2749] sm:$0x1]
        %v2752 = vperm.slane %v2750, 0
        %v2770 = vunpack.c.l.b16 %v2733
        %v2771 = vunpack.c.l.b16 %v2734
        %v2772 = vunpack.c.l.b16 %v2735
        %v2773 = vunpack.c.l.b16 %v2736
        %v2774 = vunpack.c.l.b16 %v2737
        %v2775 = vunpack.c.l.b16 %v2738
        %v2776 = vunpack.c.l.b16 %v2739
        %v2777 = vunpack.c.l.b16 %v2740
        %v2778 = vunpack.c.l.b16 %v2741
        %v2779 = vunpack.c.l.b16 %v2742
        %v2780 = vunpack.c.l.b16 %v2743
        %v2781 = vunpack.c.l.b16 %v2744
        %v2782 = vunpack.c.l.b16 %v2745
        %v2783 = vunpack.c.l.b16 %v2746
        %v2784 = vunpack.c.l.b16 %v2747
        %v2785 = vunpack.c.l.b16 %v2748
        %v2786 = vpack.c.b16 %v2771, %v2770
        %v2787 = vpack.c.b16 %v2773, %v2772
        %v2788 = vpack.c.b16 %v2775, %v2774
        %v2789 = vpack.c.b16 %v2777, %v2776
        %v2790 = vpack.c.b16 %v2779, %v2778
        %v2791 = vpack.c.b16 %v2781, %v2780
        %v2792 = vpack.c.b16 %v2783, %v2782
        %v2793 = vpack.c.b16 %v2785, %v2784
        %2802 = vmatpush.bf16.msra.mxu0 %v2793
        %2803 = vmatpush.bf16.msra.mxu0 %v2792
        %2804 = vmatpush.bf16.msra.mxu0 %v2791
        %2805 = vmatpush.bf16.msra.mxu0 %v2790
        %2806 = vmatpush.bf16.msra.mxu0 %v2789
        %2807 = vmatpush.bf16.msra.mxu0 %v2788
        %2808 = vmatpush.bf16.msra.mxu0 %v2787
        %2809 = vmatpush.bf16.msra.mxu0 %v2786
        %2810 = vmatmul.bf16.gmra.mxu0 %v2731
        %v2811 = vpop.f32.mrf.mxu0
        %v2812 = vadd.f32 %v2752, %v2811
        %v2813 = vpop.f32.mrf.mxu0
        %2814 = vdwg.mxu0
        %v2815 = vadd.f32 %v2632, %v2812
        %v2816 = vld [vmem:[%s11] sm:$0x1]
        %v2817 = vld [vmem:[%s12] sm:$0x1]
        %v2818 = vsel %vm493, %v2815, 0.0
        %2819 = vadd.xlane.f32.xlu0 %v2818
        %v2820 = vpop.xlane.xlu0 %2819
        %v2821 = vmul.f32 %v2820, %v503
        %v2822 = vsub.f32 %v2815, %v2821
        %v2823 = vmul.f32 %v2822, %v2822
        %v2824 = vsel %vm493, %v2823, 0.0
        %2825 = vadd.xlane.f32.xlu0 %v2824
        %v2826 = vpop.xlane.xlu0 %2825
        %v2827 = vmul.f32 %v2826, %v503
        %v2828 = vadd.f32 %v2827, 1e-12
        %v2829 = vrsqrt.pop %v2828
        %v2830 = vmul.f32 %v2829, %v2828
        %v2831 = vmul.f32 %v2830, %v2829
        %v2832 = vmul.f32 0.5, %v2831
        %v2833 = vsub.f32 1.5, %v2832
        %v2834 = vmul.f32 %v2829, %v2833
        %vm2835 = vweird.f32 %v2828
        %vm2836 = vweird.f32 %v2829
        %vm2837 = vmor %vm2835, %vm2836
        %v2838 = vsel %vm2837, %v2829, %v2834
        %v2839 = vmul.f32 %v2822, %v2838
        %v2841 = vperm.slane %v2816, 0
        %v2843 = vmul.f32 %v2839, %v2841
        %v2845 = vperm.slane %v2817, 0
        %v2847 = vadd.f32 %v2843, %v2845
        %v2848 = vld [vmem:[%s14] sm:$0x1]
        %v2849 = vld [vmem:[%s13] sm:$0xff]
        %v2850 = vld [vmem:[%s13 + $0x8] sm:$0xff]
        %v2851 = vld [vmem:[%s13 + $0x10] sm:$0xff]
        %v2852 = vld [vmem:[%s13 + $0x18] sm:$0xff]
        %v2853 = vld [vmem:[%s13 + $0x20] sm:$0xff]
        %v2854 = vld [vmem:[%s13 + $0x28] sm:$0xff]
        %v2855 = vld [vmem:[%s13 + $0x30] sm:$0xff]
        %v2856 = vld [vmem:[%s13 + $0x38] sm:$0xff]
        %v2858 = vsel %vm568, %v2847, 0
        %2860 = vmatpush.msra.mxu0 0.0
        %2861 = vmatpush.msra.mxu0 0.0
        %2862 = vmatpush.msra.mxu0 0.0
        %2863 = vmatpush.msra.mxu0 0.0
        %2864 = vmatpush.msra.mxu0 0.0
        %2865 = vmatpush.msra.mxu0 0.0
        %2866 = vmatpush.msra.mxu0 0.0
        %2867 = vmatpush.msra.mxu0 0.0
        %2868 = vmatpush.msra.mxu0 %v2856
        %2869 = vmatpush.msra.mxu0 %v2855
        %2870 = vmatpush.msra.mxu0 %v2854
        %2871 = vmatpush.msra.mxu0 %v2853
        %2872 = vmatpush.msra.mxu0 %v2852
        %2873 = vmatpush.msra.mxu0 %v2851
        %2874 = vmatpush.msra.mxu0 %v2850
        %2875 = vmatpush.msra.mxu0 %v2849
        %2876 = vmatmul.f32.gmra.mxu0 %v2858
        %v2877 = vpop.f32.mrf.mxu0
        %v2878 = vadd.f32 0.0, %v2877
        %2879 = vdwg.mxu0
        %v2880 = vadd.f32 %v2848, %v2878
        %s2881 = scalar_lea.vmem %s13, 64
        %v2882 = vld [vmem:[%s2881] sm:$0xff]
        %v2883 = vld [vmem:[%s2881 + $0x8] sm:$0xff]
        %v2884 = vld [vmem:[%s2881 + $0x10] sm:$0xff]
        %v2885 = vld [vmem:[%s2881 + $0x18] sm:$0xff]
        %v2886 = vld [vmem:[%s2881 + $0x20] sm:$0xff]
        %v2887 = vld [vmem:[%s2881 + $0x28] sm:$0xff]
        %v2888 = vld [vmem:[%s2881 + $0x30] sm:$0xff]
        %v2889 = vld [vmem:[%s2881 + $0x38] sm:$0xff]
        %v2890 = vrot.slane %v2847, 1
        %v2891 = vsel %vm568, %v2890, 0
        %2893 = vmatpush.msra.mxu0 0.0
        %2894 = vmatpush.msra.mxu0 0.0
        %2895 = vmatpush.msra.mxu0 0.0
        %2896 = vmatpush.msra.mxu0 0.0
        %2897 = vmatpush.msra.mxu0 0.0
        %2898 = vmatpush.msra.mxu0 0.0
        %2899 = vmatpush.msra.mxu0 0.0
        %2900 = vmatpush.msra.mxu0 0.0
        %2901 = vmatpush.msra.mxu0 %v2889
        %2902 = vmatpush.msra.mxu0 %v2888
        %2903 = vmatpush.msra.mxu0 %v2887
        %2904 = vmatpush.msra.mxu0 %v2886
        %2905 = vmatpush.msra.mxu0 %v2885
        %2906 = vmatpush.msra.mxu0 %v2884
        %2907 = vmatpush.msra.mxu0 %v2883
        %2908 = vmatpush.msra.mxu0 %v2882
        %2909 = vmatmul.f32.gmra.mxu0 %v2891
        %v2910 = vpop.f32.mrf.mxu0
        %v2911 = vadd.f32 0.0, %v2910
        %2912 = vdwg.mxu0
        %v2913 = vadd.f32 %v2880, %v2911
        %s2914 = scalar_lea.vmem %s13, 128
        %v2915 = vld [vmem:[%s2914] sm:$0xff]
        %v2916 = vld [vmem:[%s2914 + $0x8] sm:$0xff]
        %v2917 = vld [vmem:[%s2914 + $0x10] sm:$0xff]
        %v2918 = vld [vmem:[%s2914 + $0x18] sm:$0xff]
        %v2919 = vld [vmem:[%s2914 + $0x20] sm:$0xff]
        %v2920 = vld [vmem:[%s2914 + $0x28] sm:$0xff]
        %v2921 = vld [vmem:[%s2914 + $0x30] sm:$0xff]
        %v2922 = vld [vmem:[%s2914 + $0x38] sm:$0xff]
        %v2923 = vrot.slane %v2847, 2
        %v2924 = vsel %vm568, %v2923, 0
        %2926 = vmatpush.msra.mxu0 0.0
        %2927 = vmatpush.msra.mxu0 0.0
        %2928 = vmatpush.msra.mxu0 0.0
        %2929 = vmatpush.msra.mxu0 0.0
        %2930 = vmatpush.msra.mxu0 0.0
        %2931 = vmatpush.msra.mxu0 0.0
        %2932 = vmatpush.msra.mxu0 0.0
        %2933 = vmatpush.msra.mxu0 0.0
        %2934 = vmatpush.msra.mxu0 %v2922
        %2935 = vmatpush.msra.mxu0 %v2921
        %2936 = vmatpush.msra.mxu0 %v2920
        %2937 = vmatpush.msra.mxu0 %v2919
        %2938 = vmatpush.msra.mxu0 %v2918
        %2939 = vmatpush.msra.mxu0 %v2917
        %2940 = vmatpush.msra.mxu0 %v2916
        %2941 = vmatpush.msra.mxu0 %v2915
        %2942 = vmatmul.f32.gmra.mxu0 %v2924
        %v2943 = vpop.f32.mrf.mxu0
        %v2944 = vadd.f32 0.0, %v2943
        %2945 = vdwg.mxu0
        %v2946 = vadd.f32 %v2913, %v2944
        %s2947 = scalar_lea.vmem %s13, 192
        %v2948 = vld [vmem:[%s2947] sm:$0xff]
        %v2949 = vld [vmem:[%s2947 + $0x8] sm:$0xff]
        %v2950 = vld [vmem:[%s2947 + $0x10] sm:$0xff]
        %v2951 = vld [vmem:[%s2947 + $0x18] sm:$0xff]
        %v2952 = vld [vmem:[%s2947 + $0x20] sm:$0xff]
        %v2953 = vld [vmem:[%s2947 + $0x28] sm:$0xff]
        %v2954 = vld [vmem:[%s2947 + $0x30] sm:$0xff]
        %v2955 = vld [vmem:[%s2947 + $0x38] sm:$0xff]
        %v2956 = vrot.slane %v2847, 3
        %v2957 = vsel %vm568, %v2956, 0
        %2959 = vmatpush.msra.mxu0 0.0
        %2960 = vmatpush.msra.mxu0 0.0
        %2961 = vmatpush.msra.mxu0 0.0
        %2962 = vmatpush.msra.mxu0 0.0
        %2963 = vmatpush.msra.mxu0 0.0
        %2964 = vmatpush.msra.mxu0 0.0
        %2965 = vmatpush.msra.mxu0 0.0
        %2966 = vmatpush.msra.mxu0 0.0
        %2967 = vmatpush.msra.mxu0 %v2955
        %2968 = vmatpush.msra.mxu0 %v2954
        %2969 = vmatpush.msra.mxu0 %v2953
        %2970 = vmatpush.msra.mxu0 %v2952
        %2971 = vmatpush.msra.mxu0 %v2951
        %2972 = vmatpush.msra.mxu0 %v2950
        %2973 = vmatpush.msra.mxu0 %v2949
        %2974 = vmatpush.msra.mxu0 %v2948
        %2975 = vmatmul.f32.gmra.mxu0 %v2957
        %v2976 = vpop.f32.mrf.mxu0
        %v2977 = vadd.f32 0.0, %v2976
        %2978 = vdwg.mxu0
        %v2979 = vadd.f32 %v2946, %v2977
        %s2980 = scalar_lea.vmem %s13, 256
        %v2981 = vld [vmem:[%s2980] sm:$0xff]
        %v2982 = vld [vmem:[%s2980 + $0x8] sm:$0xff]
        %v2983 = vld [vmem:[%s2980 + $0x10] sm:$0xff]
        %v2984 = vld [vmem:[%s2980 + $0x18] sm:$0xff]
        %v2985 = vld [vmem:[%s2980 + $0x20] sm:$0xff]
        %v2986 = vld [vmem:[%s2980 + $0x28] sm:$0xff]
        %v2987 = vld [vmem:[%s2980 + $0x30] sm:$0xff]
        %v2988 = vld [vmem:[%s2980 + $0x38] sm:$0xff]
        %v2989 = vrot.slane %v2847, 4
        %v2990 = vsel %vm568, %v2989, 0
        %2992 = vmatpush.msra.mxu0 0.0
        %2993 = vmatpush.msra.mxu0 0.0
        %2994 = vmatpush.msra.mxu0 0.0
        %2995 = vmatpush.msra.mxu0 0.0
        %2996 = vmatpush.msra.mxu0 0.0
        %2997 = vmatpush.msra.mxu0 0.0
        %2998 = vmatpush.msra.mxu0 0.0
        %2999 = vmatpush.msra.mxu0 0.0
        %3000 = vmatpush.msra.mxu0 %v2988
        %3001 = vmatpush.msra.mxu0 %v2987
        %3002 = vmatpush.msra.mxu0 %v2986
        %3003 = vmatpush.msra.mxu0 %v2985
        %3004 = vmatpush.msra.mxu0 %v2984
        %3005 = vmatpush.msra.mxu0 %v2983
        %3006 = vmatpush.msra.mxu0 %v2982
        %3007 = vmatpush.msra.mxu0 %v2981
        %3008 = vmatmul.f32.gmra.mxu0 %v2990
        %v3009 = vpop.f32.mrf.mxu0
        %v3010 = vadd.f32 0.0, %v3009
        %3011 = vdwg.mxu0
        %v3012 = vadd.f32 %v2979, %v3010
        %vm3013 = vcmask 1040384
        %v3014 = vsel %vm3013, %v3012, -inf
        %3015 = vmax.xlane.f32.xlu0 %v3014
        %v3016 = vpop.xlane.xlu0 %3015
        %v3017 = vsub.f32 %v3012, %v3016
        %v3018 = vmul.f32 %v3017, 1.442695
        %v3019 = vpow.pop %v3018
        %v3020 = vsel %vm3013, %v3019, 0.0
        %3021 = vadd.xlane.f32.xlu0 %v3020
        %v3022 = vpop.xlane.xlu0 %3021
        %v3023 = vrcp.pop %v3022
        %v3024 = vmul.f32 %v3022, %v3023
        %v3025 = vsub.f32 1.0, %v3024
        %v3026 = vmul.f32 %v3023, %v3025
        %v3027 = vadd.f32 %v3023, %v3026
        %vm3028 = vweird.f32 %v3022
        %vm3029 = vweird.f32 %v3023
        %vm3030 = vmor %vm3028, %vm3029
        %v3031 = vsel %vm3030, %v3023, %v3027
        %v3032 = vand.u32 2147483647, %v3022
        %vm3033 = vcmp.eq.f32.partialorder %v3032, 8.507059e+37
        %v3034 = vand.u32 %v3022, 2147483648
        %v3035 = vor.u32 1.1754944e-38, %v3034
        %v3036 = vsel %vm3033, %v3035, %v3031
        %v3037 = vmul.f32 %v3019, %v3036
        %3038 = vst [vmem:[%s484] sm:$0x1] %v3037
        %s3039 = sand.u32 %s357, 1
        %s3040 = scalar_lea.sflag [#allocation3], %s3039
        %s3041 = sand.u32 %s357, 1
        %s3042 = scalar_lea.vmem [#allocation2], %s3041
        // Predicated region
        $region81: #{vit_baseline_forward.1} parent=79 // pred_check
          %p3043 = pneg %p367
        $region82: #{vit_baseline_forward.1} parent=79 // pred_check_branch
          %3045 = sbr.rel (%p3043) target = $region84
        $region83: #{vit_baseline_forward.1} parent=79 // pred_region
          %3047 = vsyncadd %s3040, 0
          %s3048 = scalar_lea.hbm %s15, %s29
          %s3050 = sshll.u32 %s3042, 4
          %s3051 = int_to_ptr.vmem [resolvable:$true] %s3050
          %s3052 = sshll.u32 %s3048, 4
          %s3053 = int_to_ptr.hbm [resolvable:$true] %s3052
          %3055 = dma.vmem_to_hbm [thread:$0]  %s3051, 16, %s3053, %s3040
        $region84: #{vit_baseline_forward.1} parent=79 // pred_fallthru
          _
      $region80: #{vit_baseline_forward.1} parent=5 // pred_fallthru
        _
      %p3056 = scmp.le.s32.totalorder 2, %s24
      // Predicated region
      $region85: #{vit_baseline_forward.1} parent=5 // pred_check
        %p3057 = pneg %p3056
      $region86: #{vit_baseline_forward.1} parent=5 // pred_check_branch
        %3059 = sbr.rel (%p3057) target = $region88
      $region87: #{vit_baseline_forward.1} parent=5 // pred_region
        %s3060 = ssub.s32 %s24, 2
        // Predicated region
        $region89: #{vit_baseline_forward.1} parent=87 // pred_check
          %p3061 = pneg %p373
        $region90: #{vit_baseline_forward.1} parent=87 // pred_check_branch
          %3063 = sbr.rel (%p3061) target = $region92
        $region91: #{vit_baseline_forward.1} parent=87 // pred_region
          %s3064 = sand.u32 %s358, 1
          %s3065 = scalar_lea.sflag [#allocation3], %s3064
          %s3066 = sand.u32 %s358, 1
          %s3067 = scalar_lea.vmem [#allocation2], %s3066
          %3069 = dma.done %s3065, 16
        $region92: #{vit_baseline_forward.1} parent=87 // pred_fallthru
          _
      $region88: #{vit_baseline_forward.1} parent=5 // pred_fallthru
        _
    $region6: #{vit_baseline_forward.1} parent=1 // loop_footer
      %s28 = sadd.s32 1, %s24
    $region7: #{vit_baseline_forward.1} parent=1 // loop_footer_branch
      %23 = sbr.rel target = $region3
    $region8: #{vit_baseline_forward.1} parent=1 // loop_exit
      _
    %3070 = vsyncpa [#allocation3], 1
    %s3071 = scalar_lea.sflag [#allocation3], 1
    %3072 = vsyncpa %s3071, 1

</llo_original>
